<compile_context>
chip_gen: v5e
topology: v5e:2x2
jax: 0.10.0
libtpu: 0.0.40
codegen_flags: <defaults>
</compile_context>

<pallas_src>
import functools

import jax
import jax.numpy as jnp
from jax.experimental import pallas as pl
from jax.experimental.pallas import tpu as pltpu

BN_EPS = 1e-5
_CHUNK = 8           # nsample sub-chunk processed per running-max step
_LANE = 128

# (npoint, radius, nsample, in_channel, mlp_layers)  -- mirrors the module __init__
SA_CONFIGS = [
    (1024, 0.1, 32, 3,        [32, 32, 64]),
    (256,  0.2, 32, 64 + 3,   [64, 64, 128]),
    (64,   0.4, 32, 128 + 3,  [128, 128, 256]),
    (16,   0.8, 32, 256 + 3,  [256, 256, 512]),
]


def _round_up(x, m):
    return (x + m - 1) // m * m


def _pad_channels(c):
    # Keep tiny channel counts (SA1's xyz=3) unpadded in HBM (42x inflation
    # otherwise); pad everything else to a 128-lane multiple.
    return c if c <= 8 else _round_up(c, _LANE)


def _vmem_limit_bytes():
    """Generation-aware scoped-VMEM limit (v7x: 64 MiB physical, v5e/v6e: 128)."""
    try:
        cap = int(pltpu.get_tpu_info().vmem_capacity_bytes)
    except Exception:
        cap = 64 << 20                     # conservative fallback (works on v7x)
    return int(min(cap * 3 // 4, 96 << 20))


_VMEM_LIMIT = _vmem_limit_bytes()


# --------------------------------------------------------------------------
# Pallas kernel 1: fused 3-layer pointwise MLP (+ folded BN) + ReLU + running
# max-pool over nsample (processed in chunks of _CHUNK to bound live VMEM).
# --------------------------------------------------------------------------
def _sa_mlp_kernel(g_ref, w1_ref, b1_ref, w2_ref, b2_ref, w3_ref, b3_ref, out_ref):
    tn, s, _ = g_ref.shape
    w1, w2, w3 = w1_ref[...], w2_ref[...], w3_ref[...]      # bf16, lane-padded
    b1, b2, b3 = b1_ref[...], b2_ref[...], b3_ref[...]      # f32
    c_out = w3.shape[1]

    def chunk_max(lo, hi):
        x = g_ref[:, lo:hi, :]                               # (tn, chunk, C0) bf16
        m = tn * (hi - lo)
        h = x.reshape(m, x.shape[-1])
        # matmuls in bf16 on the MXU, accumulate f32; elementwise stays f32.
        h = jnp.maximum(jnp.dot(h, w1, preferred_element_type=jnp.float32) + b1, 0.0)
        h = jnp.maximum(jnp.dot(h.astype(w2.dtype), w2,
                                preferred_element_type=jnp.float32) + b2, 0.0)
        h = jnp.maximum(jnp.dot(h.astype(w3.dtype), w3,
                                preferred_element_type=jnp.float32) + b3, 0.0)
        return jnp.max(h.reshape(tn, hi - lo, c_out), axis=1)

    acc = jnp.zeros((tn, c_out), jnp.float32)                # ReLU >= 0 -> 0 is a valid max identity
    for lo in range(0, s, _CHUNK):                           # static, fully unrolled (s=32 -> 4 chunks)
        acc = jnp.maximum(acc, chunk_max(lo, min(lo + _CHUNK, s)))
    out_ref[...] = acc                                       # lane-dense f32 store (c_out % 128 == 0)


def _choose_tn(n_groups, s, c0p, out_widths):
    """Largest group-tile (multiple of 8) that fits the per-generation VMEM budget."""
    c0_vmem = _round_up(c0p, _LANE)          # VMEM lane-pads the last dim regardless
    widths = [_round_up(w, _LANE) for w in out_widths]
    per_group = (2 * s * c0_vmem * 2         # double-buffered bf16 input block
                 + 2 * widths[-1] * 4        # double-buffered f32 output block
                 + _CHUNK * sum(widths) * 4  # per-chunk f32 intermediates
                 + _CHUNK * sum(widths[:-1]) * 2)  # bf16 copies fed to inner matmuls
    budget = max(_VMEM_LIMIT - (6 << 20), 8 << 20)   # slack for weights / compiler scratch
    tn_vmem = max(8, budget // per_group)
    # keep grid >= 2 so dimension_semantics=("parallel",) can split across v7x's 2 TCs
    tn_groups = n_groups if n_groups < 16 else max(8, n_groups // 2)
    tn = min(512, int(tn_vmem), int(tn_groups))
    return max(8, (tn // 8) * 8)


def sa_mlp_maxpool(grouped, weights, biases, c_out_true):
    """grouped: [Ngroups, nsample, C0p] bf16 -> [Ngroups, c_out_true] f32."""
    n_groups, s, c0p = grouped.shape
    c_out_p = weights[2].shape[1]

    tn = _choose_tn(n_groups, s, c0p, [w.shape[1] for w in weights])
    n_pad = (-n_groups) % tn
    if n_pad:
        grouped = jnp.pad(grouped, ((0, n_pad), (0, 0), (0, 0)))
    n_total = n_groups + n_pad

    in_specs = [pl.BlockSpec((tn, s, c0p), lambda i: (i, 0, 0))]
    args = [grouped]
    for w, b in zip(weights, biases):
        in_specs.append(pl.BlockSpec(w.shape, lambda i: (0, 0)))   # resident across grid
        in_specs.append(pl.BlockSpec(b.shape, lambda i: (0, 0)))
        args.extend([w, b])

    out = pl.pallas_call(
        _sa_mlp_kernel,
        out_shape=jax.ShapeDtypeStruct((n_total, c_out_p), jnp.float32),
        grid=(n_total // tn,),
        in_specs=in_specs,
        out_specs=pl.BlockSpec((tn, c_out_p), lambda i: (i, 0)),
        compiler_params=pltpu.CompilerParams(
            dimension_semantics=("parallel",),
            vmem_limit_bytes=_VMEM_LIMIT,
        ),
    )(*args)
    return out[:n_groups, :c_out_true]


# --------------------------------------------------------------------------
# Pallas kernel 2: farthest point sampling.  One batch element per grid step;
# the sequential selection loop runs in-kernel with all state in vregs.
# --------------------------------------------------------------------------
def _fps_kernel(xyz_ref, out_ref, *, n_valid, npoint):
    # xyz_ref: (1, 8, n_pad) f32  (rows 0..2 = x,y,z; rows 3..7 zero)
    # out_ref: (1, 1, npoint_pad) int32
    xyz8 = xyz_ref[0]                                           # (8, n_pad)
    n_pad = xyz8.shape[1]
    npoint_pad = out_ref.shape[2]
    point_idx = jax.lax.broadcasted_iota(jnp.int32, (1, n_pad), 1)
    slot_idx = jax.lax.broadcasted_iota(jnp.int32, (1, npoint_pad), 1)
    # padded points are permanently -inf so they can never be selected
    dist0 = jnp.where(point_idx < n_valid, 1e10, -jnp.inf).astype(jnp.float32)
    out0 = jnp.zeros((1, npoint_pad), jnp.int32)

    def body(i, carry):
        dist, far, out_vec = carry
        out_vec = jnp.where(slot_idx == i, far, out_vec)        # record current pick
        sel = point_idx == far                                  # one-hot over points
        c = jnp.sum(jnp.where(sel, xyz8, 0.0), axis=1, keepdims=True)   # (8,1) centroid
        diff = xyz8 - c
        d = jnp.sum(diff * diff, axis=0, keepdims=True)         # (1, n_pad) squared dist
        dist = jnp.minimum(dist, d)
        m = jnp.max(dist)
        # first (lowest-index) maximizer -> matches jnp.argmax tie-breaking
        far = jnp.min(jnp.where(dist == m, point_idx, n_pad)).astype(jnp.int32)
        return dist, far, out_vec

    # TODO(synk): PyTorch seeds FPS with torch.randint; we seed at index 0 deterministically.
    _, _, out_vec = jax.lax.fori_loop(0, npoint, body, (dist0, jnp.int32(0), out0))
    out_ref[0] = out_vec


def farthest_point_sample(xyz, npoint):
    """xyz [B, N, 3] f32 -> [B, npoint] int32 (Pallas kernel)."""
    B, N, _ = xyz.shape
    n_pad = _round_up(N, _LANE)
    npoint_pad = _round_up(npoint, _LANE)
    xyz8 = jnp.zeros((B, 8, n_pad), jnp.float32)
    xyz8 = xyz8.at[:, :3, :N].set(jnp.transpose(xyz, (0, 2, 1)))
    kern = functools.partial(_fps_kernel, n_valid=N, npoint=npoint)
    out = pl.pallas_call(
        kern,
        out_shape=jax.ShapeDtypeStruct((B, 1, npoint_pad), jnp.int32),
        grid=(B,),
        in_specs=[pl.BlockSpec((1, 8, n_pad), lambda b: (b, 0, 0))],
        out_specs=pl.BlockSpec((1, 1, npoint_pad), lambda b: (b, 0, 0)),
        compiler_params=pltpu.CompilerParams(dimension_semantics=("parallel",)),
    )(xyz8)
    return out[:, 0, :npoint]


# --------------------------------------------------------------------------
# Plain-JAX glue: ball query (top_k instead of full sort) and grouping gathers.
# TODO(synk): fuse the ball-query gather into the MLP kernel via
# PrefetchScalarGridSpec + pl.Element row-gather to avoid the HBM round trip of
# the grouped tensor; kept in XLA here for robustness.
# --------------------------------------------------------------------------
def square_distance(src, dst):
    # src [B,M,3], dst [B,N,3] -> [B,M,N]
    return (jnp.sum(src * src, -1)[:, :, None]
            + jnp.sum(dst * dst, -1)[:, None, :]
            - 2.0 * jnp.einsum("bmc,bnc->bmn", src, dst))


def index_points(points, idx):
    # points [B,N,C], idx [B,...] int -> [B,...,C]
    return jax.vmap(lambda p, i: p[i])(points, idx)


def query_ball_point(radius, nsample, xyz, new_xyz):
    # xyz [B,N,3], new_xyz [B,S,3] -> [B,S,nsample] int32
    B, N, _ = xyz.shape
    S = new_xyz.shape[1]
    sqrdists = square_distance(new_xyz, xyz)                     # [B,S,N]
    group_idx = jnp.broadcast_to(jnp.arange(N, dtype=jnp.int32), (B, S, N))
    group_idx = jnp.where(sqrdists > radius * radius, N, group_idx)
    # k smallest indices in ascending order == sort(...)[:nsample], far cheaper
    neg_topk, _ = jax.lax.top_k(-group_idx, nsample)
    group_idx = -neg_topk                                        # [B,S,nsample], ascending
    group_first = jnp.broadcast_to(group_idx[:, :, :1], group_idx.shape)
    group_idx = jnp.where(group_idx == N, group_first, group_idx)
    return group_idx


def sample_and_group(npoint, radius, nsample, xyz, points):
    # xyz [B,N,3], points [B,N,D] or None
    fps_idx = farthest_point_sample(xyz, npoint)
    new_xyz = index_points(xyz, fps_idx)                          # [B,npoint,3]
    idx = query_ball_point(radius, nsample, xyz, new_xyz)         # [B,npoint,nsample]
    grouped_xyz = index_points(xyz, idx)                          # [B,npoint,nsample,3]
    grouped_xyz_norm = grouped_xyz - new_xyz[:, :, None, :]
    if points is not None:
        grouped_points = index_points(points, idx)                # [B,npoint,nsample,D]
        new_points = jnp.concatenate([grouped_xyz_norm, grouped_points], axis=-1)
    else:
        new_points = grouped_xyz_norm
    return new_xyz, new_points


def set_abstraction(xyz, points, npoint, radius, nsample, weights, biases, c_out_true):
    """Channels-last in/out: xyz [B,N,3], points [B,N,D] or None
       -> (new_xyz [B,npoint,3], feats [B,npoint,C_out])."""
    new_xyz, grouped = sample_and_group(npoint, radius, nsample, xyz, points)
    B, S, K, C = grouped.shape
    c0p = weights[0].shape[0]                                     # lane-padded C_in
    if c0p > C:
        grouped = jnp.pad(grouped, ((0, 0), (0, 0), (0, 0), (0, c0p - C)))
    grouped_flat = grouped.reshape(B * S, K, c0p).astype(jnp.bfloat16)
    feat = sa_mlp_maxpool(grouped_flat, weights, biases, c_out_true)   # [B*S, C_out]
    return new_xyz, feat.reshape(B, S, -1)


# --------------------------------------------------------------------------
# Parameters: deterministic init; Conv2d 1x1 weights with eval-mode BN folded,
# zero-padded to lane multiples and cast to bf16 (biases stay f32).
# --------------------------------------------------------------------------
def init_params(key):
    bn_scale = 1.0 / (1.0 + BN_EPS) ** 0.5   # gamma=1, beta=0, mean=0, var=1 (eval)
    params = []
    for (_, _, _, in_channel, mlp_layers) in SA_CONFIGS:
        weights, biases = [], []
        c_in, c_in_p = in_channel, _pad_channels(in_channel)
        for c_out in mlp_layers:
            c_out_p = _round_up(c_out, _LANE)
            key, kw, kb = jax.random.split(key, 3)
            w = jax.random.normal(kw, (c_in, c_out), jnp.float32) / jnp.sqrt(float(c_in))
            b = jax.random.normal(kb, (1, c_out), jnp.float32) * 0.01
            w_p = jnp.zeros((c_in_p, c_out_p), jnp.float32).at[:c_in, :c_out].set(w * bn_scale)
            b_p = jnp.zeros((1, c_out_p), jnp.float32).at[:, :c_out].set(b * bn_scale)
            weights.append(w_p.astype(jnp.bfloat16))
            biases.append(b_p)                                   # f32 bias
            c_in, c_in_p = c_out, c_out_p
        params.append((weights, biases))
    return params


def feature_learner_forward(x, extra_features, params):
    """x: [B,3,N] xyz; extra_features: [B,D,N] or None.  Returns the 8-tuple
    (sa1_xyz, sa1_feat, sa2_xyz, sa2_feat, sa3_xyz, sa3_feat, sa4_xyz, sa4_feat)."""
    xyz = jnp.transpose(x, (0, 2, 1))                            # [B,N,3]
    points = None if extra_features is None else jnp.transpose(extra_features, (0, 2, 1))
    # TODO(synk): extra_feat_dropout is a training-time op; inference no-op here (p has no effect in eval).
    outs = []
    for (npoint, radius, nsample, _, mlp_layers), (ws, bs) in zip(SA_CONFIGS, params):
        xyz, points = set_abstraction(xyz, points, npoint, radius, nsample,
                                      ws, bs, mlp_layers[-1])
        outs.append(jnp.transpose(xyz, (0, 2, 1)))               # [B,3,npoint]
        outs.append(jnp.transpose(points, (0, 2, 1)))            # [B,C,npoint]
    return tuple(outs)


# --------------------------------------------------------------------------
if __name__ == "__main__":
    key = jax.random.PRNGKey(0)
    B, N = 2, 1024                       # N must be >= sa1.npoint (=1024)
    key, kx, kp, kt = jax.random.split(key, 4)
    x = jax.random.normal(kx, (B, 3, N), jnp.float32)   # xyz, [B, 3, N] (PyTorch layout)
    extra_features = None                # input_dim=3 -> no extra features

    params = init_params(kp)

    # --- correctness spot-check of the fused MLP kernel vs a pure-JAX reference ---
    ws, bs = params[1]                                   # SA2 weights: 128->128->128 (padded)
    g_test = jax.random.normal(kt, (64, 32, ws[0].shape[0]), jnp.float32).astype(jnp.bfloat16)
    out_k = sa_mlp_maxpool(g_test, ws, bs, ws[2].shape[1])
    h = g_test.astype(jnp.float32)
    for w, b in zip(ws, bs):
        h = jnp.maximum(jnp.einsum("nsc,cd->nsd", h, w.astype(jnp.float32)) + b, 0.0)
    out_ref = jnp.max(h, axis=1)
    assert bool(jnp.allclose(out_k, out_ref, rtol=2e-2, atol=2e-2)), "MLP kernel mismatch"

    # --- sanity check of the FPS kernel: valid, unique permutation when npoint == N ---
    fps_idx = farthest_point_sample(jnp.transpose(x, (0, 2, 1)), 1024)
    assert bool(jnp.all((fps_idx >= 0) & (fps_idx < N)))
    for b in range(B):
        assert int(jnp.unique(fps_idx[b]).shape[0]) == 1024

    fwd = jax.jit(feature_learner_forward)
    outs = fwd(x, extra_features, params)
    jax.block_until_ready(outs)

    # sanity on shapes (matches PyTorch module outputs)
    expected = [(B, 3, 1024), (B, 64, 1024), (B, 3, 256), (B, 128, 256),
                (B, 3, 64), (B, 256, 64), (B, 3, 16), (B, 512, 16)]
    for o, e in zip(outs, expected):
        assert o.shape == e, (o.shape, e)
    for o in outs:
        assert bool(jnp.all(jnp.isfinite(o)))

    print("KERNEL_OK")
</pallas_src>

<mosaic_0001>
module attributes {stable_mosaic.version = 11 : i64} {
  func.func @_sa_mlp_kernel(%arg0: i32, %arg1: memref<32x32x128xbf16, #tpu.memory_space<vmem>>, %arg2: memref<128x128xbf16, #tpu.memory_space<vmem>>, %arg3: memref<1x128xf32, #tpu.memory_space<vmem>>, %arg4: memref<128x128xbf16, #tpu.memory_space<vmem>>, %arg5: memref<1x128xf32, #tpu.memory_space<vmem>>, %arg6: memref<128x128xbf16, #tpu.memory_space<vmem>>, %arg7: memref<1x128xf32, #tpu.memory_space<vmem>>, %arg8: memref<32x128xf32, #tpu.memory_space<vmem>>) attributes {dimension_semantics = [#tpu.dimension_semantics<parallel>], iteration_bounds = array<i64: 2>, scalar_prefetch = 0 : i64, scratch_operands = 0 : i64, tpu.core_type = #tpu.core_type<tc>, window_params = [{transform_indices = @transform_0, window_bounds = array<i64: 32, 32, 128>}, {pipeline_mode = #tpu.pipeline_mode<synchronous>, transform_indices = @transform_1, window_bounds = array<i64: 128, 128>}, {pipeline_mode = #tpu.pipeline_mode<synchronous>, transform_indices = @transform_2, window_bounds = array<i64: 1, 128>}, {pipeline_mode = #tpu.pipeline_mode<synchronous>, transform_indices = @transform_3, window_bounds = array<i64: 128, 128>}, {pipeline_mode = #tpu.pipeline_mode<synchronous>, transform_indices = @transform_4, window_bounds = array<i64: 1, 128>}, {pipeline_mode = #tpu.pipeline_mode<synchronous>, transform_indices = @transform_5, window_bounds = array<i64: 128, 128>}, {pipeline_mode = #tpu.pipeline_mode<synchronous>, transform_indices = @transform_6, window_bounds = array<i64: 1, 128>}, {transform_indices = @transform_7, window_bounds = array<i64: 32, 128>}]} {
    %c0 = arith.constant 0 : index
    %c0_0 = arith.constant 0 : index
    %0 = vector.load %arg2[%c0, %c0_0] : memref<128x128xbf16, #tpu.memory_space<vmem>>, vector<128x128xbf16>
    %c0_1 = arith.constant 0 : index
    %c0_2 = arith.constant 0 : index
    %1 = vector.load %arg4[%c0_1, %c0_2] : memref<128x128xbf16, #tpu.memory_space<vmem>>, vector<128x128xbf16>
    %c0_3 = arith.constant 0 : index
    %c0_4 = arith.constant 0 : index
    %2 = vector.load %arg6[%c0_3, %c0_4] : memref<128x128xbf16, #tpu.memory_space<vmem>>, vector<128x128xbf16>
    %c0_5 = arith.constant 0 : index
    %c0_6 = arith.constant 0 : index
    %3 = vector.load %arg3[%c0_5, %c0_6] : memref<1x128xf32, #tpu.memory_space<vmem>>, vector<1x128xf32>
    %c0_7 = arith.constant 0 : index
    %c0_8 = arith.constant 0 : index
    %4 = vector.load %arg5[%c0_7, %c0_8] : memref<1x128xf32, #tpu.memory_space<vmem>>, vector<1x128xf32>
    %c0_9 = arith.constant 0 : index
    %c0_10 = arith.constant 0 : index
    %5 = vector.load %arg7[%c0_9, %c0_10] : memref<1x128xf32, #tpu.memory_space<vmem>>, vector<1x128xf32>
    %cst = arith.constant 0.000000e+00 : f32
    %6 = vector.broadcast %cst : f32 to vector<32x128xf32>
    %c0_11 = arith.constant 0 : index
    %c0_12 = arith.constant 0 : index
    %c0_13 = arith.constant 0 : index
    %7 = vector.load %arg1[%c0_11, %c0_12, %c0_13] : memref<32x32x128xbf16, #tpu.memory_space<vmem>>, vector<32x8x128xbf16>
    %8 = vector.shape_cast %7 : vector<32x8x128xbf16> to vector<256x128xbf16>
    %cst_14 = arith.constant dense<0.000000e+00> : vector<256x128xf32>
    %9 = tpu.matmul %8, %0, %cst_14 {dimension_numbers = #tpu.dot_dimension_numbers<[1], [0], [0], [1], [0, 0, 1, 1], [], []>} : vector<256x128xbf16>, vector<128x128xbf16>, vector<256x128xf32> -> vector<256x128xf32>
    %10 = vector.broadcast %3 : vector<1x128xf32> to vector<256x128xf32>
    %11 = arith.addf %9, %10 : vector<256x128xf32>
    %cst_15 = arith.constant 0.000000e+00 : f32
    %12 = vector.broadcast %cst_15 : f32 to vector<256x128xf32>
    %13 = arith.maximumf %11, %12 : vector<256x128xf32>
    %14 = arith.truncf %13 : vector<256x128xf32> to vector<256x128xbf16>
    %cst_16 = arith.constant dense<0.000000e+00> : vector<256x128xf32>
    %15 = tpu.matmul %14, %1, %cst_16 {dimension_numbers = #tpu.dot_dimension_numbers<[1], [0], [0], [1], [0, 0, 1, 1], [], []>} : vector<256x128xbf16>, vector<128x128xbf16>, vector<256x128xf32> -> vector<256x128xf32>
    %16 = vector.broadcast %4 : vector<1x128xf32> to vector<256x128xf32>
    %17 = arith.addf %15, %16 : vector<256x128xf32>
    %cst_17 = arith.constant 0.000000e+00 : f32
    %18 = vector.broadcast %cst_17 : f32 to vector<256x128xf32>
    %19 = arith.maximumf %17, %18 : vector<256x128xf32>
    %20 = arith.truncf %19 : vector<256x128xf32> to vector<256x128xbf16>
    %cst_18 = arith.constant dense<0.000000e+00> : vector<256x128xf32>
    %21 = tpu.matmul %20, %2, %cst_18 {dimension_numbers = #tpu.dot_dimension_numbers<[1], [0], [0], [1], [0, 0, 1, 1], [], []>} : vector<256x128xbf16>, vector<128x128xbf16>, vector<256x128xf32> -> vector<256x128xf32>
    %22 = vector.broadcast %5 : vector<1x128xf32> to vector<256x128xf32>
    %23 = arith.addf %21, %22 : vector<256x128xf32>
    %cst_19 = arith.constant 0.000000e+00 : f32
    %24 = vector.broadcast %cst_19 : f32 to vector<256x128xf32>
    %25 = arith.maximumf %23, %24 : vector<256x128xf32>
    %26 = vector.shape_cast %25 : vector<256x128xf32> to vector<32x8x128xf32>
    %cst_20 = arith.constant dense<0xFF800000> : vector<32x128xf32>
    %27 = vector.multi_reduction <maximumf>, %26, %cst_20 [1] : vector<32x8x128xf32> to vector<32x128xf32>
    %28 = arith.maximumf %6, %27 : vector<32x128xf32>
    %c0_21 = arith.constant 0 : index
    %c8 = arith.constant 8 : index
    %c0_22 = arith.constant 0 : index
    %29 = vector.load %arg1[%c0_21, %c8, %c0_22] : memref<32x32x128xbf16, #tpu.memory_space<vmem>>, vector<32x8x128xbf16>
    %30 = vector.shape_cast %29 : vector<32x8x128xbf16> to vector<256x128xbf16>
    %cst_23 = arith.constant dense<0.000000e+00> : vector<256x128xf32>
    %31 = tpu.matmul %30, %0, %cst_23 {dimension_numbers = #tpu.dot_dimension_numbers<[1], [0], [0], [1], [0, 0, 1, 1], [], []>} : vector<256x128xbf16>, vector<128x128xbf16>, vector<256x128xf32> -> vector<256x128xf32>
    %32 = vector.broadcast %3 : vector<1x128xf32> to vector<256x128xf32>
    %33 = arith.addf %31, %32 : vector<256x128xf32>
    %cst_24 = arith.constant 0.000000e+00 : f32
    %34 = vector.broadcast %cst_24 : f32 to vector<256x128xf32>
    %35 = arith.maximumf %33, %34 : vector<256x128xf32>
    %36 = arith.truncf %35 : vector<256x128xf32> to vector<256x128xbf16>
    %cst_25 = arith.constant dense<0.000000e+00> : vector<256x128xf32>
    %37 = tpu.matmul %36, %1, %cst_25 {dimension_numbers = #tpu.dot_dimension_numbers<[1], [0], [0], [1], [0, 0, 1, 1], [], []>} : vector<256x128xbf16>, vector<128x128xbf16>, vector<256x128xf32> -> vector<256x128xf32>
    %38 = vector.broadcast %4 : vector<1x128xf32> to vector<256x128xf32>
    %39 = arith.addf %37, %38 : vector<256x128xf32>
    %cst_26 = arith.constant 0.000000e+00 : f32
    %40 = vector.broadcast %cst_26 : f32 to vector<256x128xf32>
    %41 = arith.maximumf %39, %40 : vector<256x128xf32>
    %42 = arith.truncf %41 : vector<256x128xf32> to vector<256x128xbf16>
    %cst_27 = arith.constant dense<0.000000e+00> : vector<256x128xf32>
    %43 = tpu.matmul %42, %2, %cst_27 {dimension_numbers = #tpu.dot_dimension_numbers<[1], [0], [0], [1], [0, 0, 1, 1], [], []>} : vector<256x128xbf16>, vector<128x128xbf16>, vector<256x128xf32> -> vector<256x128xf32>
    %44 = vector.broadcast %5 : vector<1x128xf32> to vector<256x128xf32>
    %45 = arith.addf %43, %44 : vector<256x128xf32>
    %cst_28 = arith.constant 0.000000e+00 : f32
    %46 = vector.broadcast %cst_28 : f32 to vector<256x128xf32>
    %47 = arith.maximumf %45, %46 : vector<256x128xf32>
    %48 = vector.shape_cast %47 : vector<256x128xf32> to vector<32x8x128xf32>
    %cst_29 = arith.constant dense<0xFF800000> : vector<32x128xf32>
    %49 = vector.multi_reduction <maximumf>, %48, %cst_29 [1] : vector<32x8x128xf32> to vector<32x128xf32>
    %50 = arith.maximumf %28, %49 : vector<32x128xf32>
    %c0_30 = arith.constant 0 : index
    %c16 = arith.constant 16 : index
    %c0_31 = arith.constant 0 : index
    %51 = vector.load %arg1[%c0_30, %c16, %c0_31] : memref<32x32x128xbf16, #tpu.memory_space<vmem>>, vector<32x8x128xbf16>
    %52 = vector.shape_cast %51 : vector<32x8x128xbf16> to vector<256x128xbf16>
    %cst_32 = arith.constant dense<0.000000e+00> : vector<256x128xf32>
    %53 = tpu.matmul %52, %0, %cst_32 {dimension_numbers = #tpu.dot_dimension_numbers<[1], [0], [0], [1], [0, 0, 1, 1], [], []>} : vector<256x128xbf16>, vector<128x128xbf16>, vector<256x128xf32> -> vector<256x128xf32>
    %54 = vector.broadcast %3 : vector<1x128xf32> to vector<256x128xf32>
    %55 = arith.addf %53, %54 : vector<256x128xf32>
    %cst_33 = arith.constant 0.000000e+00 : f32
    %56 = vector.broadcast %cst_33 : f32 to vector<256x128xf32>
    %57 = arith.maximumf %55, %56 : vector<256x128xf32>
    %58 = arith.truncf %57 : vector<256x128xf32> to vector<256x128xbf16>
    %cst_34 = arith.constant dense<0.000000e+00> : vector<256x128xf32>
    %59 = tpu.matmul %58, %1, %cst_34 {dimension_numbers = #tpu.dot_dimension_numbers<[1], [0], [0], [1], [0, 0, 1, 1], [], []>} : vector<256x128xbf16>, vector<128x128xbf16>, vector<256x128xf32> -> vector<256x128xf32>
    %60 = vector.broadcast %4 : vector<1x128xf32> to vector<256x128xf32>
    %61 = arith.addf %59, %60 : vector<256x128xf32>
    %cst_35 = arith.constant 0.000000e+00 : f32
    %62 = vector.broadcast %cst_35 : f32 to vector<256x128xf32>
    %63 = arith.maximumf %61, %62 : vector<256x128xf32>
    %64 = arith.truncf %63 : vector<256x128xf32> to vector<256x128xbf16>
    %cst_36 = arith.constant dense<0.000000e+00> : vector<256x128xf32>
    %65 = tpu.matmul %64, %2, %cst_36 {dimension_numbers = #tpu.dot_dimension_numbers<[1], [0], [0], [1], [0, 0, 1, 1], [], []>} : vector<256x128xbf16>, vector<128x128xbf16>, vector<256x128xf32> -> vector<256x128xf32>
    %66 = vector.broadcast %5 : vector<1x128xf32> to vector<256x128xf32>
    %67 = arith.addf %65, %66 : vector<256x128xf32>
    %cst_37 = arith.constant 0.000000e+00 : f32
    %68 = vector.broadcast %cst_37 : f32 to vector<256x128xf32>
    %69 = arith.maximumf %67, %68 : vector<256x128xf32>
    %70 = vector.shape_cast %69 : vector<256x128xf32> to vector<32x8x128xf32>
    %cst_38 = arith.constant dense<0xFF800000> : vector<32x128xf32>
    %71 = vector.multi_reduction <maximumf>, %70, %cst_38 [1] : vector<32x8x128xf32> to vector<32x128xf32>
    %72 = arith.maximumf %50, %71 : vector<32x128xf32>
    %c0_39 = arith.constant 0 : index
    %c24 = arith.constant 24 : index
    %c0_40 = arith.constant 0 : index
    %73 = vector.load %arg1[%c0_39, %c24, %c0_40] : memref<32x32x128xbf16, #tpu.memory_space<vmem>>, vector<32x8x128xbf16>
    %74 = vector.shape_cast %73 : vector<32x8x128xbf16> to vector<256x128xbf16>
    %cst_41 = arith.constant dense<0.000000e+00> : vector<256x128xf32>
    %75 = tpu.matmul %74, %0, %cst_41 {dimension_numbers = #tpu.dot_dimension_numbers<[1], [0], [0], [1], [0, 0, 1, 1], [], []>} : vector<256x128xbf16>, vector<128x128xbf16>, vector<256x128xf32> -> vector<256x128xf32>
    %76 = vector.broadcast %3 : vector<1x128xf32> to vector<256x128xf32>
    %77 = arith.addf %75, %76 : vector<256x128xf32>
    %cst_42 = arith.constant 0.000000e+00 : f32
    %78 = vector.broadcast %cst_42 : f32 to vector<256x128xf32>
    %79 = arith.maximumf %77, %78 : vector<256x128xf32>
    %80 = arith.truncf %79 : vector<256x128xf32> to vector<256x128xbf16>
    %cst_43 = arith.constant dense<0.000000e+00> : vector<256x128xf32>
    %81 = tpu.matmul %80, %1, %cst_43 {dimension_numbers = #tpu.dot_dimension_numbers<[1], [0], [0], [1], [0, 0, 1, 1], [], []>} : vector<256x128xbf16>, vector<128x128xbf16>, vector<256x128xf32> -> vector<256x128xf32>
    %82 = vector.broadcast %4 : vector<1x128xf32> to vector<256x128xf32>
    %83 = arith.addf %81, %82 : vector<256x128xf32>
    %cst_44 = arith.constant 0.000000e+00 : f32
    %84 = vector.broadcast %cst_44 : f32 to vector<256x128xf32>
    %85 = arith.maximumf %83, %84 : vector<256x128xf32>
    %86 = arith.truncf %85 : vector<256x128xf32> to vector<256x128xbf16>
    %cst_45 = arith.constant dense<0.000000e+00> : vector<256x128xf32>
    %87 = tpu.matmul %86, %2, %cst_45 {dimension_numbers = #tpu.dot_dimension_numbers<[1], [0], [0], [1], [0, 0, 1, 1], [], []>} : vector<256x128xbf16>, vector<128x128xbf16>, vector<256x128xf32> -> vector<256x128xf32>
    %88 = vector.broadcast %5 : vector<1x128xf32> to vector<256x128xf32>
    %89 = arith.addf %87, %88 : vector<256x128xf32>
    %cst_46 = arith.constant 0.000000e+00 : f32
    %90 = vector.broadcast %cst_46 : f32 to vector<256x128xf32>
    %91 = arith.maximumf %89, %90 : vector<256x128xf32>
    %92 = vector.shape_cast %91 : vector<256x128xf32> to vector<32x8x128xf32>
    %cst_47 = arith.constant dense<0xFF800000> : vector<32x128xf32>
    %93 = vector.multi_reduction <maximumf>, %92, %cst_47 [1] : vector<32x8x128xf32> to vector<32x128xf32>
    %94 = arith.maximumf %72, %93 : vector<32x128xf32>
    %c0_48 = arith.constant 0 : index
    %c0_49 = arith.constant 0 : index
    %95 = vector.load %arg8[%c0_48, %c0_49] : memref<32x128xf32, #tpu.memory_space<vmem>>, vector<32x128xf32>
    tpu.vector_store %arg8[%c0_48, %c0_49], %94 {strides = array<i32>} : memref<32x128xf32, #tpu.memory_space<vmem>>, vector<32x128xf32>,
    return
  }
  func.func @transform_0(%arg0: i32) -> (i32, i32, i32) {
    %c0_i32 = arith.constant 0 : i32
    %c0_i32_0 = arith.constant 0 : i32
    %c0_i32_1 = arith.constant 0 : i32
    return %arg0, %c0_i32, %c0_i32_0 : i32, i32, i32
  }
  func.func @transform_1(%arg0: i32) -> (i32, i32) {
    %c0_i32 = arith.constant 0 : i32
    %c0_i32_0 = arith.constant 0 : i32
    %c0_i32_1 = arith.constant 0 : i32
    return %c0_i32, %c0_i32_0 : i32, i32
  }
  func.func @transform_2(%arg0: i32) -> (i32, i32) {
    %c0_i32 = arith.constant 0 : i32
    %c0_i32_0 = arith.constant 0 : i32
    %c0_i32_1 = arith.constant 0 : i32
    return %c0_i32, %c0_i32_0 : i32, i32
  }
  func.func @transform_3(%arg0: i32) -> (i32, i32) {
    %c0_i32 = arith.constant 0 : i32
    %c0_i32_0 = arith.constant 0 : i32
    %c0_i32_1 = arith.constant 0 : i32
    return %c0_i32, %c0_i32_0 : i32, i32
  }
  func.func @transform_4(%arg0: i32) -> (i32, i32) {
    %c0_i32 = arith.constant 0 : i32
    %c0_i32_0 = arith.constant 0 : i32
    %c0_i32_1 = arith.constant 0 : i32
    return %c0_i32, %c0_i32_0 : i32, i32
  }
  func.func @transform_5(%arg0: i32) -> (i32, i32) {
    %c0_i32 = arith.constant 0 : i32
    %c0_i32_0 = arith.constant 0 : i32
    %c0_i32_1 = arith.constant 0 : i32
    return %c0_i32, %c0_i32_0 : i32, i32
  }
  func.func @transform_6(%arg0: i32) -> (i32, i32) {
    %c0_i32 = arith.constant 0 : i32
    %c0_i32_0 = arith.constant 0 : i32
    %c0_i32_1 = arith.constant 0 : i32
    return %c0_i32, %c0_i32_0 : i32, i32
  }
  func.func @transform_7(%arg0: i32) -> (i32, i32) {
    %c0_i32 = arith.constant 0 : i32
    %c0_i32_0 = arith.constant 0 : i32
    return %arg0, %c0_i32 : i32, i32
  }
}

</mosaic_0001>

<llo_original>
// kernel: tpu_custom_call.1
$region0: #{tpu_custom_call.1}
  #allocation0 [shape = 'u32[]', space=smem, size = 0x4, offset = 0x4, fixed_abs, tag = 'smem constant byte address 0x4 - core index']
  #allocation1 [shape = 'u32[72,128]{1,0:T(1,128)}', space=vmem, size = 0x9000, scoped, tag = 'internal scratch']
  %s0 = inlined_call_operand.hbm [shape: bf16[64,32,128], index: 0, kind: input, shape index: {}]
  %s1 = inlined_call_operand.hbm [shape: bf16[128,128], index: 1, kind: input, shape index: {}]
  %s2 = inlined_call_operand.vmem [shape: f32[1,128], index: 2, kind: input, shape index: {}]
  %s3 = inlined_call_operand.hbm [shape: bf16[128,128], index: 3, kind: input, shape index: {}]
  %s4 = inlined_call_operand.vmem [shape: f32[1,128], index: 4, kind: input, shape index: {}]
  %s5 = inlined_call_operand.hbm [shape: bf16[128,128], index: 5, kind: input, shape index: {}]
  %s6 = inlined_call_operand.vmem [shape: f32[1,128], index: 6, kind: input, shape index: {}]
  %s7 = inlined_call_operand.hbm [shape: f32[64,128], index: 7, kind: output, shape index: {}]
  %s8 = sld [smem:[#allocation0]]
  $region77: #{tpu_custom_call.1} parent=0
    _
  %s10 = ssub.s32 1, %s8
  %s11 = scalar_select 0, %s10, %s8
  $region1: #{tpu_custom_call.1} parent=0
    #allocation2 [shape = 'u8[524288]{0}', space=vmem, size = 0x80000, scoped, tag = 'input window, operand 0']
    #allocation3 [shape = 's32[2]{0}', space=sflag, size = 0x8, scoped, tag = 'scoped memory for tpu_custom_call.1']
    #allocation4 [shape = 's32[2]{0}', space=sflag, size = 0x8, scoped, tag = 'scoped memory for tpu_custom_call.1']
    #allocation5 [shape = 'u8[32768]{0}', space=vmem, size = 0x8000, scoped, tag = 'input window, operand 1, single buffered']
    #allocation6 [shape = 's32[1]{0}', space=sflag, size = 0x4, scoped, tag = 'scoped memory for tpu_custom_call.1']
    #allocation7 [shape = 'u8[32768]{0}', space=vmem, size = 0x8000, scoped, tag = 'input window, operand 3, single buffered']
    #allocation8 [shape = 'u8[32768]{0}', space=vmem, size = 0x8000, scoped, tag = 'input window, operand 5, single buffered']
    #allocation9 [shape = 's32[1]{0}', space=sflag, size = 0x4, scoped, tag = 'scoped memory for tpu_custom_call.1']
    #allocation10 [shape = 'u8[32768]{0}', space=vmem, size = 0x8000, scoped, tag = 'output window, operand 0']
    %12 = vsyncpa [#allocation3], 0
    %s13 = scalar_lea.sflag [#allocation3], 1
    %14 = vsyncpa %s13, 0
    %15 = vsyncpa [#allocation6], 0
    %16 = vsyncpa [#allocation9], 0
    %17 = vsyncpa [#allocation4], 0
    %s18 = scalar_lea.sflag [#allocation4], 1
    %19 = vsyncpa %s18, 0
    loop: start=0, step=1, limit=4
    $region2: #{tpu_custom_call.1} parent=1 // loop_pre_header
      _
    $region3: #{tpu_custom_call.1} parent=1 // loop_header
      %s21 = sphi 0, %s25
      %p22 = scmp.ge.s32.totalorder %s21, 4
      %s31 = sphi 0, %s33
      %s34 = sphi 0, %s31
      %s35 = sphi 0, %s34
      %s51 = sphi 0, %s35
      %s55 = sphi 0, %s55
      %s57 = sphi 0, %s55
      %s58 = sphi 0, %s57
      %s72 = sphi 0, %s58
      %s76 = sphi 0, %s76
      %s78 = sphi 0, %s76
      %s79 = sphi 0, %s78
      %s93 = sphi 0, %s79
      %s97 = sphi 0, %s97
      %s99 = sphi 0, %s97
      %s100 = sphi 0, %s99
      %s114 = sphi 0, %s100
      %s118 = sphi 0, %s118
      %s120 = sphi 0, %s118
      %s121 = sphi 0, %s120
      %s135 = sphi 0, %s121
      %s139 = sphi 0, %s139
      %s141 = sphi 0, %s139
      %s142 = sphi 0, %s141
      %s156 = sphi 0, %s142
      %s160 = sphi 0, %s160
      %s162 = sphi 0, %s160
      %s163 = sphi 0, %s162
      %s177 = sphi 0, %s163
      %s183 = sphi 0, %s185
      %s186 = sphi 0, %s183
      %s187 = sphi 0, %s186
      %s203 = sphi 0, %s187
    $region4: #{tpu_custom_call.1} parent=1 // loop_header_branch
      %24 = sbr.rel (%p22) target = $region8
    $region5: #{tpu_custom_call.1} parent=1 // loop_body
      %s26 = ssub.s32 %s21, 1
      %s27 = ssub.s32 %s21, 2
      %s28 = sadd.s32 %s21, 1
      %s29 = ssub.s32 %s21, %s28
      %p30 = scmp.eq.s32.totalorder %s29, 0
      %s32 = sadd.s32 %s31, 1
      %s33 = scalar_select %p30, %s31, %s32
      %p36 = pneg %p30
      %p37 = scmp.eq.s32.totalorder %s21, 1
      %p38 = por %p36, %p37
      %p39 = scmp.ne.s32.totalorder %s31, %s34
      %p40 = scmp.eq.s32.totalorder %s21, 0
      %p41 = por %p39, %p40
      %p42 = scmp.ne.s32.totalorder %s31, %s34
      %p43 = scmp.eq.s32.totalorder %s26, 1
      %p44 = por %p42, %p43
      %p45 = scmp.ne.s32.totalorder %s34, %s35
      %p46 = scmp.eq.s32.totalorder %s26, 0
      %p47 = por %p45, %p46
      %p48 = scmp.ne.s32.totalorder %s34, %s35
      %p49 = scmp.eq.s32.totalorder %s27, 1
      %p50 = por %p48, %p49
      %p52 = scmp.ne.s32.totalorder %s35, %s51
      %p53 = scmp.eq.s32.totalorder %s27, 0
      %p54 = por %p52, %p53
      %s56 = sadd.s32 %s55, 1
      %p59 = scmp.eq.s32.totalorder %s21, 1
      %p60 = scmp.ne.s32.totalorder %s55, %s57
      %p61 = scmp.eq.s32.totalorder %s21, 0
      %p62 = por %p60, %p61
      %p63 = scmp.ne.s32.totalorder %s55, %s57
      %p64 = scmp.eq.s32.totalorder %s26, 1
      %p65 = por %p63, %p64
      %p66 = scmp.ne.s32.totalorder %s57, %s58
      %p67 = scmp.eq.s32.totalorder %s26, 0
      %p68 = por %p66, %p67
      %p69 = scmp.ne.s32.totalorder %s57, %s58
      %p70 = scmp.eq.s32.totalorder %s27, 1
      %p71 = por %p69, %p70
      %p73 = scmp.ne.s32.totalorder %s58, %s72
      %p74 = scmp.eq.s32.totalorder %s27, 0
      %p75 = por %p73, %p74
      %s77 = sadd.s32 %s76, 1
      %p80 = scmp.eq.s32.totalorder %s21, 1
      %p81 = scmp.ne.s32.totalorder %s76, %s78
      %p82 = scmp.eq.s32.totalorder %s21, 0
      %p83 = por %p81, %p82
      %p84 = scmp.ne.s32.totalorder %s76, %s78
      %p85 = scmp.eq.s32.totalorder %s26, 1
      %p86 = por %p84, %p85
      %p87 = scmp.ne.s32.totalorder %s78, %s79
      %p88 = scmp.eq.s32.totalorder %s26, 0
      %p89 = por %p87, %p88
      %p90 = scmp.ne.s32.totalorder %s78, %s79
      %p91 = scmp.eq.s32.totalorder %s27, 1
      %p92 = por %p90, %p91
      %p94 = scmp.ne.s32.totalorder %s79, %s93
      %p95 = scmp.eq.s32.totalorder %s27, 0
      %p96 = por %p94, %p95
      %s98 = sadd.s32 %s97, 1
      %p101 = scmp.eq.s32.totalorder %s21, 1
      %p102 = scmp.ne.s32.totalorder %s97, %s99
      %p103 = scmp.eq.s32.totalorder %s21, 0
      %p104 = por %p102, %p103
      %p105 = scmp.ne.s32.totalorder %s97, %s99
      %p106 = scmp.eq.s32.totalorder %s26, 1
      %p107 = por %p105, %p106
      %p108 = scmp.ne.s32.totalorder %s99, %s100
      %p109 = scmp.eq.s32.totalorder %s26, 0
      %p110 = por %p108, %p109
      %p111 = scmp.ne.s32.totalorder %s99, %s100
      %p112 = scmp.eq.s32.totalorder %s27, 1
      %p113 = por %p111, %p112
      %p115 = scmp.ne.s32.totalorder %s100, %s114
      %p116 = scmp.eq.s32.totalorder %s27, 0
      %p117 = por %p115, %p116
      %s119 = sadd.s32 %s118, 1
      %p122 = scmp.eq.s32.totalorder %s21, 1
      %p123 = scmp.ne.s32.totalorder %s118, %s120
      %p124 = scmp.eq.s32.totalorder %s21, 0
      %p125 = por %p123, %p124
      %p126 = scmp.ne.s32.totalorder %s118, %s120
      %p127 = scmp.eq.s32.totalorder %s26, 1
      %p128 = por %p126, %p127
      %p129 = scmp.ne.s32.totalorder %s120, %s121
      %p130 = scmp.eq.s32.totalorder %s26, 0
      %p131 = por %p129, %p130
      %p132 = scmp.ne.s32.totalorder %s120, %s121
      %p133 = scmp.eq.s32.totalorder %s27, 1
      %p134 = por %p132, %p133
      %p136 = scmp.ne.s32.totalorder %s121, %s135
      %p137 = scmp.eq.s32.totalorder %s27, 0
      %p138 = por %p136, %p137
      %s140 = sadd.s32 %s139, 1
      %p143 = scmp.eq.s32.totalorder %s21, 1
      %p144 = scmp.ne.s32.totalorder %s139, %s141
      %p145 = scmp.eq.s32.totalorder %s21, 0
      %p146 = por %p144, %p145
      %p147 = scmp.ne.s32.totalorder %s139, %s141
      %p148 = scmp.eq.s32.totalorder %s26, 1
      %p149 = por %p147, %p148
      %p150 = scmp.ne.s32.totalorder %s141, %s142
      %p151 = scmp.eq.s32.totalorder %s26, 0
      %p152 = por %p150, %p151
      %p153 = scmp.ne.s32.totalorder %s141, %s142
      %p154 = scmp.eq.s32.totalorder %s27, 1
      %p155 = por %p153, %p154
      %p157 = scmp.ne.s32.totalorder %s142, %s156
      %p158 = scmp.eq.s32.totalorder %s27, 0
      %p159 = por %p157, %p158
      %s161 = sadd.s32 %s160, 1
      %p164 = scmp.eq.s32.totalorder %s21, 1
      %p165 = scmp.ne.s32.totalorder %s160, %s162
      %p166 = scmp.eq.s32.totalorder %s21, 0
      %p167 = por %p165, %p166
      %p168 = scmp.ne.s32.totalorder %s160, %s162
      %p169 = scmp.eq.s32.totalorder %s26, 1
      %p170 = por %p168, %p169
      %p171 = scmp.ne.s32.totalorder %s162, %s163
      %p172 = scmp.eq.s32.totalorder %s26, 0
      %p173 = por %p171, %p172
      %p174 = scmp.ne.s32.totalorder %s162, %s163
      %p175 = scmp.eq.s32.totalorder %s27, 1
      %p176 = por %p174, %p175
      %p178 = scmp.ne.s32.totalorder %s163, %s177
      %p179 = scmp.eq.s32.totalorder %s27, 0
      %p180 = por %p178, %p179
      %s181 = ssub.s32 %s21, %s28
      %p182 = scmp.eq.s32.totalorder %s181, 0
      %s184 = sadd.s32 %s183, 1
      %s185 = scalar_select %p182, %s183, %s184
      %p188 = pneg %p182
      %p189 = scmp.eq.s32.totalorder %s21, 1
      %p190 = por %p188, %p189
      %p191 = scmp.ne.s32.totalorder %s183, %s186
      %p192 = scmp.eq.s32.totalorder %s21, 0
      %p193 = por %p191, %p192
      %p194 = scmp.ne.s32.totalorder %s183, %s186
      %p195 = scmp.eq.s32.totalorder %s26, 1
      %p196 = por %p194, %p195
      %p197 = scmp.ne.s32.totalorder %s186, %s187
      %p198 = scmp.eq.s32.totalorder %s26, 0
      %p199 = por %p197, %p198
      %p200 = scmp.ne.s32.totalorder %s186, %s187
      %p201 = scmp.eq.s32.totalorder %s27, 1
      %p202 = por %p200, %p201
      %p204 = scmp.ne.s32.totalorder %s187, %s203
      %p205 = scmp.eq.s32.totalorder %s27, 0
      %p206 = por %p204, %p205
      %p207 = scmp.le.s32.totalorder 1, %s21
      %p208 = scmp.lt.s32.totalorder %s21, 3
      %p209 = pnand %p207, %p208
      %p210 = pneg %p209
      // Predicated region
      $region9: #{tpu_custom_call.1} parent=5 // pred_check
        _
      $region10: #{tpu_custom_call.1} parent=5 // pred_check_branch
        %212 = sbr.rel (%p209) target = $region12
      $region11: #{tpu_custom_call.1} parent=5 // pred_region
        %s213 = ssub.s32 %s21, 1
        // Predicated region
        $region13: #{tpu_custom_call.1} parent=11 // pred_check
          %p214 = pneg %p68
        $region14: #{tpu_custom_call.1} parent=11 // pred_check_branch
          %216 = sbr.rel (%p214) target = $region16
        $region15: #{tpu_custom_call.1} parent=11 // pred_region
          %218 = vsyncadd [#allocation6], 0
          %s219 = sshll.u32 %s1, 4
          %s220 = int_to_ptr.hbm [resolvable:$true] %s219
          %s221 = sshll.u32 [#allocation5], 4
          %s222 = int_to_ptr.vmem [resolvable:$true] %s221
          %227 = dma.hbm_to_vmem [thread:$0]  %s220, 1024, %s222, [#allocation6], 64, 64, 4
        $region16: #{tpu_custom_call.1} parent=11 // pred_fallthru
          _
        // Predicated region
        $region17: #{tpu_custom_call.1} parent=11 // pred_check
          %p228 = pneg %p89
        $region18: #{tpu_custom_call.1} parent=11 // pred_check_branch
          %230 = sbr.rel (%p228) target = $region20
        $region19: #{tpu_custom_call.1} parent=11 // pred_region
          _
        $region20: #{tpu_custom_call.1} parent=11 // pred_fallthru
          _
        // Predicated region
        $region21: #{tpu_custom_call.1} parent=11 // pred_check
          %p231 = pneg %p110
        $region22: #{tpu_custom_call.1} parent=11 // pred_check_branch
          %233 = sbr.rel (%p231) target = $region24
        $region23: #{tpu_custom_call.1} parent=11 // pred_region
          %235 = vsyncadd [#allocation6], 0
          %s236 = sshll.u32 %s3, 4
          %s237 = int_to_ptr.hbm [resolvable:$true] %s236
          %s238 = sshll.u32 [#allocation7], 4
          %s239 = int_to_ptr.vmem [resolvable:$true] %s238
          %244 = dma.hbm_to_vmem [thread:$0]  %s237, 1024, %s239, [#allocation6], 64, 64, 4
        $region24: #{tpu_custom_call.1} parent=11 // pred_fallthru
          _
        // Predicated region
        $region25: #{tpu_custom_call.1} parent=11 // pred_check
          %p245 = pneg %p131
        $region26: #{tpu_custom_call.1} parent=11 // pred_check_branch
          %247 = sbr.rel (%p245) target = $region28
        $region27: #{tpu_custom_call.1} parent=11 // pred_region
          _
        $region28: #{tpu_custom_call.1} parent=11 // pred_fallthru
          _
        // Predicated region
        $region29: #{tpu_custom_call.1} parent=11 // pred_check
          %p248 = pneg %p152
        $region30: #{tpu_custom_call.1} parent=11 // pred_check_branch
          %250 = sbr.rel (%p248) target = $region32
        $region31: #{tpu_custom_call.1} parent=11 // pred_region
          %252 = vsyncadd [#allocation9], 0
          %s253 = sshll.u32 %s5, 4
          %s254 = int_to_ptr.hbm [resolvable:$true] %s253
          %s255 = sshll.u32 [#allocation8], 4
          %s256 = int_to_ptr.vmem [resolvable:$true] %s255
          %261 = dma.hbm_to_vmem [thread:$0]  %s254, 1024, %s256, [#allocation9], 64, 64, 4
        $region32: #{tpu_custom_call.1} parent=11 // pred_fallthru
          _
        // Predicated region
        $region33: #{tpu_custom_call.1} parent=11 // pred_check
          %p262 = pneg %p173
        $region34: #{tpu_custom_call.1} parent=11 // pred_check_branch
          %264 = sbr.rel (%p262) target = $region36
        $region35: #{tpu_custom_call.1} parent=11 // pred_region
          _
        $region36: #{tpu_custom_call.1} parent=11 // pred_fallthru
          _
      $region12: #{tpu_custom_call.1} parent=5 // pred_fallthru
        _
      %p265 = scmp.lt.s32.totalorder %s21, 2
      // Predicated region
      $region37: #{tpu_custom_call.1} parent=5 // pred_check
        %p266 = pneg %p265
      $region38: #{tpu_custom_call.1} parent=5 // pred_check_branch
        %268 = sbr.rel (%p266) target = $region40
      $region39: #{tpu_custom_call.1} parent=5 // pred_region
        // Predicated region
        $region41: #{tpu_custom_call.1} parent=39 // pred_check
          %p269 = pneg %p41
        $region42: #{tpu_custom_call.1} parent=39 // pred_check_branch
          %271 = sbr.rel (%p269) target = $region44
        $region43: #{tpu_custom_call.1} parent=39 // pred_region
          %s272 = sand.u32 %s31, 1
          %s273 = scalar_lea.sflag [#allocation3], %s272
          %s274 = sand.u32 %s31, 1
          %s275 = smul.addr %s274, 512
          %s276 = scalar_lea.vmem [#allocation2], %s275
          %s277 = smul.u32 32, %s21
          %279 = vsyncadd %s273, 0
          %s280 = smul.addr %s277, 4
          %s281 = smul.addr %s280, 4
          %s282 = scalar_lea.hbm %s0, %s281
          %s283 = sshll.u32 %s282, 4
          %s284 = int_to_ptr.hbm [resolvable:$true] %s283
          %s285 = sshll.u32 %s276, 4
          %s286 = int_to_ptr.vmem [resolvable:$true] %s285
          %291 = dma.hbm_to_vmem [thread:$0]  %s284, 8192, %s286, %s273, 64, 64, 4
        $region44: #{tpu_custom_call.1} parent=39 // pred_fallthru
          _
      $region40: #{tpu_custom_call.1} parent=5 // pred_fallthru
        _
      %p292 = scmp.le.s32.totalorder 1, %s21
      %p293 = scmp.lt.s32.totalorder %s21, 3
      %p294 = pnand %p292, %p293
      %p295 = pneg %p294
      // Predicated region
      $region45: #{tpu_custom_call.1} parent=5 // pred_check
        _
      $region46: #{tpu_custom_call.1} parent=5 // pred_check_branch
        %297 = sbr.rel (%p294) target = $region48
      $region47: #{tpu_custom_call.1} parent=5 // pred_region
        %s298 = ssub.s32 %s21, 1
        %s299 = sand.u32 %s34, 1
        %s300 = scalar_lea.sflag [#allocation3], %s299
        %s301 = sand.u32 %s34, 1
        %s302 = smul.addr %s301, 512
        %s303 = scalar_lea.vmem [#allocation2], %s302
        // Predicated region
        $region49: #{tpu_custom_call.1} parent=47 // pred_check
          %p304 = pneg %p47
        $region50: #{tpu_custom_call.1} parent=47 // pred_check_branch
          %306 = sbr.rel (%p304) target = $region52
        $region51: #{tpu_custom_call.1} parent=47 // pred_region
          %308 = dma.done %s300, 8192
        $region52: #{tpu_custom_call.1} parent=47 // pred_fallthru
          _
        // Predicated region
        $region53: #{tpu_custom_call.1} parent=47 // pred_check
          %p309 = pneg %p68
        $region54: #{tpu_custom_call.1} parent=47 // pred_check_branch
          %311 = sbr.rel (%p309) target = $region56
        $region55: #{tpu_custom_call.1} parent=47 // pred_region
          %313 = dma.done [#allocation6], 1024
        $region56: #{tpu_custom_call.1} parent=47 // pred_fallthru
          _
        // Predicated region
        $region57: #{tpu_custom_call.1} parent=47 // pred_check
          %p314 = pneg %p110
        $region58: #{tpu_custom_call.1} parent=47 // pred_check_branch
          %316 = sbr.rel (%p314) target = $region60
        $region59: #{tpu_custom_call.1} parent=47 // pred_region
          %318 = dma.done [#allocation6], 1024
        $region60: #{tpu_custom_call.1} parent=47 // pred_fallthru
          _
        // Predicated region
        $region61: #{tpu_custom_call.1} parent=47 // pred_check
          %p319 = pneg %p152
        $region62: #{tpu_custom_call.1} parent=47 // pred_check_branch
          %321 = sbr.rel (%p319) target = $region64
        $region63: #{tpu_custom_call.1} parent=47 // pred_region
          %323 = dma.done [#allocation9], 1024
        $region64: #{tpu_custom_call.1} parent=47 // pred_fallthru
          _
        %s324 = sand.u32 %s34, 1
        %s325 = scalar_lea.sflag [#allocation3], %s324
        %s326 = sand.u32 %s34, 1
        %s327 = smul.addr %s326, 512
        %s328 = scalar_lea.vmem [#allocation2], %s327
        %p329 = pneg %p47
        %p330 = pneg %p44
        %p331 = pneg %p68
        %p332 = pneg %p65
        %p333 = pneg %p89
        %p334 = pneg %p86
        %p335 = pneg %p110
        %p336 = pneg %p107
        %p337 = pneg %p131
        %p338 = pneg %p128
        %p339 = pneg %p152
        %p340 = pneg %p149
        %p341 = pneg %p173
        %p342 = pneg %p170
        %p343 = pneg %p199
        %p344 = pneg %p196
        %s345 = sand.u32 %s186, 1
        %s346 = scalar_lea.sflag [#allocation4], %s345
        %s347 = sand.u32 %s186, 1
        %s348 = smul.addr %s347, 32
        %s349 = scalar_lea.vmem [#allocation10], %s348
        %s350 = smul.u32 32, %s26
        %s351 = smul.u32 4, %s26
        %v352 = vld [vmem:[#allocation5] sm:$0xf]
        %v353 = vld [vmem:[#allocation5 + $0x4] sm:$0xf]
        %v354 = vld [vmem:[#allocation5 + $0x8] sm:$0xf]
        %v355 = vld [vmem:[#allocation5 + $0xc] sm:$0xf]
        %v356 = vld [vmem:[#allocation5 + $0x10] sm:$0xf]
        %v357 = vld [vmem:[#allocation5 + $0x14] sm:$0xf]
        %v358 = vld [vmem:[#allocation5 + $0x18] sm:$0xf]
        %v359 = vld [vmem:[#allocation5 + $0x1c] sm:$0xf]
        %v360 = vld [vmem:[#allocation5 + $0x20] sm:$0xf]
        %v361 = vld [vmem:[#allocation5 + $0x24] sm:$0xf]
        %v362 = vld [vmem:[#allocation5 + $0x28] sm:$0xf]
        %v363 = vld [vmem:[#allocation5 + $0x2c] sm:$0xf]
        %v364 = vld [vmem:[#allocation5 + $0x30] sm:$0xf]
        %v365 = vld [vmem:[#allocation5 + $0x34] sm:$0xf]
        %v366 = vld [vmem:[#allocation5 + $0x38] sm:$0xf]
        %v367 = vld [vmem:[#allocation5 + $0x3c] sm:$0xf]
        %v368 = vld [vmem:[#allocation7] sm:$0xf]
        %v369 = vld [vmem:[#allocation7 + $0x4] sm:$0xf]
        %v370 = vld [vmem:[#allocation7 + $0x8] sm:$0xf]
        %v371 = vld [vmem:[#allocation7 + $0xc] sm:$0xf]
        %v372 = vld [vmem:[#allocation7 + $0x10] sm:$0xf]
        %v373 = vld [vmem:[#allocation7 + $0x14] sm:$0xf]
        %v374 = vld [vmem:[#allocation7 + $0x18] sm:$0xf]
        %v375 = vld [vmem:[#allocation7 + $0x1c] sm:$0xf]
        %v376 = vld [vmem:[#allocation7 + $0x20] sm:$0xf]
        %v377 = vld [vmem:[#allocation7 + $0x24] sm:$0xf]
        %v378 = vld [vmem:[#allocation7 + $0x28] sm:$0xf]
        %v379 = vld [vmem:[#allocation7 + $0x2c] sm:$0xf]
        %v380 = vld [vmem:[#allocation7 + $0x30] sm:$0xf]
        %v381 = vld [vmem:[#allocation7 + $0x34] sm:$0xf]
        %v382 = vld [vmem:[#allocation7 + $0x38] sm:$0xf]
        %v383 = vld [vmem:[#allocation7 + $0x3c] sm:$0xf]
        %v384 = vld [vmem:[#allocation8] sm:$0xf]
        %v385 = vld [vmem:[#allocation8 + $0x4] sm:$0xf]
        %v386 = vld [vmem:[#allocation8 + $0x8] sm:$0xf]
        %v387 = vld [vmem:[#allocation8 + $0xc] sm:$0xf]
        %v388 = vld [vmem:[#allocation8 + $0x10] sm:$0xf]
        %v389 = vld [vmem:[#allocation8 + $0x14] sm:$0xf]
        %v390 = vld [vmem:[#allocation8 + $0x18] sm:$0xf]
        %v391 = vld [vmem:[#allocation8 + $0x1c] sm:$0xf]
        %v392 = vld [vmem:[#allocation8 + $0x20] sm:$0xf]
        %v393 = vld [vmem:[#allocation8 + $0x24] sm:$0xf]
        %v394 = vld [vmem:[#allocation8 + $0x28] sm:$0xf]
        %v395 = vld [vmem:[#allocation8 + $0x2c] sm:$0xf]
        %v396 = vld [vmem:[#allocation8 + $0x30] sm:$0xf]
        %v397 = vld [vmem:[#allocation8 + $0x34] sm:$0xf]
        %v398 = vld [vmem:[#allocation8 + $0x38] sm:$0xf]
        %v399 = vld [vmem:[#allocation8 + $0x3c] sm:$0xf]
        %v400 = vld [vmem:[%s2] sm:$0x1]
        %v401 = vld [vmem:[%s4] sm:$0x1]
        %v402 = vld [vmem:[%s6] sm:$0x1]
        %v403 = vld [vmem:[%s303] sm:$0xf]
        %v404 = vld [vmem:[%s303 + $0x10] sm:$0xf]
        %v405 = vld [vmem:[%s303 + $0x20] sm:$0xf]
        %v406 = vld [vmem:[%s303 + $0x30] sm:$0xf]
        %v407 = vld [vmem:[%s303 + $0x40] sm:$0xf]
        %v408 = vld [vmem:[%s303 + $0x50] sm:$0xf]
        %v409 = vld [vmem:[%s303 + $0x60] sm:$0xf]
        %v410 = vld [vmem:[%s303 + $0x70] sm:$0xf]
        %v411 = vld [vmem:[%s303 + $0x80] sm:$0xf]
        %v412 = vld [vmem:[%s303 + $0x90] sm:$0xf]
        %v413 = vld [vmem:[%s303 + $0xa0] sm:$0xf]
        %v414 = vld [vmem:[%s303 + $0xb0] sm:$0xf]
        %v415 = vld [vmem:[%s303 + $0xc0] sm:$0xf]
        %v416 = vld [vmem:[%s303 + $0xd0] sm:$0xf]
        %v417 = vld [vmem:[%s303 + $0xe0] sm:$0xf]
        %v418 = vld [vmem:[%s303 + $0xf0] sm:$0xf]
        %v419 = vld [vmem:[%s303 + $0x100] sm:$0xf]
        %v420 = vld [vmem:[%s303 + $0x110] sm:$0xf]
        %v421 = vld [vmem:[%s303 + $0x120] sm:$0xf]
        %v422 = vld [vmem:[%s303 + $0x130] sm:$0xf]
        %v423 = vld [vmem:[%s303 + $0x140] sm:$0xf]
        %v424 = vld [vmem:[%s303 + $0x150] sm:$0xf]
        %v425 = vld [vmem:[%s303 + $0x160] sm:$0xf]
        %v426 = vld [vmem:[%s303 + $0x170] sm:$0xf]
        %v427 = vld [vmem:[%s303 + $0x180] sm:$0xf]
        %v428 = vld [vmem:[%s303 + $0x190] sm:$0xf]
        %v429 = vld [vmem:[%s303 + $0x1a0] sm:$0xf]
        %v430 = vld [vmem:[%s303 + $0x1b0] sm:$0xf]
        %v431 = vld [vmem:[%s303 + $0x1c0] sm:$0xf]
        %v432 = vld [vmem:[%s303 + $0x1d0] sm:$0xf]
        %v433 = vld [vmem:[%s303 + $0x1e0] sm:$0xf]
        %v434 = vld [vmem:[%s303 + $0x1f0] sm:$0xf]
        %v436 = vperm.slane %v400, 0
        %v470 = vunpack.c.l.b16 %v403
        %v471 = vunpack.c.l.b16 %v404
        %v472 = vunpack.c.l.b16 %v405
        %v473 = vunpack.c.l.b16 %v406
        %v474 = vunpack.c.l.b16 %v407
        %v475 = vunpack.c.l.b16 %v408
        %v476 = vunpack.c.l.b16 %v409
        %v477 = vunpack.c.l.b16 %v410
        %v478 = vunpack.c.l.b16 %v411
        %v479 = vunpack.c.l.b16 %v412
        %v480 = vunpack.c.l.b16 %v413
        %v481 = vunpack.c.l.b16 %v414
        %v482 = vunpack.c.l.b16 %v415
        %v483 = vunpack.c.l.b16 %v416
        %v484 = vunpack.c.l.b16 %v417
        %v485 = vunpack.c.l.b16 %v418
        %v486 = vunpack.c.l.b16 %v419
        %v487 = vunpack.c.l.b16 %v420
        %v488 = vunpack.c.l.b16 %v421
        %v489 = vunpack.c.l.b16 %v422
        %v490 = vunpack.c.l.b16 %v423
        %v491 = vunpack.c.l.b16 %v424
        %v492 = vunpack.c.l.b16 %v425
        %v493 = vunpack.c.l.b16 %v426
        %v494 = vunpack.c.l.b16 %v427
        %v495 = vunpack.c.l.b16 %v428
        %v496 = vunpack.c.l.b16 %v429
        %v497 = vunpack.c.l.b16 %v430
        %v498 = vunpack.c.l.b16 %v431
        %v499 = vunpack.c.l.b16 %v432
        %v500 = vunpack.c.l.b16 %v433
        %v501 = vunpack.c.l.b16 %v434
        %v502 = vpack.c.b16 %v471, %v470
        %v503 = vpack.c.b16 %v473, %v472
        %v504 = vpack.c.b16 %v475, %v474
        %v505 = vpack.c.b16 %v477, %v476
        %v506 = vpack.c.b16 %v479, %v478
        %v507 = vpack.c.b16 %v481, %v480
        %v508 = vpack.c.b16 %v483, %v482
        %v509 = vpack.c.b16 %v485, %v484
        %v510 = vpack.c.b16 %v487, %v486
        %v511 = vpack.c.b16 %v489, %v488
        %v512 = vpack.c.b16 %v491, %v490
        %v513 = vpack.c.b16 %v493, %v492
        %v514 = vpack.c.b16 %v495, %v494
        %v515 = vpack.c.b16 %v497, %v496
        %v516 = vpack.c.b16 %v499, %v498
        %v517 = vpack.c.b16 %v501, %v500
        %v550 = vunpack.c.l.b16 %v352
        %v551 = vunpack.c.l.b16 %v353
        %v552 = vunpack.c.l.b16 %v354
        %v553 = vunpack.c.l.b16 %v355
        %v554 = vunpack.c.l.b16 %v356
        %v555 = vunpack.c.l.b16 %v357
        %v556 = vunpack.c.l.b16 %v358
        %v557 = vunpack.c.l.b16 %v359
        %v558 = vunpack.c.l.b16 %v360
        %v559 = vunpack.c.l.b16 %v361
        %v560 = vunpack.c.l.b16 %v362
        %v561 = vunpack.c.l.b16 %v363
        %v562 = vunpack.c.l.b16 %v364
        %v563 = vunpack.c.l.b16 %v365
        %v564 = vunpack.c.l.b16 %v366
        %v565 = vunpack.c.l.b16 %v367
        %v566 = vpack.c.b16 %v551, %v550
        %v567 = vpack.c.b16 %v553, %v552
        %v568 = vpack.c.b16 %v555, %v554
        %v569 = vpack.c.b16 %v557, %v556
        %v570 = vpack.c.b16 %v559, %v558
        %v571 = vpack.c.b16 %v561, %v560
        %v572 = vpack.c.b16 %v563, %v562
        %v573 = vpack.c.b16 %v565, %v564
        %582 = vmatpush.bf16.msra.mxu0 %v573
        %583 = vmatpush.bf16.msra.mxu0 %v572
        %584 = vmatpush.bf16.msra.mxu0 %v571
        %585 = vmatpush.bf16.msra.mxu0 %v570
        %586 = vmatpush.bf16.msra.mxu0 %v569
        %587 = vmatpush.bf16.msra.mxu0 %v568
        %588 = vmatpush.bf16.msra.mxu0 %v567
        %589 = vmatpush.bf16.msra.mxu0 %v566
        %590 = vmatmul.bf16.gmra.mxu0 %v502
        %v591 = vpop.f32.mrf.mxu0
        %v592 = vadd.f32 %v436, %v591
        %v593 = vpop.f32.mrf.mxu0
        %v594 = vadd.f32 %v436, %v593
        %595 = vmatmul.bf16.gmra.mxu0 %v503
        %v596 = vpop.f32.mrf.mxu0
        %v597 = vadd.f32 %v436, %v596
        %v598 = vpop.f32.mrf.mxu0
        %v599 = vadd.f32 %v436, %v598
        %600 = vmatmul.bf16.gmra.mxu0 %v504
        %v601 = vpop.f32.mrf.mxu0
        %v602 = vadd.f32 %v436, %v601
        %v603 = vpop.f32.mrf.mxu0
        %v604 = vadd.f32 %v436, %v603
        %605 = vmatmul.bf16.gmra.mxu0 %v505
        %v606 = vpop.f32.mrf.mxu0
        %v607 = vadd.f32 %v436, %v606
        %v608 = vpop.f32.mrf.mxu0
        %v609 = vadd.f32 %v436, %v608
        %610 = vmatmul.bf16.gmra.mxu0 %v506
        %v611 = vpop.f32.mrf.mxu0
        %v612 = vadd.f32 %v436, %v611
        %v613 = vpop.f32.mrf.mxu0
        %v614 = vadd.f32 %v436, %v613
        %615 = vmatmul.bf16.gmra.mxu0 %v507
        %v616 = vpop.f32.mrf.mxu0
        %v617 = vadd.f32 %v436, %v616
        %v618 = vpop.f32.mrf.mxu0
        %v619 = vadd.f32 %v436, %v618
        %620 = vmatmul.bf16.gmra.mxu0 %v508
        %v621 = vpop.f32.mrf.mxu0
        %v622 = vadd.f32 %v436, %v621
        %v623 = vpop.f32.mrf.mxu0
        %v624 = vadd.f32 %v436, %v623
        %625 = vmatmul.bf16.gmra.mxu0 %v509
        %v626 = vpop.f32.mrf.mxu0
        %v627 = vadd.f32 %v436, %v626
        %v628 = vpop.f32.mrf.mxu0
        %v629 = vadd.f32 %v436, %v628
        %630 = vmatmul.bf16.gmra.mxu0 %v510
        %v631 = vpop.f32.mrf.mxu0
        %v632 = vadd.f32 %v436, %v631
        %v633 = vpop.f32.mrf.mxu0
        %v634 = vadd.f32 %v436, %v633
        %635 = vmatmul.bf16.gmra.mxu0 %v511
        %v636 = vpop.f32.mrf.mxu0
        %v637 = vadd.f32 %v436, %v636
        %v638 = vpop.f32.mrf.mxu0
        %v639 = vadd.f32 %v436, %v638
        %640 = vmatmul.bf16.gmra.mxu0 %v512
        %v641 = vpop.f32.mrf.mxu0
        %v642 = vadd.f32 %v436, %v641
        %v643 = vpop.f32.mrf.mxu0
        %v644 = vadd.f32 %v436, %v643
        %645 = vmatmul.bf16.gmra.mxu0 %v513
        %v646 = vpop.f32.mrf.mxu0
        %v647 = vadd.f32 %v436, %v646
        %v648 = vpop.f32.mrf.mxu0
        %v649 = vadd.f32 %v436, %v648
        %650 = vmatmul.bf16.gmra.mxu0 %v514
        %v651 = vpop.f32.mrf.mxu0
        %v652 = vadd.f32 %v436, %v651
        %v653 = vpop.f32.mrf.mxu0
        %v654 = vadd.f32 %v436, %v653
        %655 = vmatmul.bf16.gmra.mxu0 %v515
        %v656 = vpop.f32.mrf.mxu0
        %v657 = vadd.f32 %v436, %v656
        %v658 = vpop.f32.mrf.mxu0
        %v659 = vadd.f32 %v436, %v658
        %660 = vmatmul.bf16.gmra.mxu0 %v516
        %v661 = vpop.f32.mrf.mxu0
        %v662 = vadd.f32 %v436, %v661
        %v663 = vpop.f32.mrf.mxu0
        %v664 = vadd.f32 %v436, %v663
        %665 = vmatmul.bf16.gmra.mxu0 %v517
        %v666 = vpop.f32.mrf.mxu0
        %v667 = vadd.f32 %v436, %v666
        %v668 = vpop.f32.mrf.mxu0
        %v669 = vadd.f32 %v436, %v668
        %670 = vdwg.mxu0
        %v671 = vmax.f32 %v592, 0.0
        %v672 = vmax.f32 %v594, 0.0
        %v673 = vmax.f32 %v597, 0.0
        %v674 = vmax.f32 %v599, 0.0
        %v675 = vmax.f32 %v602, 0.0
        %v676 = vmax.f32 %v604, 0.0
        %v677 = vmax.f32 %v607, 0.0
        %v678 = vmax.f32 %v609, 0.0
        %v679 = vmax.f32 %v612, 0.0
        %v680 = vmax.f32 %v614, 0.0
        %v681 = vmax.f32 %v617, 0.0
        %v682 = vmax.f32 %v619, 0.0
        %v683 = vmax.f32 %v622, 0.0
        %v684 = vmax.f32 %v624, 0.0
        %v685 = vmax.f32 %v627, 0.0
        %v686 = vmax.f32 %v629, 0.0
        %v687 = vmax.f32 %v632, 0.0
        %v688 = vmax.f32 %v634, 0.0
        %v689 = vmax.f32 %v637, 0.0
        %v690 = vmax.f32 %v639, 0.0
        %v691 = vmax.f32 %v642, 0.0
        %v692 = vmax.f32 %v644, 0.0
        %v693 = vmax.f32 %v647, 0.0
        %v694 = vmax.f32 %v649, 0.0
        %v695 = vmax.f32 %v652, 0.0
        %v696 = vmax.f32 %v654, 0.0
        %v697 = vmax.f32 %v657, 0.0
        %v698 = vmax.f32 %v659, 0.0
        %v699 = vmax.f32 %v662, 0.0
        %v700 = vmax.f32 %v664, 0.0
        %v701 = vmax.f32 %v667, 0.0
        %v702 = vmax.f32 %v669, 0.0
        %v703 = vpack.c.bf16 %v672, %v671
        %v704 = vpack.c.bf16 %v674, %v673
        %v705 = vpack.c.bf16 %v676, %v675
        %v706 = vpack.c.bf16 %v678, %v677
        %v707 = vpack.c.bf16 %v680, %v679
        %v708 = vpack.c.bf16 %v682, %v681
        %v709 = vpack.c.bf16 %v684, %v683
        %v710 = vpack.c.bf16 %v686, %v685
        %v711 = vpack.c.bf16 %v688, %v687
        %v712 = vpack.c.bf16 %v690, %v689
        %v713 = vpack.c.bf16 %v692, %v691
        %v714 = vpack.c.bf16 %v694, %v693
        %v715 = vpack.c.bf16 %v696, %v695
        %v716 = vpack.c.bf16 %v698, %v697
        %v717 = vpack.c.bf16 %v700, %v699
        %v718 = vpack.c.bf16 %v702, %v701
        %v720 = vperm.slane %v401, 0
        %v738 = vunpack.c.l.b16 %v368
        %v739 = vunpack.c.l.b16 %v369
        %v740 = vunpack.c.l.b16 %v370
        %v741 = vunpack.c.l.b16 %v371
        %v742 = vunpack.c.l.b16 %v372
        %v743 = vunpack.c.l.b16 %v373
        %v744 = vunpack.c.l.b16 %v374
        %v745 = vunpack.c.l.b16 %v375
        %v746 = vunpack.c.l.b16 %v376
        %v747 = vunpack.c.l.b16 %v377
        %v748 = vunpack.c.l.b16 %v378
        %v749 = vunpack.c.l.b16 %v379
        %v750 = vunpack.c.l.b16 %v380
        %v751 = vunpack.c.l.b16 %v381
        %v752 = vunpack.c.l.b16 %v382
        %v753 = vunpack.c.l.b16 %v383
        %v754 = vpack.c.b16 %v739, %v738
        %v755 = vpack.c.b16 %v741, %v740
        %v756 = vpack.c.b16 %v743, %v742
        %v757 = vpack.c.b16 %v745, %v744
        %v758 = vpack.c.b16 %v747, %v746
        %v759 = vpack.c.b16 %v749, %v748
        %v760 = vpack.c.b16 %v751, %v750
        %v761 = vpack.c.b16 %v753, %v752
        %770 = vmatpush.bf16.msra.mxu0 %v761
        %771 = vmatpush.bf16.msra.mxu0 %v760
        %772 = vmatpush.bf16.msra.mxu0 %v759
        %773 = vmatpush.bf16.msra.mxu0 %v758
        %774 = vmatpush.bf16.msra.mxu0 %v757
        %775 = vmatpush.bf16.msra.mxu0 %v756
        %776 = vmatpush.bf16.msra.mxu0 %v755
        %777 = vmatpush.bf16.msra.mxu0 %v754
        %778 = vmatmul.bf16.gmra.mxu0 %v703
        %v779 = vpop.f32.mrf.mxu0
        %v780 = vadd.f32 %v720, %v779
        %v781 = vpop.f32.mrf.mxu0
        %v782 = vadd.f32 %v720, %v781
        %783 = vmatmul.bf16.gmra.mxu0 %v704
        %v784 = vpop.f32.mrf.mxu0
        %v785 = vadd.f32 %v720, %v784
        %v786 = vpop.f32.mrf.mxu0
        %v787 = vadd.f32 %v720, %v786
        %788 = vmatmul.bf16.gmra.mxu0 %v705
        %v789 = vpop.f32.mrf.mxu0
        %v790 = vadd.f32 %v720, %v789
        %v791 = vpop.f32.mrf.mxu0
        %v792 = vadd.f32 %v720, %v791
        %793 = vmatmul.bf16.gmra.mxu0 %v706
        %v794 = vpop.f32.mrf.mxu0
        %v795 = vadd.f32 %v720, %v794
        %v796 = vpop.f32.mrf.mxu0
        %v797 = vadd.f32 %v720, %v796
        %798 = vmatmul.bf16.gmra.mxu0 %v707
        %v799 = vpop.f32.mrf.mxu0
        %v800 = vadd.f32 %v720, %v799
        %v801 = vpop.f32.mrf.mxu0
        %v802 = vadd.f32 %v720, %v801
        %803 = vmatmul.bf16.gmra.mxu0 %v708
        %v804 = vpop.f32.mrf.mxu0
        %v805 = vadd.f32 %v720, %v804
        %v806 = vpop.f32.mrf.mxu0
        %v807 = vadd.f32 %v720, %v806
        %808 = vmatmul.bf16.gmra.mxu0 %v709
        %v809 = vpop.f32.mrf.mxu0
        %v810 = vadd.f32 %v720, %v809
        %v811 = vpop.f32.mrf.mxu0
        %v812 = vadd.f32 %v720, %v811
        %813 = vmatmul.bf16.gmra.mxu0 %v710
        %v814 = vpop.f32.mrf.mxu0
        %v815 = vadd.f32 %v720, %v814
        %v816 = vpop.f32.mrf.mxu0
        %v817 = vadd.f32 %v720, %v816
        %818 = vmatmul.bf16.gmra.mxu0 %v711
        %v819 = vpop.f32.mrf.mxu0
        %v820 = vadd.f32 %v720, %v819
        %v821 = vpop.f32.mrf.mxu0
        %v822 = vadd.f32 %v720, %v821
        %823 = vmatmul.bf16.gmra.mxu0 %v712
        %v824 = vpop.f32.mrf.mxu0
        %v825 = vadd.f32 %v720, %v824
        %v826 = vpop.f32.mrf.mxu0
        %v827 = vadd.f32 %v720, %v826
        %828 = vmatmul.bf16.gmra.mxu0 %v713
        %v829 = vpop.f32.mrf.mxu0
        %v830 = vadd.f32 %v720, %v829
        %v831 = vpop.f32.mrf.mxu0
        %v832 = vadd.f32 %v720, %v831
        %833 = vmatmul.bf16.gmra.mxu0 %v714
        %v834 = vpop.f32.mrf.mxu0
        %v835 = vadd.f32 %v720, %v834
        %v836 = vpop.f32.mrf.mxu0
        %v837 = vadd.f32 %v720, %v836
        %838 = vmatmul.bf16.gmra.mxu0 %v715
        %v839 = vpop.f32.mrf.mxu0
        %v840 = vadd.f32 %v720, %v839
        %v841 = vpop.f32.mrf.mxu0
        %v842 = vadd.f32 %v720, %v841
        %843 = vmatmul.bf16.gmra.mxu0 %v716
        %v844 = vpop.f32.mrf.mxu0
        %v845 = vadd.f32 %v720, %v844
        %v846 = vpop.f32.mrf.mxu0
        %v847 = vadd.f32 %v720, %v846
        %848 = vmatmul.bf16.gmra.mxu0 %v717
        %v849 = vpop.f32.mrf.mxu0
        %v850 = vadd.f32 %v720, %v849
        %v851 = vpop.f32.mrf.mxu0
        %v852 = vadd.f32 %v720, %v851
        %853 = vmatmul.bf16.gmra.mxu0 %v718
        %v854 = vpop.f32.mrf.mxu0
        %v855 = vadd.f32 %v720, %v854
        %v856 = vpop.f32.mrf.mxu0
        %v857 = vadd.f32 %v720, %v856
        %858 = vdwg.mxu0
        %v859 = vmax.f32 %v780, 0.0
        %v860 = vmax.f32 %v782, 0.0
        %v861 = vmax.f32 %v785, 0.0
        %v862 = vmax.f32 %v787, 0.0
        %v863 = vmax.f32 %v790, 0.0
        %v864 = vmax.f32 %v792, 0.0
        %v865 = vmax.f32 %v795, 0.0
        %v866 = vmax.f32 %v797, 0.0
        %v867 = vmax.f32 %v800, 0.0
        %v868 = vmax.f32 %v802, 0.0
        %v869 = vmax.f32 %v805, 0.0
        %v870 = vmax.f32 %v807, 0.0
        %v871 = vmax.f32 %v810, 0.0
        %v872 = vmax.f32 %v812, 0.0
        %v873 = vmax.f32 %v815, 0.0
        %v874 = vmax.f32 %v817, 0.0
        %v875 = vmax.f32 %v820, 0.0
        %v876 = vmax.f32 %v822, 0.0
        %v877 = vmax.f32 %v825, 0.0
        %v878 = vmax.f32 %v827, 0.0
        %v879 = vmax.f32 %v830, 0.0
        %v880 = vmax.f32 %v832, 0.0
        %v881 = vmax.f32 %v835, 0.0
        %v882 = vmax.f32 %v837, 0.0
        %v883 = vmax.f32 %v840, 0.0
        %v884 = vmax.f32 %v842, 0.0
        %v885 = vmax.f32 %v845, 0.0
        %v886 = vmax.f32 %v847, 0.0
        %v887 = vmax.f32 %v850, 0.0
        %v888 = vmax.f32 %v852, 0.0
        %v889 = vmax.f32 %v855, 0.0
        %v890 = vmax.f32 %v857, 0.0
        %v891 = vpack.c.bf16 %v860, %v859
        %v892 = vpack.c.bf16 %v862, %v861
        %v893 = vpack.c.bf16 %v864, %v863
        %v894 = vpack.c.bf16 %v866, %v865
        %v895 = vpack.c.bf16 %v868, %v867
        %v896 = vpack.c.bf16 %v870, %v869
        %v897 = vpack.c.bf16 %v872, %v871
        %v898 = vpack.c.bf16 %v874, %v873
        %v899 = vpack.c.bf16 %v876, %v875
        %v900 = vpack.c.bf16 %v878, %v877
        %v901 = vpack.c.bf16 %v880, %v879
        %v902 = vpack.c.bf16 %v882, %v881
        %v903 = vpack.c.bf16 %v884, %v883
        %v904 = vpack.c.bf16 %v886, %v885
        %v905 = vpack.c.bf16 %v888, %v887
        %v906 = vpack.c.bf16 %v890, %v889
        %v908 = vperm.slane %v402, 0
        %v926 = vunpack.c.l.b16 %v384
        %v927 = vunpack.c.l.b16 %v385
        %v928 = vunpack.c.l.b16 %v386
        %v929 = vunpack.c.l.b16 %v387
        %v930 = vunpack.c.l.b16 %v388
        %v931 = vunpack.c.l.b16 %v389
        %v932 = vunpack.c.l.b16 %v390
        %v933 = vunpack.c.l.b16 %v391
        %v934 = vunpack.c.l.b16 %v392
        %v935 = vunpack.c.l.b16 %v393
        %v936 = vunpack.c.l.b16 %v394
        %v937 = vunpack.c.l.b16 %v395
        %v938 = vunpack.c.l.b16 %v396
        %v939 = vunpack.c.l.b16 %v397
        %v940 = vunpack.c.l.b16 %v398
        %v941 = vunpack.c.l.b16 %v399
        %v942 = vpack.c.b16 %v927, %v926
        %v943 = vpack.c.b16 %v929, %v928
        %v944 = vpack.c.b16 %v931, %v930
        %v945 = vpack.c.b16 %v933, %v932
        %v946 = vpack.c.b16 %v935, %v934
        %v947 = vpack.c.b16 %v937, %v936
        %v948 = vpack.c.b16 %v939, %v938
        %v949 = vpack.c.b16 %v941, %v940
        %958 = vmatpush.bf16.msra.mxu0 %v949
        %959 = vmatpush.bf16.msra.mxu0 %v948
        %960 = vmatpush.bf16.msra.mxu0 %v947
        %961 = vmatpush.bf16.msra.mxu0 %v946
        %962 = vmatpush.bf16.msra.mxu0 %v945
        %963 = vmatpush.bf16.msra.mxu0 %v944
        %964 = vmatpush.bf16.msra.mxu0 %v943
        %965 = vmatpush.bf16.msra.mxu0 %v942
        %966 = vmatmul.bf16.gmra.mxu0 %v891
        %v967 = vpop.f32.mrf.mxu0
        %v968 = vadd.f32 %v908, %v967
        %v969 = vpop.f32.mrf.mxu0
        %v970 = vadd.f32 %v908, %v969
        %971 = vmatmul.bf16.gmra.mxu0 %v892
        %v972 = vpop.f32.mrf.mxu0
        %v973 = vadd.f32 %v908, %v972
        %v974 = vpop.f32.mrf.mxu0
        %v975 = vadd.f32 %v908, %v974
        %976 = vmatmul.bf16.gmra.mxu0 %v893
        %v977 = vpop.f32.mrf.mxu0
        %v978 = vadd.f32 %v908, %v977
        %v979 = vpop.f32.mrf.mxu0
        %v980 = vadd.f32 %v908, %v979
        %981 = vmatmul.bf16.gmra.mxu0 %v894
        %v982 = vpop.f32.mrf.mxu0
        %v983 = vadd.f32 %v908, %v982
        %v984 = vpop.f32.mrf.mxu0
        %v985 = vadd.f32 %v908, %v984
        %986 = vmatmul.bf16.gmra.mxu0 %v895
        %v987 = vpop.f32.mrf.mxu0
        %v988 = vadd.f32 %v908, %v987
        %v989 = vpop.f32.mrf.mxu0
        %v990 = vadd.f32 %v908, %v989
        %991 = vmatmul.bf16.gmra.mxu0 %v896
        %v992 = vpop.f32.mrf.mxu0
        %v993 = vadd.f32 %v908, %v992
        %v994 = vpop.f32.mrf.mxu0
        %v995 = vadd.f32 %v908, %v994
        %996 = vmatmul.bf16.gmra.mxu0 %v897
        %v997 = vpop.f32.mrf.mxu0
        %v998 = vadd.f32 %v908, %v997
        %v999 = vpop.f32.mrf.mxu0
        %v1000 = vadd.f32 %v908, %v999
        %1001 = vmatmul.bf16.gmra.mxu0 %v898
        %v1002 = vpop.f32.mrf.mxu0
        %v1003 = vadd.f32 %v908, %v1002
        %v1004 = vpop.f32.mrf.mxu0
        %v1005 = vadd.f32 %v908, %v1004
        %1006 = vmatmul.bf16.gmra.mxu0 %v899
        %v1007 = vpop.f32.mrf.mxu0
        %v1008 = vadd.f32 %v908, %v1007
        %v1009 = vpop.f32.mrf.mxu0
        %v1010 = vadd.f32 %v908, %v1009
        %1011 = vmatmul.bf16.gmra.mxu0 %v900
        %v1012 = vpop.f32.mrf.mxu0
        %v1013 = vadd.f32 %v908, %v1012
        %v1014 = vpop.f32.mrf.mxu0
        %v1015 = vadd.f32 %v908, %v1014
        %1016 = vmatmul.bf16.gmra.mxu0 %v901
        %v1017 = vpop.f32.mrf.mxu0
        %v1018 = vadd.f32 %v908, %v1017
        %v1019 = vpop.f32.mrf.mxu0
        %v1020 = vadd.f32 %v908, %v1019
        %1021 = vmatmul.bf16.gmra.mxu0 %v902
        %v1022 = vpop.f32.mrf.mxu0
        %v1023 = vadd.f32 %v908, %v1022
        %v1024 = vpop.f32.mrf.mxu0
        %v1025 = vadd.f32 %v908, %v1024
        %1026 = vmatmul.bf16.gmra.mxu0 %v903
        %v1027 = vpop.f32.mrf.mxu0
        %v1028 = vadd.f32 %v908, %v1027
        %v1029 = vpop.f32.mrf.mxu0
        %v1030 = vadd.f32 %v908, %v1029
        %1031 = vmatmul.bf16.gmra.mxu0 %v904
        %v1032 = vpop.f32.mrf.mxu0
        %v1033 = vadd.f32 %v908, %v1032
        %v1034 = vpop.f32.mrf.mxu0
        %v1035 = vadd.f32 %v908, %v1034
        %1036 = vmatmul.bf16.gmra.mxu0 %v905
        %v1037 = vpop.f32.mrf.mxu0
        %v1038 = vadd.f32 %v908, %v1037
        %v1039 = vpop.f32.mrf.mxu0
        %v1040 = vadd.f32 %v908, %v1039
        %1041 = vmatmul.bf16.gmra.mxu0 %v906
        %v1042 = vpop.f32.mrf.mxu0
        %v1043 = vadd.f32 %v908, %v1042
        %v1044 = vpop.f32.mrf.mxu0
        %v1045 = vadd.f32 %v908, %v1044
        %1046 = vdwg.mxu0
        %v1047 = vmax.f32 %v968, 0.0
        %v1048 = vmax.f32 %v970, 0.0
        %v1049 = vmax.f32 %v973, 0.0
        %v1050 = vmax.f32 %v975, 0.0
        %v1051 = vmax.f32 %v978, 0.0
        %v1052 = vmax.f32 %v980, 0.0
        %v1053 = vmax.f32 %v983, 0.0
        %v1054 = vmax.f32 %v985, 0.0
        %v1055 = vmax.f32 %v988, 0.0
        %v1056 = vmax.f32 %v990, 0.0
        %v1057 = vmax.f32 %v993, 0.0
        %v1058 = vmax.f32 %v995, 0.0
        %v1059 = vmax.f32 %v998, 0.0
        %v1060 = vmax.f32 %v1000, 0.0
        %v1061 = vmax.f32 %v1003, 0.0
        %v1062 = vmax.f32 %v1005, 0.0
        %v1063 = vmax.f32 %v1008, 0.0
        %v1064 = vmax.f32 %v1010, 0.0
        %v1065 = vmax.f32 %v1013, 0.0
        %v1066 = vmax.f32 %v1015, 0.0
        %v1067 = vmax.f32 %v1018, 0.0
        %v1068 = vmax.f32 %v1020, 0.0
        %v1069 = vmax.f32 %v1023, 0.0
        %v1070 = vmax.f32 %v1025, 0.0
        %v1071 = vmax.f32 %v1028, 0.0
        %v1072 = vmax.f32 %v1030, 0.0
        %v1073 = vmax.f32 %v1033, 0.0
        %v1074 = vmax.f32 %v1035, 0.0
        %v1075 = vmax.f32 %v1038, 0.0
        %v1076 = vmax.f32 %v1040, 0.0
        %v1077 = vmax.f32 %v1043, 0.0
        %v1078 = vmax.f32 %v1045, 0.0
        %v1079 = vrot.slane %v1047, 4
        %v1080 = vmax.f32 %v1047, %v1079
        %v1081 = vrot.slane %v1080, 2
        %v1082 = vmax.f32 %v1080, %v1081
        %v1083 = vrot.slane %v1082, 1
        %v1084 = vmax.f32 %v1082, %v1083
        %v1085 = vrot.slane %v1048, 4
        %v1086 = vmax.f32 %v1048, %v1085
        %v1087 = vrot.slane %v1086, 2
        %v1088 = vmax.f32 %v1086, %v1087
        %v1089 = vrot.slane %v1088, 1
        %v1090 = vmax.f32 %v1088, %v1089
        %v1091 = vrot.slane %v1049, 4
        %v1092 = vmax.f32 %v1049, %v1091
        %v1093 = vrot.slane %v1092, 2
        %v1094 = vmax.f32 %v1092, %v1093
        %v1095 = vrot.slane %v1094, 1
        %v1096 = vmax.f32 %v1094, %v1095
        %v1097 = vrot.slane %v1050, 4
        %v1098 = vmax.f32 %v1050, %v1097
        %v1099 = vrot.slane %v1098, 2
        %v1100 = vmax.f32 %v1098, %v1099
        %v1101 = vrot.slane %v1100, 1
        %v1102 = vmax.f32 %v1100, %v1101
        %v1103 = vrot.slane %v1051, 4
        %v1104 = vmax.f32 %v1051, %v1103
        %v1105 = vrot.slane %v1104, 2
        %v1106 = vmax.f32 %v1104, %v1105
        %v1107 = vrot.slane %v1106, 1
        %v1108 = vmax.f32 %v1106, %v1107
        %v1109 = vrot.slane %v1052, 4
        %v1110 = vmax.f32 %v1052, %v1109
        %v1111 = vrot.slane %v1110, 2
        %v1112 = vmax.f32 %v1110, %v1111
        %v1113 = vrot.slane %v1112, 1
        %v1114 = vmax.f32 %v1112, %v1113
        %v1115 = vrot.slane %v1053, 4
        %v1116 = vmax.f32 %v1053, %v1115
        %v1117 = vrot.slane %v1116, 2
        %v1118 = vmax.f32 %v1116, %v1117
        %v1119 = vrot.slane %v1118, 1
        %v1120 = vmax.f32 %v1118, %v1119
        %v1121 = vrot.slane %v1054, 4
        %v1122 = vmax.f32 %v1054, %v1121
        %v1123 = vrot.slane %v1122, 2
        %v1124 = vmax.f32 %v1122, %v1123
        %v1125 = vrot.slane %v1124, 1
        %v1126 = vmax.f32 %v1124, %v1125
        %v1127 = vrot.slane %v1055, 4
        %v1128 = vmax.f32 %v1055, %v1127
        %v1129 = vrot.slane %v1128, 2
        %v1130 = vmax.f32 %v1128, %v1129
        %v1131 = vrot.slane %v1130, 1
        %v1132 = vmax.f32 %v1130, %v1131
        %v1133 = vrot.slane %v1056, 4
        %v1134 = vmax.f32 %v1056, %v1133
        %v1135 = vrot.slane %v1134, 2
        %v1136 = vmax.f32 %v1134, %v1135
        %v1137 = vrot.slane %v1136, 1
        %v1138 = vmax.f32 %v1136, %v1137
        %v1139 = vrot.slane %v1057, 4
        %v1140 = vmax.f32 %v1057, %v1139
        %v1141 = vrot.slane %v1140, 2
        %v1142 = vmax.f32 %v1140, %v1141
        %v1143 = vrot.slane %v1142, 1
        %v1144 = vmax.f32 %v1142, %v1143
        %v1145 = vrot.slane %v1058, 4
        %v1146 = vmax.f32 %v1058, %v1145
        %v1147 = vrot.slane %v1146, 2
        %v1148 = vmax.f32 %v1146, %v1147
        %v1149 = vrot.slane %v1148, 1
        %v1150 = vmax.f32 %v1148, %v1149
        %v1151 = vrot.slane %v1059, 4
        %v1152 = vmax.f32 %v1059, %v1151
        %v1153 = vrot.slane %v1152, 2
        %v1154 = vmax.f32 %v1152, %v1153
        %v1155 = vrot.slane %v1154, 1
        %v1156 = vmax.f32 %v1154, %v1155
        %v1157 = vrot.slane %v1060, 4
        %v1158 = vmax.f32 %v1060, %v1157
        %v1159 = vrot.slane %v1158, 2
        %v1160 = vmax.f32 %v1158, %v1159
        %v1161 = vrot.slane %v1160, 1
        %v1162 = vmax.f32 %v1160, %v1161
        %v1163 = vrot.slane %v1061, 4
        %v1164 = vmax.f32 %v1061, %v1163
        %v1165 = vrot.slane %v1164, 2
        %v1166 = vmax.f32 %v1164, %v1165
        %v1167 = vrot.slane %v1166, 1
        %v1168 = vmax.f32 %v1166, %v1167
        %v1169 = vrot.slane %v1062, 4
        %v1170 = vmax.f32 %v1062, %v1169
        %v1171 = vrot.slane %v1170, 2
        %v1172 = vmax.f32 %v1170, %v1171
        %v1173 = vrot.slane %v1172, 1
        %v1174 = vmax.f32 %v1172, %v1173
        %v1175 = vrot.slane %v1063, 4
        %v1176 = vmax.f32 %v1063, %v1175
        %v1177 = vrot.slane %v1176, 2
        %v1178 = vmax.f32 %v1176, %v1177
        %v1179 = vrot.slane %v1178, 1
        %v1180 = vmax.f32 %v1178, %v1179
        %v1181 = vrot.slane %v1064, 4
        %v1182 = vmax.f32 %v1064, %v1181
        %v1183 = vrot.slane %v1182, 2
        %v1184 = vmax.f32 %v1182, %v1183
        %v1185 = vrot.slane %v1184, 1
        %v1186 = vmax.f32 %v1184, %v1185
        %v1187 = vrot.slane %v1065, 4
        %v1188 = vmax.f32 %v1065, %v1187
        %v1189 = vrot.slane %v1188, 2
        %v1190 = vmax.f32 %v1188, %v1189
        %v1191 = vrot.slane %v1190, 1
        %v1192 = vmax.f32 %v1190, %v1191
        %v1193 = vrot.slane %v1066, 4
        %v1194 = vmax.f32 %v1066, %v1193
        %v1195 = vrot.slane %v1194, 2
        %v1196 = vmax.f32 %v1194, %v1195
        %v1197 = vrot.slane %v1196, 1
        %v1198 = vmax.f32 %v1196, %v1197
        %v1199 = vrot.slane %v1067, 4
        %v1200 = vmax.f32 %v1067, %v1199
        %v1201 = vrot.slane %v1200, 2
        %v1202 = vmax.f32 %v1200, %v1201
        %v1203 = vrot.slane %v1202, 1
        %v1204 = vmax.f32 %v1202, %v1203
        %v1205 = vrot.slane %v1068, 4
        %v1206 = vmax.f32 %v1068, %v1205
        %v1207 = vrot.slane %v1206, 2
        %v1208 = vmax.f32 %v1206, %v1207
        %v1209 = vrot.slane %v1208, 1
        %v1210 = vmax.f32 %v1208, %v1209
        %v1211 = vrot.slane %v1069, 4
        %v1212 = vmax.f32 %v1069, %v1211
        %v1213 = vrot.slane %v1212, 2
        %v1214 = vmax.f32 %v1212, %v1213
        %v1215 = vrot.slane %v1214, 1
        %v1216 = vmax.f32 %v1214, %v1215
        %v1217 = vrot.slane %v1070, 4
        %v1218 = vmax.f32 %v1070, %v1217
        %v1219 = vrot.slane %v1218, 2
        %v1220 = vmax.f32 %v1218, %v1219
        %v1221 = vrot.slane %v1220, 1
        %v1222 = vmax.f32 %v1220, %v1221
        %v1223 = vrot.slane %v1071, 4
        %v1224 = vmax.f32 %v1071, %v1223
        %v1225 = vrot.slane %v1224, 2
        %v1226 = vmax.f32 %v1224, %v1225
        %v1227 = vrot.slane %v1226, 1
        %v1228 = vmax.f32 %v1226, %v1227
        %v1229 = vrot.slane %v1072, 4
        %v1230 = vmax.f32 %v1072, %v1229
        %v1231 = vrot.slane %v1230, 2
        %v1232 = vmax.f32 %v1230, %v1231
        %v1233 = vrot.slane %v1232, 1
        %v1234 = vmax.f32 %v1232, %v1233
        %v1235 = vrot.slane %v1073, 4
        %v1236 = vmax.f32 %v1073, %v1235
        %v1237 = vrot.slane %v1236, 2
        %v1238 = vmax.f32 %v1236, %v1237
        %v1239 = vrot.slane %v1238, 1
        %v1240 = vmax.f32 %v1238, %v1239
        %v1241 = vrot.slane %v1074, 4
        %v1242 = vmax.f32 %v1074, %v1241
        %v1243 = vrot.slane %v1242, 2
        %v1244 = vmax.f32 %v1242, %v1243
        %v1245 = vrot.slane %v1244, 1
        %v1246 = vmax.f32 %v1244, %v1245
        %v1247 = vrot.slane %v1075, 4
        %v1248 = vmax.f32 %v1075, %v1247
        %v1249 = vrot.slane %v1248, 2
        %v1250 = vmax.f32 %v1248, %v1249
        %v1251 = vrot.slane %v1250, 1
        %v1252 = vmax.f32 %v1250, %v1251
        %v1253 = vrot.slane %v1076, 4
        %v1254 = vmax.f32 %v1076, %v1253
        %v1255 = vrot.slane %v1254, 2
        %v1256 = vmax.f32 %v1254, %v1255
        %v1257 = vrot.slane %v1256, 1
        %v1258 = vmax.f32 %v1256, %v1257
        %v1259 = vrot.slane %v1077, 4
        %v1260 = vmax.f32 %v1077, %v1259
        %v1261 = vrot.slane %v1260, 2
        %v1262 = vmax.f32 %v1260, %v1261
        %v1263 = vrot.slane %v1262, 1
        %v1264 = vmax.f32 %v1262, %v1263
        %v1265 = vrot.slane %v1078, 4
        %v1266 = vmax.f32 %v1078, %v1265
        %v1267 = vrot.slane %v1266, 2
        %v1268 = vmax.f32 %v1266, %v1267
        %v1269 = vrot.slane %v1268, 1
        %v1270 = vmax.f32 %v1268, %v1269
        %v1271 = vmax.f32 %v1084, 0.0
        %v1272 = vmax.f32 %v1090, 0.0
        %v1273 = vmax.f32 %v1096, 0.0
        %v1274 = vmax.f32 %v1102, 0.0
        %v1275 = vmax.f32 %v1108, 0.0
        %v1276 = vmax.f32 %v1114, 0.0
        %v1277 = vmax.f32 %v1120, 0.0
        %v1278 = vmax.f32 %v1126, 0.0
        %v1279 = vmax.f32 %v1132, 0.0
        %v1280 = vmax.f32 %v1138, 0.0
        %v1281 = vmax.f32 %v1144, 0.0
        %v1282 = vmax.f32 %v1150, 0.0
        %v1283 = vmax.f32 %v1156, 0.0
        %v1284 = vmax.f32 %v1162, 0.0
        %v1285 = vmax.f32 %v1168, 0.0
        %v1286 = vmax.f32 %v1174, 0.0
        %v1287 = vmax.f32 %v1180, 0.0
        %v1288 = vmax.f32 %v1186, 0.0
        %v1289 = vmax.f32 %v1192, 0.0
        %v1290 = vmax.f32 %v1198, 0.0
        %v1291 = vmax.f32 %v1204, 0.0
        %v1292 = vmax.f32 %v1210, 0.0
        %v1293 = vmax.f32 %v1216, 0.0
        %v1294 = vmax.f32 %v1222, 0.0
        %v1295 = vmax.f32 %v1228, 0.0
        %v1296 = vmax.f32 %v1234, 0.0
        %v1297 = vmax.f32 %v1240, 0.0
        %v1298 = vmax.f32 %v1246, 0.0
        %v1299 = vmax.f32 %v1252, 0.0
        %v1300 = vmax.f32 %v1258, 0.0
        %v1301 = vmax.f32 %v1264, 0.0
        %v1302 = vmax.f32 %v1270, 0.0
        %v1303 = vld [vmem:[%s303 + $0x4] sm:$0xf]
        %v1304 = vld [vmem:[%s303 + $0x14] sm:$0xf]
        %v1305 = vld [vmem:[%s303 + $0x24] sm:$0xf]
        %v1306 = vld [vmem:[%s303 + $0x34] sm:$0xf]
        %v1307 = vld [vmem:[%s303 + $0x44] sm:$0xf]
        %v1308 = vld [vmem:[%s303 + $0x54] sm:$0xf]
        %v1309 = vld [vmem:[%s303 + $0x64] sm:$0xf]
        %v1310 = vld [vmem:[%s303 + $0x74] sm:$0xf]
        %v1311 = vld [vmem:[%s303 + $0x84] sm:$0xf]
        %v1312 = vld [vmem:[%s303 + $0x94] sm:$0xf]
        %v1313 = vld [vmem:[%s303 + $0xa4] sm:$0xf]
        %v1314 = vld [vmem:[%s303 + $0xb4] sm:$0xf]
        %v1315 = vld [vmem:[%s303 + $0xc4] sm:$0xf]
        %v1316 = vld [vmem:[%s303 + $0xd4] sm:$0xf]
        %v1317 = vld [vmem:[%s303 + $0xe4] sm:$0xf]
        %v1318 = vld [vmem:[%s303 + $0xf4] sm:$0xf]
        %v1319 = vld [vmem:[%s303 + $0x104] sm:$0xf]
        %v1320 = vld [vmem:[%s303 + $0x114] sm:$0xf]
        %v1321 = vld [vmem:[%s303 + $0x124] sm:$0xf]
        %v1322 = vld [vmem:[%s303 + $0x134] sm:$0xf]
        %v1323 = vld [vmem:[%s303 + $0x144] sm:$0xf]
        %v1324 = vld [vmem:[%s303 + $0x154] sm:$0xf]
        %v1325 = vld [vmem:[%s303 + $0x164] sm:$0xf]
        %v1326 = vld [vmem:[%s303 + $0x174] sm:$0xf]
        %v1327 = vld [vmem:[%s303 + $0x184] sm:$0xf]
        %v1328 = vld [vmem:[%s303 + $0x194] sm:$0xf]
        %v1329 = vld [vmem:[%s303 + $0x1a4] sm:$0xf]
        %v1330 = vld [vmem:[%s303 + $0x1b4] sm:$0xf]
        %v1331 = vld [vmem:[%s303 + $0x1c4] sm:$0xf]
        %v1332 = vld [vmem:[%s303 + $0x1d4] sm:$0xf]
        %v1333 = vld [vmem:[%s303 + $0x1e4] sm:$0xf]
        %v1334 = vld [vmem:[%s303 + $0x1f4] sm:$0xf]
        %v1367 = vunpack.c.l.b16 %v1303
        %v1368 = vunpack.c.l.b16 %v1304
        %v1369 = vunpack.c.l.b16 %v1305
        %v1370 = vunpack.c.l.b16 %v1306
        %v1371 = vunpack.c.l.b16 %v1307
        %v1372 = vunpack.c.l.b16 %v1308
        %v1373 = vunpack.c.l.b16 %v1309
        %v1374 = vunpack.c.l.b16 %v1310
        %v1375 = vunpack.c.l.b16 %v1311
        %v1376 = vunpack.c.l.b16 %v1312
        %v1377 = vunpack.c.l.b16 %v1313
        %v1378 = vunpack.c.l.b16 %v1314
        %v1379 = vunpack.c.l.b16 %v1315
        %v1380 = vunpack.c.l.b16 %v1316
        %v1381 = vunpack.c.l.b16 %v1317
        %v1382 = vunpack.c.l.b16 %v1318
        %v1383 = vunpack.c.l.b16 %v1319
        %v1384 = vunpack.c.l.b16 %v1320
        %v1385 = vunpack.c.l.b16 %v1321
        %v1386 = vunpack.c.l.b16 %v1322
        %v1387 = vunpack.c.l.b16 %v1323
        %v1388 = vunpack.c.l.b16 %v1324
        %v1389 = vunpack.c.l.b16 %v1325
        %v1390 = vunpack.c.l.b16 %v1326
        %v1391 = vunpack.c.l.b16 %v1327
        %v1392 = vunpack.c.l.b16 %v1328
        %v1393 = vunpack.c.l.b16 %v1329
        %v1394 = vunpack.c.l.b16 %v1330
        %v1395 = vunpack.c.l.b16 %v1331
        %v1396 = vunpack.c.l.b16 %v1332
        %v1397 = vunpack.c.l.b16 %v1333
        %v1398 = vunpack.c.l.b16 %v1334
        %v1399 = vpack.c.b16 %v1368, %v1367
        %v1400 = vpack.c.b16 %v1370, %v1369
        %v1401 = vpack.c.b16 %v1372, %v1371
        %v1402 = vpack.c.b16 %v1374, %v1373
        %v1403 = vpack.c.b16 %v1376, %v1375
        %v1404 = vpack.c.b16 %v1378, %v1377
        %v1405 = vpack.c.b16 %v1380, %v1379
        %v1406 = vpack.c.b16 %v1382, %v1381
        %v1407 = vpack.c.b16 %v1384, %v1383
        %v1408 = vpack.c.b16 %v1386, %v1385
        %v1409 = vpack.c.b16 %v1388, %v1387
        %v1410 = vpack.c.b16 %v1390, %v1389
        %v1411 = vpack.c.b16 %v1392, %v1391
        %v1412 = vpack.c.b16 %v1394, %v1393
        %v1413 = vpack.c.b16 %v1396, %v1395
        %v1414 = vpack.c.b16 %v1398, %v1397
        %1431 = vmatpush.bf16.msra.mxu0 %v573
        %1432 = vmatpush.bf16.msra.mxu0 %v572
        %1433 = vmatpush.bf16.msra.mxu0 %v571
        %1434 = vmatpush.bf16.msra.mxu0 %v570
        %1435 = vmatpush.bf16.msra.mxu0 %v569
        %1436 = vmatpush.bf16.msra.mxu0 %v568
        %1437 = vmatpush.bf16.msra.mxu0 %v567
        %1438 = vmatpush.bf16.msra.mxu0 %v566
        %1439 = vmatmul.bf16.gmra.mxu0 %v1399
        %v1440 = vpop.f32.mrf.mxu0
        %v1441 = vadd.f32 %v436, %v1440
        %v1442 = vpop.f32.mrf.mxu0
        %v1443 = vadd.f32 %v436, %v1442
        %1444 = vmatmul.bf16.gmra.mxu0 %v1400
        %v1445 = vpop.f32.mrf.mxu0
        %v1446 = vadd.f32 %v436, %v1445
        %v1447 = vpop.f32.mrf.mxu0
        %v1448 = vadd.f32 %v436, %v1447
        %1449 = vmatmul.bf16.gmra.mxu0 %v1401
        %v1450 = vpop.f32.mrf.mxu0
        %v1451 = vadd.f32 %v436, %v1450
        %v1452 = vpop.f32.mrf.mxu0
        %v1453 = vadd.f32 %v436, %v1452
        %1454 = vmatmul.bf16.gmra.mxu0 %v1402
        %v1455 = vpop.f32.mrf.mxu0
        %v1456 = vadd.f32 %v436, %v1455
        %v1457 = vpop.f32.mrf.mxu0
        %v1458 = vadd.f32 %v436, %v1457
        %1459 = vmatmul.bf16.gmra.mxu0 %v1403
        %v1460 = vpop.f32.mrf.mxu0
        %v1461 = vadd.f32 %v436, %v1460
        %v1462 = vpop.f32.mrf.mxu0
        %v1463 = vadd.f32 %v436, %v1462
        %1464 = vmatmul.bf16.gmra.mxu0 %v1404
        %v1465 = vpop.f32.mrf.mxu0
        %v1466 = vadd.f32 %v436, %v1465
        %v1467 = vpop.f32.mrf.mxu0
        %v1468 = vadd.f32 %v436, %v1467
        %1469 = vmatmul.bf16.gmra.mxu0 %v1405
        %v1470 = vpop.f32.mrf.mxu0
        %v1471 = vadd.f32 %v436, %v1470
        %v1472 = vpop.f32.mrf.mxu0
        %v1473 = vadd.f32 %v436, %v1472
        %1474 = vmatmul.bf16.gmra.mxu0 %v1406
        %v1475 = vpop.f32.mrf.mxu0
        %v1476 = vadd.f32 %v436, %v1475
        %v1477 = vpop.f32.mrf.mxu0
        %v1478 = vadd.f32 %v436, %v1477
        %1479 = vmatmul.bf16.gmra.mxu0 %v1407
        %v1480 = vpop.f32.mrf.mxu0
        %v1481 = vadd.f32 %v436, %v1480
        %v1482 = vpop.f32.mrf.mxu0
        %v1483 = vadd.f32 %v436, %v1482
        %1484 = vmatmul.bf16.gmra.mxu0 %v1408
        %v1485 = vpop.f32.mrf.mxu0
        %v1486 = vadd.f32 %v436, %v1485
        %v1487 = vpop.f32.mrf.mxu0
        %v1488 = vadd.f32 %v436, %v1487
        %1489 = vmatmul.bf16.gmra.mxu0 %v1409
        %v1490 = vpop.f32.mrf.mxu0
        %v1491 = vadd.f32 %v436, %v1490
        %v1492 = vpop.f32.mrf.mxu0
        %v1493 = vadd.f32 %v436, %v1492
        %1494 = vmatmul.bf16.gmra.mxu0 %v1410
        %v1495 = vpop.f32.mrf.mxu0
        %v1496 = vadd.f32 %v436, %v1495
        %v1497 = vpop.f32.mrf.mxu0
        %v1498 = vadd.f32 %v436, %v1497
        %1499 = vmatmul.bf16.gmra.mxu0 %v1411
        %v1500 = vpop.f32.mrf.mxu0
        %v1501 = vadd.f32 %v436, %v1500
        %v1502 = vpop.f32.mrf.mxu0
        %v1503 = vadd.f32 %v436, %v1502
        %1504 = vmatmul.bf16.gmra.mxu0 %v1412
        %v1505 = vpop.f32.mrf.mxu0
        %v1506 = vadd.f32 %v436, %v1505
        %v1507 = vpop.f32.mrf.mxu0
        %v1508 = vadd.f32 %v436, %v1507
        %1509 = vmatmul.bf16.gmra.mxu0 %v1413
        %v1510 = vpop.f32.mrf.mxu0
        %v1511 = vadd.f32 %v436, %v1510
        %v1512 = vpop.f32.mrf.mxu0
        %v1513 = vadd.f32 %v436, %v1512
        %1514 = vmatmul.bf16.gmra.mxu0 %v1414
        %v1515 = vpop.f32.mrf.mxu0
        %v1516 = vadd.f32 %v436, %v1515
        %v1517 = vpop.f32.mrf.mxu0
        %v1518 = vadd.f32 %v436, %v1517
        %1519 = vdwg.mxu0
        %v1520 = vmax.f32 %v1441, 0.0
        %v1521 = vmax.f32 %v1443, 0.0
        %v1522 = vmax.f32 %v1446, 0.0
        %v1523 = vmax.f32 %v1448, 0.0
        %v1524 = vmax.f32 %v1451, 0.0
        %v1525 = vmax.f32 %v1453, 0.0
        %v1526 = vmax.f32 %v1456, 0.0
        %v1527 = vmax.f32 %v1458, 0.0
        %v1528 = vmax.f32 %v1461, 0.0
        %v1529 = vmax.f32 %v1463, 0.0
        %v1530 = vmax.f32 %v1466, 0.0
        %v1531 = vmax.f32 %v1468, 0.0
        %v1532 = vmax.f32 %v1471, 0.0
        %v1533 = vmax.f32 %v1473, 0.0
        %v1534 = vmax.f32 %v1476, 0.0
        %v1535 = vmax.f32 %v1478, 0.0
        %v1536 = vmax.f32 %v1481, 0.0
        %v1537 = vmax.f32 %v1483, 0.0
        %v1538 = vmax.f32 %v1486, 0.0
        %v1539 = vmax.f32 %v1488, 0.0
        %v1540 = vmax.f32 %v1491, 0.0
        %v1541 = vmax.f32 %v1493, 0.0
        %v1542 = vmax.f32 %v1496, 0.0
        %v1543 = vmax.f32 %v1498, 0.0
        %v1544 = vmax.f32 %v1501, 0.0
        %v1545 = vmax.f32 %v1503, 0.0
        %v1546 = vmax.f32 %v1506, 0.0
        %v1547 = vmax.f32 %v1508, 0.0
        %v1548 = vmax.f32 %v1511, 0.0
        %v1549 = vmax.f32 %v1513, 0.0
        %v1550 = vmax.f32 %v1516, 0.0
        %v1551 = vmax.f32 %v1518, 0.0
        %v1552 = vpack.c.bf16 %v1521, %v1520
        %v1553 = vpack.c.bf16 %v1523, %v1522
        %v1554 = vpack.c.bf16 %v1525, %v1524
        %v1555 = vpack.c.bf16 %v1527, %v1526
        %v1556 = vpack.c.bf16 %v1529, %v1528
        %v1557 = vpack.c.bf16 %v1531, %v1530
        %v1558 = vpack.c.bf16 %v1533, %v1532
        %v1559 = vpack.c.bf16 %v1535, %v1534
        %v1560 = vpack.c.bf16 %v1537, %v1536
        %v1561 = vpack.c.bf16 %v1539, %v1538
        %v1562 = vpack.c.bf16 %v1541, %v1540
        %v1563 = vpack.c.bf16 %v1543, %v1542
        %v1564 = vpack.c.bf16 %v1545, %v1544
        %v1565 = vpack.c.bf16 %v1547, %v1546
        %v1566 = vpack.c.bf16 %v1549, %v1548
        %v1567 = vpack.c.bf16 %v1551, %v1550
        %1568 = vmatpush.bf16.msra.mxu0 %v761
        %1569 = vmatpush.bf16.msra.mxu0 %v760
        %1570 = vmatpush.bf16.msra.mxu0 %v759
        %1571 = vmatpush.bf16.msra.mxu0 %v758
        %1572 = vmatpush.bf16.msra.mxu0 %v757
        %1573 = vmatpush.bf16.msra.mxu0 %v756
        %1574 = vmatpush.bf16.msra.mxu0 %v755
        %1575 = vmatpush.bf16.msra.mxu0 %v754
        %1576 = vmatmul.bf16.gmra.mxu0 %v1552
        %v1577 = vpop.f32.mrf.mxu0
        %v1578 = vadd.f32 %v720, %v1577
        %v1579 = vpop.f32.mrf.mxu0
        %v1580 = vadd.f32 %v720, %v1579
        %1581 = vmatmul.bf16.gmra.mxu0 %v1553
        %v1582 = vpop.f32.mrf.mxu0
        %v1583 = vadd.f32 %v720, %v1582
        %v1584 = vpop.f32.mrf.mxu0
        %v1585 = vadd.f32 %v720, %v1584
        %1586 = vmatmul.bf16.gmra.mxu0 %v1554
        %v1587 = vpop.f32.mrf.mxu0
        %v1588 = vadd.f32 %v720, %v1587
        %v1589 = vpop.f32.mrf.mxu0
        %v1590 = vadd.f32 %v720, %v1589
        %1591 = vmatmul.bf16.gmra.mxu0 %v1555
        %v1592 = vpop.f32.mrf.mxu0
        %v1593 = vadd.f32 %v720, %v1592
        %v1594 = vpop.f32.mrf.mxu0
        %v1595 = vadd.f32 %v720, %v1594
        %1596 = vmatmul.bf16.gmra.mxu0 %v1556
        %v1597 = vpop.f32.mrf.mxu0
        %v1598 = vadd.f32 %v720, %v1597
        %v1599 = vpop.f32.mrf.mxu0
        %v1600 = vadd.f32 %v720, %v1599
        %1601 = vmatmul.bf16.gmra.mxu0 %v1557
        %v1602 = vpop.f32.mrf.mxu0
        %v1603 = vadd.f32 %v720, %v1602
        %v1604 = vpop.f32.mrf.mxu0
        %v1605 = vadd.f32 %v720, %v1604
        %1606 = vmatmul.bf16.gmra.mxu0 %v1558
        %v1607 = vpop.f32.mrf.mxu0
        %v1608 = vadd.f32 %v720, %v1607
        %v1609 = vpop.f32.mrf.mxu0
        %v1610 = vadd.f32 %v720, %v1609
        %1611 = vmatmul.bf16.gmra.mxu0 %v1559
        %v1612 = vpop.f32.mrf.mxu0
        %v1613 = vadd.f32 %v720, %v1612
        %v1614 = vpop.f32.mrf.mxu0
        %v1615 = vadd.f32 %v720, %v1614
        %1616 = vmatmul.bf16.gmra.mxu0 %v1560
        %v1617 = vpop.f32.mrf.mxu0
        %v1618 = vadd.f32 %v720, %v1617
        %v1619 = vpop.f32.mrf.mxu0
        %v1620 = vadd.f32 %v720, %v1619
        %1621 = vmatmul.bf16.gmra.mxu0 %v1561
        %v1622 = vpop.f32.mrf.mxu0
        %v1623 = vadd.f32 %v720, %v1622
        %v1624 = vpop.f32.mrf.mxu0
        %v1625 = vadd.f32 %v720, %v1624
        %1626 = vmatmul.bf16.gmra.mxu0 %v1562
        %v1627 = vpop.f32.mrf.mxu0
        %v1628 = vadd.f32 %v720, %v1627
        %v1629 = vpop.f32.mrf.mxu0
        %v1630 = vadd.f32 %v720, %v1629
        %1631 = vmatmul.bf16.gmra.mxu0 %v1563
        %v1632 = vpop.f32.mrf.mxu0
        %v1633 = vadd.f32 %v720, %v1632
        %v1634 = vpop.f32.mrf.mxu0
        %v1635 = vadd.f32 %v720, %v1634
        %1636 = vmatmul.bf16.gmra.mxu0 %v1564
        %v1637 = vpop.f32.mrf.mxu0
        %v1638 = vadd.f32 %v720, %v1637
        %v1639 = vpop.f32.mrf.mxu0
        %v1640 = vadd.f32 %v720, %v1639
        %1641 = vmatmul.bf16.gmra.mxu0 %v1565
        %v1642 = vpop.f32.mrf.mxu0
        %v1643 = vadd.f32 %v720, %v1642
        %v1644 = vpop.f32.mrf.mxu0
        %v1645 = vadd.f32 %v720, %v1644
        %1646 = vmatmul.bf16.gmra.mxu0 %v1566
        %v1647 = vpop.f32.mrf.mxu0
        %v1648 = vadd.f32 %v720, %v1647
        %v1649 = vpop.f32.mrf.mxu0
        %v1650 = vadd.f32 %v720, %v1649
        %1651 = vmatmul.bf16.gmra.mxu0 %v1567
        %v1652 = vpop.f32.mrf.mxu0
        %v1653 = vadd.f32 %v720, %v1652
        %v1654 = vpop.f32.mrf.mxu0
        %v1655 = vadd.f32 %v720, %v1654
        %1656 = vdwg.mxu0
        %v1657 = vmax.f32 %v1578, 0.0
        %v1658 = vmax.f32 %v1580, 0.0
        %v1659 = vmax.f32 %v1583, 0.0
        %v1660 = vmax.f32 %v1585, 0.0
        %v1661 = vmax.f32 %v1588, 0.0
        %v1662 = vmax.f32 %v1590, 0.0
        %v1663 = vmax.f32 %v1593, 0.0
        %v1664 = vmax.f32 %v1595, 0.0
        %v1665 = vmax.f32 %v1598, 0.0
        %v1666 = vmax.f32 %v1600, 0.0
        %v1667 = vmax.f32 %v1603, 0.0
        %v1668 = vmax.f32 %v1605, 0.0
        %v1669 = vmax.f32 %v1608, 0.0
        %v1670 = vmax.f32 %v1610, 0.0
        %v1671 = vmax.f32 %v1613, 0.0
        %v1672 = vmax.f32 %v1615, 0.0
        %v1673 = vmax.f32 %v1618, 0.0
        %v1674 = vmax.f32 %v1620, 0.0
        %v1675 = vmax.f32 %v1623, 0.0
        %v1676 = vmax.f32 %v1625, 0.0
        %v1677 = vmax.f32 %v1628, 0.0
        %v1678 = vmax.f32 %v1630, 0.0
        %v1679 = vmax.f32 %v1633, 0.0
        %v1680 = vmax.f32 %v1635, 0.0
        %v1681 = vmax.f32 %v1638, 0.0
        %v1682 = vmax.f32 %v1640, 0.0
        %v1683 = vmax.f32 %v1643, 0.0
        %v1684 = vmax.f32 %v1645, 0.0
        %v1685 = vmax.f32 %v1648, 0.0
        %v1686 = vmax.f32 %v1650, 0.0
        %v1687 = vmax.f32 %v1653, 0.0
        %v1688 = vmax.f32 %v1655, 0.0
        %v1689 = vpack.c.bf16 %v1658, %v1657
        %v1690 = vpack.c.bf16 %v1660, %v1659
        %v1691 = vpack.c.bf16 %v1662, %v1661
        %v1692 = vpack.c.bf16 %v1664, %v1663
        %v1693 = vpack.c.bf16 %v1666, %v1665
        %v1694 = vpack.c.bf16 %v1668, %v1667
        %v1695 = vpack.c.bf16 %v1670, %v1669
        %v1696 = vpack.c.bf16 %v1672, %v1671
        %v1697 = vpack.c.bf16 %v1674, %v1673
        %v1698 = vpack.c.bf16 %v1676, %v1675
        %v1699 = vpack.c.bf16 %v1678, %v1677
        %v1700 = vpack.c.bf16 %v1680, %v1679
        %v1701 = vpack.c.bf16 %v1682, %v1681
        %v1702 = vpack.c.bf16 %v1684, %v1683
        %v1703 = vpack.c.bf16 %v1686, %v1685
        %v1704 = vpack.c.bf16 %v1688, %v1687
        %1705 = vmatpush.bf16.msra.mxu0 %v949
        %1706 = vmatpush.bf16.msra.mxu0 %v948
        %1707 = vmatpush.bf16.msra.mxu0 %v947
        %1708 = vmatpush.bf16.msra.mxu0 %v946
        %1709 = vmatpush.bf16.msra.mxu0 %v945
        %1710 = vmatpush.bf16.msra.mxu0 %v944
        %1711 = vmatpush.bf16.msra.mxu0 %v943
        %1712 = vmatpush.bf16.msra.mxu0 %v942
        %1713 = vmatmul.bf16.gmra.mxu0 %v1689
        %v1714 = vpop.f32.mrf.mxu0
        %v1715 = vadd.f32 %v908, %v1714
        %v1716 = vpop.f32.mrf.mxu0
        %v1717 = vadd.f32 %v908, %v1716
        %1718 = vmatmul.bf16.gmra.mxu0 %v1690
        %v1719 = vpop.f32.mrf.mxu0
        %v1720 = vadd.f32 %v908, %v1719
        %v1721 = vpop.f32.mrf.mxu0
        %v1722 = vadd.f32 %v908, %v1721
        %1723 = vmatmul.bf16.gmra.mxu0 %v1691
        %v1724 = vpop.f32.mrf.mxu0
        %v1725 = vadd.f32 %v908, %v1724
        %v1726 = vpop.f32.mrf.mxu0
        %v1727 = vadd.f32 %v908, %v1726
        %1728 = vmatmul.bf16.gmra.mxu0 %v1692
        %v1729 = vpop.f32.mrf.mxu0
        %v1730 = vadd.f32 %v908, %v1729
        %v1731 = vpop.f32.mrf.mxu0
        %v1732 = vadd.f32 %v908, %v1731
        %1733 = vmatmul.bf16.gmra.mxu0 %v1693
        %v1734 = vpop.f32.mrf.mxu0
        %v1735 = vadd.f32 %v908, %v1734
        %v1736 = vpop.f32.mrf.mxu0
        %v1737 = vadd.f32 %v908, %v1736
        %1738 = vmatmul.bf16.gmra.mxu0 %v1694
        %v1739 = vpop.f32.mrf.mxu0
        %v1740 = vadd.f32 %v908, %v1739
        %v1741 = vpop.f32.mrf.mxu0
        %v1742 = vadd.f32 %v908, %v1741
        %1743 = vmatmul.bf16.gmra.mxu0 %v1695
        %v1744 = vpop.f32.mrf.mxu0
        %v1745 = vadd.f32 %v908, %v1744
        %v1746 = vpop.f32.mrf.mxu0
        %v1747 = vadd.f32 %v908, %v1746
        %1748 = vmatmul.bf16.gmra.mxu0 %v1696
        %v1749 = vpop.f32.mrf.mxu0
        %v1750 = vadd.f32 %v908, %v1749
        %v1751 = vpop.f32.mrf.mxu0
        %v1752 = vadd.f32 %v908, %v1751
        %1753 = vmatmul.bf16.gmra.mxu0 %v1697
        %v1754 = vpop.f32.mrf.mxu0
        %v1755 = vadd.f32 %v908, %v1754
        %v1756 = vpop.f32.mrf.mxu0
        %v1757 = vadd.f32 %v908, %v1756
        %1758 = vmatmul.bf16.gmra.mxu0 %v1698
        %v1759 = vpop.f32.mrf.mxu0
        %v1760 = vadd.f32 %v908, %v1759
        %v1761 = vpop.f32.mrf.mxu0
        %v1762 = vadd.f32 %v908, %v1761
        %1763 = vmatmul.bf16.gmra.mxu0 %v1699
        %v1764 = vpop.f32.mrf.mxu0
        %v1765 = vadd.f32 %v908, %v1764
        %v1766 = vpop.f32.mrf.mxu0
        %v1767 = vadd.f32 %v908, %v1766
        %1768 = vmatmul.bf16.gmra.mxu0 %v1700
        %v1769 = vpop.f32.mrf.mxu0
        %v1770 = vadd.f32 %v908, %v1769
        %v1771 = vpop.f32.mrf.mxu0
        %v1772 = vadd.f32 %v908, %v1771
        %1773 = vmatmul.bf16.gmra.mxu0 %v1701
        %v1774 = vpop.f32.mrf.mxu0
        %v1775 = vadd.f32 %v908, %v1774
        %v1776 = vpop.f32.mrf.mxu0
        %v1777 = vadd.f32 %v908, %v1776
        %1778 = vmatmul.bf16.gmra.mxu0 %v1702
        %v1779 = vpop.f32.mrf.mxu0
        %v1780 = vadd.f32 %v908, %v1779
        %v1781 = vpop.f32.mrf.mxu0
        %v1782 = vadd.f32 %v908, %v1781
        %1783 = vmatmul.bf16.gmra.mxu0 %v1703
        %v1784 = vpop.f32.mrf.mxu0
        %v1785 = vadd.f32 %v908, %v1784
        %v1786 = vpop.f32.mrf.mxu0
        %v1787 = vadd.f32 %v908, %v1786
        %1788 = vmatmul.bf16.gmra.mxu0 %v1704
        %v1789 = vpop.f32.mrf.mxu0
        %v1790 = vadd.f32 %v908, %v1789
        %v1791 = vpop.f32.mrf.mxu0
        %v1792 = vadd.f32 %v908, %v1791
        %1793 = vdwg.mxu0
        %v1794 = vmax.f32 %v1715, 0.0
        %v1795 = vmax.f32 %v1717, 0.0
        %v1796 = vmax.f32 %v1720, 0.0
        %v1797 = vmax.f32 %v1722, 0.0
        %v1798 = vmax.f32 %v1725, 0.0
        %v1799 = vmax.f32 %v1727, 0.0
        %v1800 = vmax.f32 %v1730, 0.0
        %v1801 = vmax.f32 %v1732, 0.0
        %v1802 = vmax.f32 %v1735, 0.0
        %v1803 = vmax.f32 %v1737, 0.0
        %v1804 = vmax.f32 %v1740, 0.0
        %v1805 = vmax.f32 %v1742, 0.0
        %v1806 = vmax.f32 %v1745, 0.0
        %v1807 = vmax.f32 %v1747, 0.0
        %v1808 = vmax.f32 %v1750, 0.0
        %v1809 = vmax.f32 %v1752, 0.0
        %v1810 = vmax.f32 %v1755, 0.0
        %v1811 = vmax.f32 %v1757, 0.0
        %v1812 = vmax.f32 %v1760, 0.0
        %v1813 = vmax.f32 %v1762, 0.0
        %v1814 = vmax.f32 %v1765, 0.0
        %v1815 = vmax.f32 %v1767, 0.0
        %v1816 = vmax.f32 %v1770, 0.0
        %v1817 = vmax.f32 %v1772, 0.0
        %v1818 = vmax.f32 %v1775, 0.0
        %v1819 = vmax.f32 %v1777, 0.0
        %v1820 = vmax.f32 %v1780, 0.0
        %v1821 = vmax.f32 %v1782, 0.0
        %v1822 = vmax.f32 %v1785, 0.0
        %v1823 = vmax.f32 %v1787, 0.0
        %v1824 = vmax.f32 %v1790, 0.0
        %v1825 = vmax.f32 %v1792, 0.0
        %v1826 = vrot.slane %v1794, 4
        %v1827 = vmax.f32 %v1794, %v1826
        %v1828 = vrot.slane %v1827, 2
        %v1829 = vmax.f32 %v1827, %v1828
        %v1830 = vrot.slane %v1829, 1
        %v1831 = vmax.f32 %v1829, %v1830
        %v1832 = vrot.slane %v1795, 4
        %v1833 = vmax.f32 %v1795, %v1832
        %v1834 = vrot.slane %v1833, 2
        %v1835 = vmax.f32 %v1833, %v1834
        %v1836 = vrot.slane %v1835, 1
        %v1837 = vmax.f32 %v1835, %v1836
        %v1838 = vrot.slane %v1796, 4
        %v1839 = vmax.f32 %v1796, %v1838
        %v1840 = vrot.slane %v1839, 2
        %v1841 = vmax.f32 %v1839, %v1840
        %v1842 = vrot.slane %v1841, 1
        %v1843 = vmax.f32 %v1841, %v1842
        %v1844 = vrot.slane %v1797, 4
        %v1845 = vmax.f32 %v1797, %v1844
        %v1846 = vrot.slane %v1845, 2
        %v1847 = vmax.f32 %v1845, %v1846
        %v1848 = vrot.slane %v1847, 1
        %v1849 = vmax.f32 %v1847, %v1848
        %v1850 = vrot.slane %v1798, 4
        %v1851 = vmax.f32 %v1798, %v1850
        %v1852 = vrot.slane %v1851, 2
        %v1853 = vmax.f32 %v1851, %v1852
        %v1854 = vrot.slane %v1853, 1
        %v1855 = vmax.f32 %v1853, %v1854
        %v1856 = vrot.slane %v1799, 4
        %v1857 = vmax.f32 %v1799, %v1856
        %v1858 = vrot.slane %v1857, 2
        %v1859 = vmax.f32 %v1857, %v1858
        %v1860 = vrot.slane %v1859, 1
        %v1861 = vmax.f32 %v1859, %v1860
        %v1862 = vrot.slane %v1800, 4
        %v1863 = vmax.f32 %v1800, %v1862
        %v1864 = vrot.slane %v1863, 2
        %v1865 = vmax.f32 %v1863, %v1864
        %v1866 = vrot.slane %v1865, 1
        %v1867 = vmax.f32 %v1865, %v1866
        %v1868 = vrot.slane %v1801, 4
        %v1869 = vmax.f32 %v1801, %v1868
        %v1870 = vrot.slane %v1869, 2
        %v1871 = vmax.f32 %v1869, %v1870
        %v1872 = vrot.slane %v1871, 1
        %v1873 = vmax.f32 %v1871, %v1872
        %v1874 = vrot.slane %v1802, 4
        %v1875 = vmax.f32 %v1802, %v1874
        %v1876 = vrot.slane %v1875, 2
        %v1877 = vmax.f32 %v1875, %v1876
        %v1878 = vrot.slane %v1877, 1
        %v1879 = vmax.f32 %v1877, %v1878
        %v1880 = vrot.slane %v1803, 4
        %v1881 = vmax.f32 %v1803, %v1880
        %v1882 = vrot.slane %v1881, 2
        %v1883 = vmax.f32 %v1881, %v1882
        %v1884 = vrot.slane %v1883, 1
        %v1885 = vmax.f32 %v1883, %v1884
        %v1886 = vrot.slane %v1804, 4
        %v1887 = vmax.f32 %v1804, %v1886
        %v1888 = vrot.slane %v1887, 2
        %v1889 = vmax.f32 %v1887, %v1888
        %v1890 = vrot.slane %v1889, 1
        %v1891 = vmax.f32 %v1889, %v1890
        %v1892 = vrot.slane %v1805, 4
        %v1893 = vmax.f32 %v1805, %v1892
        %v1894 = vrot.slane %v1893, 2
        %v1895 = vmax.f32 %v1893, %v1894
        %v1896 = vrot.slane %v1895, 1
        %v1897 = vmax.f32 %v1895, %v1896
        %v1898 = vrot.slane %v1806, 4
        %v1899 = vmax.f32 %v1806, %v1898
        %v1900 = vrot.slane %v1899, 2
        %v1901 = vmax.f32 %v1899, %v1900
        %v1902 = vrot.slane %v1901, 1
        %v1903 = vmax.f32 %v1901, %v1902
        %v1904 = vrot.slane %v1807, 4
        %v1905 = vmax.f32 %v1807, %v1904
        %v1906 = vrot.slane %v1905, 2
        %v1907 = vmax.f32 %v1905, %v1906
        %v1908 = vrot.slane %v1907, 1
        %v1909 = vmax.f32 %v1907, %v1908
        %v1910 = vrot.slane %v1808, 4
        %v1911 = vmax.f32 %v1808, %v1910
        %v1912 = vrot.slane %v1911, 2
        %v1913 = vmax.f32 %v1911, %v1912
        %v1914 = vrot.slane %v1913, 1
        %v1915 = vmax.f32 %v1913, %v1914
        %v1916 = vrot.slane %v1809, 4
        %v1917 = vmax.f32 %v1809, %v1916
        %v1918 = vrot.slane %v1917, 2
        %v1919 = vmax.f32 %v1917, %v1918
        %v1920 = vrot.slane %v1919, 1
        %v1921 = vmax.f32 %v1919, %v1920
        %v1922 = vrot.slane %v1810, 4
        %v1923 = vmax.f32 %v1810, %v1922
        %v1924 = vrot.slane %v1923, 2
        %v1925 = vmax.f32 %v1923, %v1924
        %v1926 = vrot.slane %v1925, 1
        %v1927 = vmax.f32 %v1925, %v1926
        %v1928 = vrot.slane %v1811, 4
        %v1929 = vmax.f32 %v1811, %v1928
        %v1930 = vrot.slane %v1929, 2
        %v1931 = vmax.f32 %v1929, %v1930
        %v1932 = vrot.slane %v1931, 1
        %v1933 = vmax.f32 %v1931, %v1932
        %v1934 = vrot.slane %v1812, 4
        %v1935 = vmax.f32 %v1812, %v1934
        %v1936 = vrot.slane %v1935, 2
        %v1937 = vmax.f32 %v1935, %v1936
        %v1938 = vrot.slane %v1937, 1
        %v1939 = vmax.f32 %v1937, %v1938
        %v1940 = vrot.slane %v1813, 4
        %v1941 = vmax.f32 %v1813, %v1940
        %v1942 = vrot.slane %v1941, 2
        %v1943 = vmax.f32 %v1941, %v1942
        %v1944 = vrot.slane %v1943, 1
        %v1945 = vmax.f32 %v1943, %v1944
        %v1946 = vrot.slane %v1814, 4
        %v1947 = vmax.f32 %v1814, %v1946
        %v1948 = vrot.slane %v1947, 2
        %v1949 = vmax.f32 %v1947, %v1948
        %v1950 = vrot.slane %v1949, 1
        %v1951 = vmax.f32 %v1949, %v1950
        %v1952 = vrot.slane %v1815, 4
        %v1953 = vmax.f32 %v1815, %v1952
        %v1954 = vrot.slane %v1953, 2
        %v1955 = vmax.f32 %v1953, %v1954
        %v1956 = vrot.slane %v1955, 1
        %v1957 = vmax.f32 %v1955, %v1956
        %v1958 = vrot.slane %v1816, 4
        %v1959 = vmax.f32 %v1816, %v1958
        %v1960 = vrot.slane %v1959, 2
        %v1961 = vmax.f32 %v1959, %v1960
        %v1962 = vrot.slane %v1961, 1
        %v1963 = vmax.f32 %v1961, %v1962
        %v1964 = vrot.slane %v1817, 4
        %v1965 = vmax.f32 %v1817, %v1964
        %v1966 = vrot.slane %v1965, 2
        %v1967 = vmax.f32 %v1965, %v1966
        %v1968 = vrot.slane %v1967, 1
        %v1969 = vmax.f32 %v1967, %v1968
        %v1970 = vrot.slane %v1818, 4
        %v1971 = vmax.f32 %v1818, %v1970
        %v1972 = vrot.slane %v1971, 2
        %v1973 = vmax.f32 %v1971, %v1972
        %v1974 = vrot.slane %v1973, 1
        %v1975 = vmax.f32 %v1973, %v1974
        %v1976 = vrot.slane %v1819, 4
        %v1977 = vmax.f32 %v1819, %v1976
        %v1978 = vrot.slane %v1977, 2
        %v1979 = vmax.f32 %v1977, %v1978
        %v1980 = vrot.slane %v1979, 1
        %v1981 = vmax.f32 %v1979, %v1980
        %v1982 = vrot.slane %v1820, 4
        %v1983 = vmax.f32 %v1820, %v1982
        %v1984 = vrot.slane %v1983, 2
        %v1985 = vmax.f32 %v1983, %v1984
        %v1986 = vrot.slane %v1985, 1
        %v1987 = vmax.f32 %v1985, %v1986
        %v1988 = vrot.slane %v1821, 4
        %v1989 = vmax.f32 %v1821, %v1988
        %v1990 = vrot.slane %v1989, 2
        %v1991 = vmax.f32 %v1989, %v1990
        %v1992 = vrot.slane %v1991, 1
        %v1993 = vmax.f32 %v1991, %v1992
        %v1994 = vrot.slane %v1822, 4
        %v1995 = vmax.f32 %v1822, %v1994
        %v1996 = vrot.slane %v1995, 2
        %v1997 = vmax.f32 %v1995, %v1996
        %v1998 = vrot.slane %v1997, 1
        %v1999 = vmax.f32 %v1997, %v1998
        %v2000 = vrot.slane %v1823, 4
        %v2001 = vmax.f32 %v1823, %v2000
        %v2002 = vrot.slane %v2001, 2
        %v2003 = vmax.f32 %v2001, %v2002
        %v2004 = vrot.slane %v2003, 1
        %v2005 = vmax.f32 %v2003, %v2004
        %v2006 = vrot.slane %v1824, 4
        %v2007 = vmax.f32 %v1824, %v2006
        %v2008 = vrot.slane %v2007, 2
        %v2009 = vmax.f32 %v2007, %v2008
        %v2010 = vrot.slane %v2009, 1
        %v2011 = vmax.f32 %v2009, %v2010
        %v2012 = vrot.slane %v1825, 4
        %v2013 = vmax.f32 %v1825, %v2012
        %v2014 = vrot.slane %v2013, 2
        %v2015 = vmax.f32 %v2013, %v2014
        %v2016 = vrot.slane %v2015, 1
        %v2017 = vmax.f32 %v2015, %v2016
        %v2018 = vmax.f32 %v1271, %v1831
        %v2019 = vmax.f32 %v1272, %v1837
        %v2020 = vmax.f32 %v1273, %v1843
        %v2021 = vmax.f32 %v1274, %v1849
        %v2022 = vmax.f32 %v1275, %v1855
        %v2023 = vmax.f32 %v1276, %v1861
        %v2024 = vmax.f32 %v1277, %v1867
        %v2025 = vmax.f32 %v1278, %v1873
        %v2026 = vmax.f32 %v1279, %v1879
        %v2027 = vmax.f32 %v1280, %v1885
        %v2028 = vmax.f32 %v1281, %v1891
        %v2029 = vmax.f32 %v1282, %v1897
        %v2030 = vmax.f32 %v1283, %v1903
        %v2031 = vmax.f32 %v1284, %v1909
        %v2032 = vmax.f32 %v1285, %v1915
        %v2033 = vmax.f32 %v1286, %v1921
        %v2034 = vmax.f32 %v1287, %v1927
        %v2035 = vmax.f32 %v1288, %v1933
        %v2036 = vmax.f32 %v1289, %v1939
        %v2037 = vmax.f32 %v1290, %v1945
        %v2038 = vmax.f32 %v1291, %v1951
        %v2039 = vmax.f32 %v1292, %v1957
        %v2040 = vmax.f32 %v1293, %v1963
        %v2041 = vmax.f32 %v1294, %v1969
        %v2042 = vmax.f32 %v1295, %v1975
        %v2043 = vmax.f32 %v1296, %v1981
        %v2044 = vmax.f32 %v1297, %v1987
        %v2045 = vmax.f32 %v1298, %v1993
        %v2046 = vmax.f32 %v1299, %v1999
        %v2047 = vmax.f32 %v1300, %v2005
        %v2048 = vmax.f32 %v1301, %v2011
        %v2049 = vmax.f32 %v1302, %v2017
        %v2050 = vld [vmem:[%s303 + $0x8] sm:$0xf]
        %v2051 = vld [vmem:[%s303 + $0x18] sm:$0xf]
        %v2052 = vld [vmem:[%s303 + $0x28] sm:$0xf]
        %v2053 = vld [vmem:[%s303 + $0x38] sm:$0xf]
        %v2054 = vld [vmem:[%s303 + $0x48] sm:$0xf]
        %v2055 = vld [vmem:[%s303 + $0x58] sm:$0xf]
        %v2056 = vld [vmem:[%s303 + $0x68] sm:$0xf]
        %v2057 = vld [vmem:[%s303 + $0x78] sm:$0xf]
        %v2058 = vld [vmem:[%s303 + $0x88] sm:$0xf]
        %v2059 = vld [vmem:[%s303 + $0x98] sm:$0xf]
        %v2060 = vld [vmem:[%s303 + $0xa8] sm:$0xf]
        %v2061 = vld [vmem:[%s303 + $0xb8] sm:$0xf]
        %v2062 = vld [vmem:[%s303 + $0xc8] sm:$0xf]
        %v2063 = vld [vmem:[%s303 + $0xd8] sm:$0xf]
        %v2064 = vld [vmem:[%s303 + $0xe8] sm:$0xf]
        %v2065 = vld [vmem:[%s303 + $0xf8] sm:$0xf]
        %v2066 = vld [vmem:[%s303 + $0x108] sm:$0xf]
        %v2067 = vld [vmem:[%s303 + $0x118] sm:$0xf]
        %v2068 = vld [vmem:[%s303 + $0x128] sm:$0xf]
        %v2069 = vld [vmem:[%s303 + $0x138] sm:$0xf]
        %v2070 = vld [vmem:[%s303 + $0x148] sm:$0xf]
        %v2071 = vld [vmem:[%s303 + $0x158] sm:$0xf]
        %v2072 = vld [vmem:[%s303 + $0x168] sm:$0xf]
        %v2073 = vld [vmem:[%s303 + $0x178] sm:$0xf]
        %v2074 = vld [vmem:[%s303 + $0x188] sm:$0xf]
        %v2075 = vld [vmem:[%s303 + $0x198] sm:$0xf]
        %v2076 = vld [vmem:[%s303 + $0x1a8] sm:$0xf]
        %v2077 = vld [vmem:[%s303 + $0x1b8] sm:$0xf]
        %v2078 = vld [vmem:[%s303 + $0x1c8] sm:$0xf]
        %v2079 = vld [vmem:[%s303 + $0x1d8] sm:$0xf]
        %v2080 = vld [vmem:[%s303 + $0x1e8] sm:$0xf]
        %v2081 = vld [vmem:[%s303 + $0x1f8] sm:$0xf]
        %v2114 = vunpack.c.l.b16 %v2050
        %v2115 = vunpack.c.l.b16 %v2051
        %v2116 = vunpack.c.l.b16 %v2052
        %v2117 = vunpack.c.l.b16 %v2053
        %v2118 = vunpack.c.l.b16 %v2054
        %v2119 = vunpack.c.l.b16 %v2055
        %v2120 = vunpack.c.l.b16 %v2056
        %v2121 = vunpack.c.l.b16 %v2057
        %v2122 = vunpack.c.l.b16 %v2058
        %v2123 = vunpack.c.l.b16 %v2059
        %v2124 = vunpack.c.l.b16 %v2060
        %v2125 = vunpack.c.l.b16 %v2061
        %v2126 = vunpack.c.l.b16 %v2062
        %v2127 = vunpack.c.l.b16 %v2063
        %v2128 = vunpack.c.l.b16 %v2064
        %v2129 = vunpack.c.l.b16 %v2065
        %v2130 = vunpack.c.l.b16 %v2066
        %v2131 = vunpack.c.l.b16 %v2067
        %v2132 = vunpack.c.l.b16 %v2068
        %v2133 = vunpack.c.l.b16 %v2069
        %v2134 = vunpack.c.l.b16 %v2070
        %v2135 = vunpack.c.l.b16 %v2071
        %v2136 = vunpack.c.l.b16 %v2072
        %v2137 = vunpack.c.l.b16 %v2073
        %v2138 = vunpack.c.l.b16 %v2074
        %v2139 = vunpack.c.l.b16 %v2075
        %v2140 = vunpack.c.l.b16 %v2076
        %v2141 = vunpack.c.l.b16 %v2077
        %v2142 = vunpack.c.l.b16 %v2078
        %v2143 = vunpack.c.l.b16 %v2079
        %v2144 = vunpack.c.l.b16 %v2080
        %v2145 = vunpack.c.l.b16 %v2081
        %v2146 = vpack.c.b16 %v2115, %v2114
        %v2147 = vpack.c.b16 %v2117, %v2116
        %v2148 = vpack.c.b16 %v2119, %v2118
        %v2149 = vpack.c.b16 %v2121, %v2120
        %v2150 = vpack.c.b16 %v2123, %v2122
        %v2151 = vpack.c.b16 %v2125, %v2124
        %v2152 = vpack.c.b16 %v2127, %v2126
        %v2153 = vpack.c.b16 %v2129, %v2128
        %v2154 = vpack.c.b16 %v2131, %v2130
        %v2155 = vpack.c.b16 %v2133, %v2132
        %v2156 = vpack.c.b16 %v2135, %v2134
        %v2157 = vpack.c.b16 %v2137, %v2136
        %v2158 = vpack.c.b16 %v2139, %v2138
        %v2159 = vpack.c.b16 %v2141, %v2140
        %v2160 = vpack.c.b16 %v2143, %v2142
        %v2161 = vpack.c.b16 %v2145, %v2144
        %2178 = vmatpush.bf16.msra.mxu0 %v573
        %2179 = vmatpush.bf16.msra.mxu0 %v572
        %2180 = vmatpush.bf16.msra.mxu0 %v571
        %2181 = vmatpush.bf16.msra.mxu0 %v570
        %2182 = vmatpush.bf16.msra.mxu0 %v569
        %2183 = vmatpush.bf16.msra.mxu0 %v568
        %2184 = vmatpush.bf16.msra.mxu0 %v567
        %2185 = vmatpush.bf16.msra.mxu0 %v566
        %2186 = vmatmul.bf16.gmra.mxu0 %v2146
        %v2187 = vpop.f32.mrf.mxu0
        %v2188 = vadd.f32 %v436, %v2187
        %v2189 = vpop.f32.mrf.mxu0
        %v2190 = vadd.f32 %v436, %v2189
        %2191 = vmatmul.bf16.gmra.mxu0 %v2147
        %v2192 = vpop.f32.mrf.mxu0
        %v2193 = vadd.f32 %v436, %v2192
        %v2194 = vpop.f32.mrf.mxu0
        %v2195 = vadd.f32 %v436, %v2194
        %2196 = vmatmul.bf16.gmra.mxu0 %v2148
        %v2197 = vpop.f32.mrf.mxu0
        %v2198 = vadd.f32 %v436, %v2197
        %v2199 = vpop.f32.mrf.mxu0
        %v2200 = vadd.f32 %v436, %v2199
        %2201 = vmatmul.bf16.gmra.mxu0 %v2149
        %v2202 = vpop.f32.mrf.mxu0
        %v2203 = vadd.f32 %v436, %v2202
        %v2204 = vpop.f32.mrf.mxu0
        %v2205 = vadd.f32 %v436, %v2204
        %2206 = vmatmul.bf16.gmra.mxu0 %v2150
        %v2207 = vpop.f32.mrf.mxu0
        %v2208 = vadd.f32 %v436, %v2207
        %v2209 = vpop.f32.mrf.mxu0
        %v2210 = vadd.f32 %v436, %v2209
        %2211 = vmatmul.bf16.gmra.mxu0 %v2151
        %v2212 = vpop.f32.mrf.mxu0
        %v2213 = vadd.f32 %v436, %v2212
        %v2214 = vpop.f32.mrf.mxu0
        %v2215 = vadd.f32 %v436, %v2214
        %2216 = vmatmul.bf16.gmra.mxu0 %v2152
        %v2217 = vpop.f32.mrf.mxu0
        %v2218 = vadd.f32 %v436, %v2217
        %v2219 = vpop.f32.mrf.mxu0
        %v2220 = vadd.f32 %v436, %v2219
        %2221 = vmatmul.bf16.gmra.mxu0 %v2153
        %v2222 = vpop.f32.mrf.mxu0
        %v2223 = vadd.f32 %v436, %v2222
        %v2224 = vpop.f32.mrf.mxu0
        %v2225 = vadd.f32 %v436, %v2224
        %2226 = vmatmul.bf16.gmra.mxu0 %v2154
        %v2227 = vpop.f32.mrf.mxu0
        %v2228 = vadd.f32 %v436, %v2227
        %v2229 = vpop.f32.mrf.mxu0
        %v2230 = vadd.f32 %v436, %v2229
        %2231 = vmatmul.bf16.gmra.mxu0 %v2155
        %v2232 = vpop.f32.mrf.mxu0
        %v2233 = vadd.f32 %v436, %v2232
        %v2234 = vpop.f32.mrf.mxu0
        %v2235 = vadd.f32 %v436, %v2234
        %2236 = vmatmul.bf16.gmra.mxu0 %v2156
        %v2237 = vpop.f32.mrf.mxu0
        %v2238 = vadd.f32 %v436, %v2237
        %v2239 = vpop.f32.mrf.mxu0
        %v2240 = vadd.f32 %v436, %v2239
        %2241 = vmatmul.bf16.gmra.mxu0 %v2157
        %v2242 = vpop.f32.mrf.mxu0
        %v2243 = vadd.f32 %v436, %v2242
        %v2244 = vpop.f32.mrf.mxu0
        %v2245 = vadd.f32 %v436, %v2244
        %2246 = vmatmul.bf16.gmra.mxu0 %v2158
        %v2247 = vpop.f32.mrf.mxu0
        %v2248 = vadd.f32 %v436, %v2247
        %v2249 = vpop.f32.mrf.mxu0
        %v2250 = vadd.f32 %v436, %v2249
        %2251 = vmatmul.bf16.gmra.mxu0 %v2159
        %v2252 = vpop.f32.mrf.mxu0
        %v2253 = vadd.f32 %v436, %v2252
        %v2254 = vpop.f32.mrf.mxu0
        %v2255 = vadd.f32 %v436, %v2254
        %2256 = vmatmul.bf16.gmra.mxu0 %v2160
        %v2257 = vpop.f32.mrf.mxu0
        %v2258 = vadd.f32 %v436, %v2257
        %v2259 = vpop.f32.mrf.mxu0
        %v2260 = vadd.f32 %v436, %v2259
        %2261 = vmatmul.bf16.gmra.mxu0 %v2161
        %v2262 = vpop.f32.mrf.mxu0
        %v2263 = vadd.f32 %v436, %v2262
        %v2264 = vpop.f32.mrf.mxu0
        %v2265 = vadd.f32 %v436, %v2264
        %2266 = vdwg.mxu0
        %v2267 = vmax.f32 %v2188, 0.0
        %v2268 = vmax.f32 %v2190, 0.0
        %v2269 = vmax.f32 %v2193, 0.0
        %v2270 = vmax.f32 %v2195, 0.0
        %v2271 = vmax.f32 %v2198, 0.0
        %v2272 = vmax.f32 %v2200, 0.0
        %v2273 = vmax.f32 %v2203, 0.0
        %v2274 = vmax.f32 %v2205, 0.0
        %v2275 = vmax.f32 %v2208, 0.0
        %v2276 = vmax.f32 %v2210, 0.0
        %v2277 = vmax.f32 %v2213, 0.0
        %v2278 = vmax.f32 %v2215, 0.0
        %v2279 = vmax.f32 %v2218, 0.0
        %v2280 = vmax.f32 %v2220, 0.0
        %v2281 = vmax.f32 %v2223, 0.0
        %v2282 = vmax.f32 %v2225, 0.0
        %v2283 = vmax.f32 %v2228, 0.0
        %v2284 = vmax.f32 %v2230, 0.0
        %v2285 = vmax.f32 %v2233, 0.0
        %v2286 = vmax.f32 %v2235, 0.0
        %v2287 = vmax.f32 %v2238, 0.0
        %v2288 = vmax.f32 %v2240, 0.0
        %v2289 = vmax.f32 %v2243, 0.0
        %v2290 = vmax.f32 %v2245, 0.0
        %v2291 = vmax.f32 %v2248, 0.0
        %v2292 = vmax.f32 %v2250, 0.0
        %v2293 = vmax.f32 %v2253, 0.0
        %v2294 = vmax.f32 %v2255, 0.0
        %v2295 = vmax.f32 %v2258, 0.0
        %v2296 = vmax.f32 %v2260, 0.0
        %v2297 = vmax.f32 %v2263, 0.0
        %v2298 = vmax.f32 %v2265, 0.0
        %v2299 = vpack.c.bf16 %v2268, %v2267
        %v2300 = vpack.c.bf16 %v2270, %v2269
        %v2301 = vpack.c.bf16 %v2272, %v2271
        %v2302 = vpack.c.bf16 %v2274, %v2273
        %v2303 = vpack.c.bf16 %v2276, %v2275
        %v2304 = vpack.c.bf16 %v2278, %v2277
        %v2305 = vpack.c.bf16 %v2280, %v2279
        %v2306 = vpack.c.bf16 %v2282, %v2281
        %v2307 = vpack.c.bf16 %v2284, %v2283
        %v2308 = vpack.c.bf16 %v2286, %v2285
        %v2309 = vpack.c.bf16 %v2288, %v2287
        %v2310 = vpack.c.bf16 %v2290, %v2289
        %v2311 = vpack.c.bf16 %v2292, %v2291
        %v2312 = vpack.c.bf16 %v2294, %v2293
        %v2313 = vpack.c.bf16 %v2296, %v2295
        %v2314 = vpack.c.bf16 %v2298, %v2297
        %2315 = vmatpush.bf16.msra.mxu0 %v761
        %2316 = vmatpush.bf16.msra.mxu0 %v760
        %2317 = vmatpush.bf16.msra.mxu0 %v759
        %2318 = vmatpush.bf16.msra.mxu0 %v758
        %2319 = vmatpush.bf16.msra.mxu0 %v757
        %2320 = vmatpush.bf16.msra.mxu0 %v756
        %2321 = vmatpush.bf16.msra.mxu0 %v755
        %2322 = vmatpush.bf16.msra.mxu0 %v754
        %2323 = vmatmul.bf16.gmra.mxu0 %v2299
        %v2324 = vpop.f32.mrf.mxu0
        %v2325 = vadd.f32 %v720, %v2324
        %v2326 = vpop.f32.mrf.mxu0
        %v2327 = vadd.f32 %v720, %v2326
        %2328 = vmatmul.bf16.gmra.mxu0 %v2300
        %v2329 = vpop.f32.mrf.mxu0
        %v2330 = vadd.f32 %v720, %v2329
        %v2331 = vpop.f32.mrf.mxu0
        %v2332 = vadd.f32 %v720, %v2331
        %2333 = vmatmul.bf16.gmra.mxu0 %v2301
        %v2334 = vpop.f32.mrf.mxu0
        %v2335 = vadd.f32 %v720, %v2334
        %v2336 = vpop.f32.mrf.mxu0
        %v2337 = vadd.f32 %v720, %v2336
        %2338 = vmatmul.bf16.gmra.mxu0 %v2302
        %v2339 = vpop.f32.mrf.mxu0
        %v2340 = vadd.f32 %v720, %v2339
        %v2341 = vpop.f32.mrf.mxu0
        %v2342 = vadd.f32 %v720, %v2341
        %2343 = vmatmul.bf16.gmra.mxu0 %v2303
        %v2344 = vpop.f32.mrf.mxu0
        %v2345 = vadd.f32 %v720, %v2344
        %v2346 = vpop.f32.mrf.mxu0
        %v2347 = vadd.f32 %v720, %v2346
        %2348 = vmatmul.bf16.gmra.mxu0 %v2304
        %v2349 = vpop.f32.mrf.mxu0
        %v2350 = vadd.f32 %v720, %v2349
        %v2351 = vpop.f32.mrf.mxu0
        %v2352 = vadd.f32 %v720, %v2351
        %2353 = vmatmul.bf16.gmra.mxu0 %v2305
        %v2354 = vpop.f32.mrf.mxu0
        %v2355 = vadd.f32 %v720, %v2354
        %v2356 = vpop.f32.mrf.mxu0
        %v2357 = vadd.f32 %v720, %v2356
        %2358 = vmatmul.bf16.gmra.mxu0 %v2306
        %v2359 = vpop.f32.mrf.mxu0
        %v2360 = vadd.f32 %v720, %v2359
        %v2361 = vpop.f32.mrf.mxu0
        %v2362 = vadd.f32 %v720, %v2361
        %2363 = vmatmul.bf16.gmra.mxu0 %v2307
        %v2364 = vpop.f32.mrf.mxu0
        %v2365 = vadd.f32 %v720, %v2364
        %v2366 = vpop.f32.mrf.mxu0
        %v2367 = vadd.f32 %v720, %v2366
        %2368 = vmatmul.bf16.gmra.mxu0 %v2308
        %v2369 = vpop.f32.mrf.mxu0
        %v2370 = vadd.f32 %v720, %v2369
        %v2371 = vpop.f32.mrf.mxu0
        %v2372 = vadd.f32 %v720, %v2371
        %2373 = vmatmul.bf16.gmra.mxu0 %v2309
        %v2374 = vpop.f32.mrf.mxu0
        %v2375 = vadd.f32 %v720, %v2374
        %v2376 = vpop.f32.mrf.mxu0
        %v2377 = vadd.f32 %v720, %v2376
        %2378 = vmatmul.bf16.gmra.mxu0 %v2310
        %v2379 = vpop.f32.mrf.mxu0
        %v2380 = vadd.f32 %v720, %v2379
        %v2381 = vpop.f32.mrf.mxu0
        %v2382 = vadd.f32 %v720, %v2381
        %2383 = vmatmul.bf16.gmra.mxu0 %v2311
        %v2384 = vpop.f32.mrf.mxu0
        %v2385 = vadd.f32 %v720, %v2384
        %v2386 = vpop.f32.mrf.mxu0
        %v2387 = vadd.f32 %v720, %v2386
        %2388 = vmatmul.bf16.gmra.mxu0 %v2312
        %v2389 = vpop.f32.mrf.mxu0
        %v2390 = vadd.f32 %v720, %v2389
        %v2391 = vpop.f32.mrf.mxu0
        %v2392 = vadd.f32 %v720, %v2391
        %2393 = vmatmul.bf16.gmra.mxu0 %v2313
        %v2394 = vpop.f32.mrf.mxu0
        %v2395 = vadd.f32 %v720, %v2394
        %v2396 = vpop.f32.mrf.mxu0
        %v2397 = vadd.f32 %v720, %v2396
        %2398 = vmatmul.bf16.gmra.mxu0 %v2314
        %v2399 = vpop.f32.mrf.mxu0
        %v2400 = vadd.f32 %v720, %v2399
        %v2401 = vpop.f32.mrf.mxu0
        %v2402 = vadd.f32 %v720, %v2401
        %2403 = vdwg.mxu0
        %v2404 = vmax.f32 %v2325, 0.0
        %v2405 = vmax.f32 %v2327, 0.0
        %v2406 = vmax.f32 %v2330, 0.0
        %v2407 = vmax.f32 %v2332, 0.0
        %v2408 = vmax.f32 %v2335, 0.0
        %v2409 = vmax.f32 %v2337, 0.0
        %v2410 = vmax.f32 %v2340, 0.0
        %v2411 = vmax.f32 %v2342, 0.0
        %v2412 = vmax.f32 %v2345, 0.0
        %v2413 = vmax.f32 %v2347, 0.0
        %v2414 = vmax.f32 %v2350, 0.0
        %v2415 = vmax.f32 %v2352, 0.0
        %v2416 = vmax.f32 %v2355, 0.0
        %v2417 = vmax.f32 %v2357, 0.0
        %v2418 = vmax.f32 %v2360, 0.0
        %v2419 = vmax.f32 %v2362, 0.0
        %v2420 = vmax.f32 %v2365, 0.0
        %v2421 = vmax.f32 %v2367, 0.0
        %v2422 = vmax.f32 %v2370, 0.0
        %v2423 = vmax.f32 %v2372, 0.0
        %v2424 = vmax.f32 %v2375, 0.0
        %v2425 = vmax.f32 %v2377, 0.0
        %v2426 = vmax.f32 %v2380, 0.0
        %v2427 = vmax.f32 %v2382, 0.0
        %v2428 = vmax.f32 %v2385, 0.0
        %v2429 = vmax.f32 %v2387, 0.0
        %v2430 = vmax.f32 %v2390, 0.0
        %v2431 = vmax.f32 %v2392, 0.0
        %v2432 = vmax.f32 %v2395, 0.0
        %v2433 = vmax.f32 %v2397, 0.0
        %v2434 = vmax.f32 %v2400, 0.0
        %v2435 = vmax.f32 %v2402, 0.0
        %v2436 = vpack.c.bf16 %v2405, %v2404
        %v2437 = vpack.c.bf16 %v2407, %v2406
        %v2438 = vpack.c.bf16 %v2409, %v2408
        %v2439 = vpack.c.bf16 %v2411, %v2410
        %v2440 = vpack.c.bf16 %v2413, %v2412
        %v2441 = vpack.c.bf16 %v2415, %v2414
        %v2442 = vpack.c.bf16 %v2417, %v2416
        %v2443 = vpack.c.bf16 %v2419, %v2418
        %v2444 = vpack.c.bf16 %v2421, %v2420
        %v2445 = vpack.c.bf16 %v2423, %v2422
        %v2446 = vpack.c.bf16 %v2425, %v2424
        %v2447 = vpack.c.bf16 %v2427, %v2426
        %v2448 = vpack.c.bf16 %v2429, %v2428
        %v2449 = vpack.c.bf16 %v2431, %v2430
        %v2450 = vpack.c.bf16 %v2433, %v2432
        %v2451 = vpack.c.bf16 %v2435, %v2434
        %2452 = vmatpush.bf16.msra.mxu0 %v949
        %2453 = vmatpush.bf16.msra.mxu0 %v948
        %2454 = vmatpush.bf16.msra.mxu0 %v947
        %2455 = vmatpush.bf16.msra.mxu0 %v946
        %2456 = vmatpush.bf16.msra.mxu0 %v945
        %2457 = vmatpush.bf16.msra.mxu0 %v944
        %2458 = vmatpush.bf16.msra.mxu0 %v943
        %2459 = vmatpush.bf16.msra.mxu0 %v942
        %2460 = vmatmul.bf16.gmra.mxu0 %v2436
        %v2461 = vpop.f32.mrf.mxu0
        %v2462 = vadd.f32 %v908, %v2461
        %v2463 = vpop.f32.mrf.mxu0
        %v2464 = vadd.f32 %v908, %v2463
        %2465 = vmatmul.bf16.gmra.mxu0 %v2437
        %v2466 = vpop.f32.mrf.mxu0
        %v2467 = vadd.f32 %v908, %v2466
        %v2468 = vpop.f32.mrf.mxu0
        %v2469 = vadd.f32 %v908, %v2468
        %2470 = vmatmul.bf16.gmra.mxu0 %v2438
        %v2471 = vpop.f32.mrf.mxu0
        %v2472 = vadd.f32 %v908, %v2471
        %v2473 = vpop.f32.mrf.mxu0
        %v2474 = vadd.f32 %v908, %v2473
        %2475 = vmatmul.bf16.gmra.mxu0 %v2439
        %v2476 = vpop.f32.mrf.mxu0
        %v2477 = vadd.f32 %v908, %v2476
        %v2478 = vpop.f32.mrf.mxu0
        %v2479 = vadd.f32 %v908, %v2478
        %2480 = vmatmul.bf16.gmra.mxu0 %v2440
        %v2481 = vpop.f32.mrf.mxu0
        %v2482 = vadd.f32 %v908, %v2481
        %v2483 = vpop.f32.mrf.mxu0
        %v2484 = vadd.f32 %v908, %v2483
        %2485 = vmatmul.bf16.gmra.mxu0 %v2441
        %v2486 = vpop.f32.mrf.mxu0
        %v2487 = vadd.f32 %v908, %v2486
        %v2488 = vpop.f32.mrf.mxu0
        %v2489 = vadd.f32 %v908, %v2488
        %2490 = vmatmul.bf16.gmra.mxu0 %v2442
        %v2491 = vpop.f32.mrf.mxu0
        %v2492 = vadd.f32 %v908, %v2491
        %v2493 = vpop.f32.mrf.mxu0
        %v2494 = vadd.f32 %v908, %v2493
        %2495 = vmatmul.bf16.gmra.mxu0 %v2443
        %v2496 = vpop.f32.mrf.mxu0
        %v2497 = vadd.f32 %v908, %v2496
        %v2498 = vpop.f32.mrf.mxu0
        %v2499 = vadd.f32 %v908, %v2498
        %2500 = vmatmul.bf16.gmra.mxu0 %v2444
        %v2501 = vpop.f32.mrf.mxu0
        %v2502 = vadd.f32 %v908, %v2501
        %v2503 = vpop.f32.mrf.mxu0
        %v2504 = vadd.f32 %v908, %v2503
        %2505 = vmatmul.bf16.gmra.mxu0 %v2445
        %v2506 = vpop.f32.mrf.mxu0
        %v2507 = vadd.f32 %v908, %v2506
        %v2508 = vpop.f32.mrf.mxu0
        %v2509 = vadd.f32 %v908, %v2508
        %2510 = vmatmul.bf16.gmra.mxu0 %v2446
        %v2511 = vpop.f32.mrf.mxu0
        %v2512 = vadd.f32 %v908, %v2511
        %v2513 = vpop.f32.mrf.mxu0
        %v2514 = vadd.f32 %v908, %v2513
        %2515 = vmatmul.bf16.gmra.mxu0 %v2447
        %v2516 = vpop.f32.mrf.mxu0
        %v2517 = vadd.f32 %v908, %v2516
        %v2518 = vpop.f32.mrf.mxu0
        %v2519 = vadd.f32 %v908, %v2518
        %2520 = vmatmul.bf16.gmra.mxu0 %v2448
        %v2521 = vpop.f32.mrf.mxu0
        %v2522 = vadd.f32 %v908, %v2521
        %v2523 = vpop.f32.mrf.mxu0
        %v2524 = vadd.f32 %v908, %v2523
        %2525 = vmatmul.bf16.gmra.mxu0 %v2449
        %v2526 = vpop.f32.mrf.mxu0
        %v2527 = vadd.f32 %v908, %v2526
        %v2528 = vpop.f32.mrf.mxu0
        %v2529 = vadd.f32 %v908, %v2528
        %2530 = vmatmul.bf16.gmra.mxu0 %v2450
        %v2531 = vpop.f32.mrf.mxu0
        %v2532 = vadd.f32 %v908, %v2531
        %v2533 = vpop.f32.mrf.mxu0
        %v2534 = vadd.f32 %v908, %v2533
        %2535 = vmatmul.bf16.gmra.mxu0 %v2451
        %v2536 = vpop.f32.mrf.mxu0
        %v2537 = vadd.f32 %v908, %v2536
        %v2538 = vpop.f32.mrf.mxu0
        %v2539 = vadd.f32 %v908, %v2538
        %2540 = vdwg.mxu0
        %v2541 = vmax.f32 %v2462, 0.0
        %v2542 = vmax.f32 %v2464, 0.0
        %v2543 = vmax.f32 %v2467, 0.0
        %v2544 = vmax.f32 %v2469, 0.0
        %v2545 = vmax.f32 %v2472, 0.0
        %v2546 = vmax.f32 %v2474, 0.0
        %v2547 = vmax.f32 %v2477, 0.0
        %v2548 = vmax.f32 %v2479, 0.0
        %v2549 = vmax.f32 %v2482, 0.0
        %v2550 = vmax.f32 %v2484, 0.0
        %v2551 = vmax.f32 %v2487, 0.0
        %v2552 = vmax.f32 %v2489, 0.0
        %v2553 = vmax.f32 %v2492, 0.0
        %v2554 = vmax.f32 %v2494, 0.0
        %v2555 = vmax.f32 %v2497, 0.0
        %v2556 = vmax.f32 %v2499, 0.0
        %v2557 = vmax.f32 %v2502, 0.0
        %v2558 = vmax.f32 %v2504, 0.0
        %v2559 = vmax.f32 %v2507, 0.0
        %v2560 = vmax.f32 %v2509, 0.0
        %v2561 = vmax.f32 %v2512, 0.0
        %v2562 = vmax.f32 %v2514, 0.0
        %v2563 = vmax.f32 %v2517, 0.0
        %v2564 = vmax.f32 %v2519, 0.0
        %v2565 = vmax.f32 %v2522, 0.0
        %v2566 = vmax.f32 %v2524, 0.0
        %v2567 = vmax.f32 %v2527, 0.0
        %v2568 = vmax.f32 %v2529, 0.0
        %v2569 = vmax.f32 %v2532, 0.0
        %v2570 = vmax.f32 %v2534, 0.0
        %v2571 = vmax.f32 %v2537, 0.0
        %v2572 = vmax.f32 %v2539, 0.0
        %v2573 = vrot.slane %v2541, 4
        %v2574 = vmax.f32 %v2541, %v2573
        %v2575 = vrot.slane %v2574, 2
        %v2576 = vmax.f32 %v2574, %v2575
        %v2577 = vrot.slane %v2576, 1
        %v2578 = vmax.f32 %v2576, %v2577
        %v2579 = vrot.slane %v2542, 4
        %v2580 = vmax.f32 %v2542, %v2579
        %v2581 = vrot.slane %v2580, 2
        %v2582 = vmax.f32 %v2580, %v2581
        %v2583 = vrot.slane %v2582, 1
        %v2584 = vmax.f32 %v2582, %v2583
        %v2585 = vrot.slane %v2543, 4
        %v2586 = vmax.f32 %v2543, %v2585
        %v2587 = vrot.slane %v2586, 2
        %v2588 = vmax.f32 %v2586, %v2587
        %v2589 = vrot.slane %v2588, 1
        %v2590 = vmax.f32 %v2588, %v2589
        %v2591 = vrot.slane %v2544, 4
        %v2592 = vmax.f32 %v2544, %v2591
        %v2593 = vrot.slane %v2592, 2
        %v2594 = vmax.f32 %v2592, %v2593
        %v2595 = vrot.slane %v2594, 1
        %v2596 = vmax.f32 %v2594, %v2595
        %v2597 = vrot.slane %v2545, 4
        %v2598 = vmax.f32 %v2545, %v2597
        %v2599 = vrot.slane %v2598, 2
        %v2600 = vmax.f32 %v2598, %v2599
        %v2601 = vrot.slane %v2600, 1
        %v2602 = vmax.f32 %v2600, %v2601
        %v2603 = vrot.slane %v2546, 4
        %v2604 = vmax.f32 %v2546, %v2603
        %v2605 = vrot.slane %v2604, 2
        %v2606 = vmax.f32 %v2604, %v2605
        %v2607 = vrot.slane %v2606, 1
        %v2608 = vmax.f32 %v2606, %v2607
        %v2609 = vrot.slane %v2547, 4
        %v2610 = vmax.f32 %v2547, %v2609
        %v2611 = vrot.slane %v2610, 2
        %v2612 = vmax.f32 %v2610, %v2611
        %v2613 = vrot.slane %v2612, 1
        %v2614 = vmax.f32 %v2612, %v2613
        %v2615 = vrot.slane %v2548, 4
        %v2616 = vmax.f32 %v2548, %v2615
        %v2617 = vrot.slane %v2616, 2
        %v2618 = vmax.f32 %v2616, %v2617
        %v2619 = vrot.slane %v2618, 1
        %v2620 = vmax.f32 %v2618, %v2619
        %v2621 = vrot.slane %v2549, 4
        %v2622 = vmax.f32 %v2549, %v2621
        %v2623 = vrot.slane %v2622, 2
        %v2624 = vmax.f32 %v2622, %v2623
        %v2625 = vrot.slane %v2624, 1
        %v2626 = vmax.f32 %v2624, %v2625
        %v2627 = vrot.slane %v2550, 4
        %v2628 = vmax.f32 %v2550, %v2627
        %v2629 = vrot.slane %v2628, 2
        %v2630 = vmax.f32 %v2628, %v2629
        %v2631 = vrot.slane %v2630, 1
        %v2632 = vmax.f32 %v2630, %v2631
        %v2633 = vrot.slane %v2551, 4
        %v2634 = vmax.f32 %v2551, %v2633
        %v2635 = vrot.slane %v2634, 2
        %v2636 = vmax.f32 %v2634, %v2635
        %v2637 = vrot.slane %v2636, 1
        %v2638 = vmax.f32 %v2636, %v2637
        %v2639 = vrot.slane %v2552, 4
        %v2640 = vmax.f32 %v2552, %v2639
        %v2641 = vrot.slane %v2640, 2
        %v2642 = vmax.f32 %v2640, %v2641
        %v2643 = vrot.slane %v2642, 1
        %v2644 = vmax.f32 %v2642, %v2643
        %v2645 = vrot.slane %v2553, 4
        %v2646 = vmax.f32 %v2553, %v2645
        %v2647 = vrot.slane %v2646, 2
        %v2648 = vmax.f32 %v2646, %v2647
        %v2649 = vrot.slane %v2648, 1
        %v2650 = vmax.f32 %v2648, %v2649
        %v2651 = vrot.slane %v2554, 4
        %v2652 = vmax.f32 %v2554, %v2651
        %v2653 = vrot.slane %v2652, 2
        %v2654 = vmax.f32 %v2652, %v2653
        %v2655 = vrot.slane %v2654, 1
        %v2656 = vmax.f32 %v2654, %v2655
        %v2657 = vrot.slane %v2555, 4
        %v2658 = vmax.f32 %v2555, %v2657
        %v2659 = vrot.slane %v2658, 2
        %v2660 = vmax.f32 %v2658, %v2659
        %v2661 = vrot.slane %v2660, 1
        %v2662 = vmax.f32 %v2660, %v2661
        %v2663 = vrot.slane %v2556, 4
        %v2664 = vmax.f32 %v2556, %v2663
        %v2665 = vrot.slane %v2664, 2
        %v2666 = vmax.f32 %v2664, %v2665
        %v2667 = vrot.slane %v2666, 1
        %v2668 = vmax.f32 %v2666, %v2667
        %v2669 = vrot.slane %v2557, 4
        %v2670 = vmax.f32 %v2557, %v2669
        %v2671 = vrot.slane %v2670, 2
        %v2672 = vmax.f32 %v2670, %v2671
        %v2673 = vrot.slane %v2672, 1
        %v2674 = vmax.f32 %v2672, %v2673
        %v2675 = vrot.slane %v2558, 4
        %v2676 = vmax.f32 %v2558, %v2675
        %v2677 = vrot.slane %v2676, 2
        %v2678 = vmax.f32 %v2676, %v2677
        %v2679 = vrot.slane %v2678, 1
        %v2680 = vmax.f32 %v2678, %v2679
        %v2681 = vrot.slane %v2559, 4
        %v2682 = vmax.f32 %v2559, %v2681
        %v2683 = vrot.slane %v2682, 2
        %v2684 = vmax.f32 %v2682, %v2683
        %v2685 = vrot.slane %v2684, 1
        %v2686 = vmax.f32 %v2684, %v2685
        %v2687 = vrot.slane %v2560, 4
        %v2688 = vmax.f32 %v2560, %v2687
        %v2689 = vrot.slane %v2688, 2
        %v2690 = vmax.f32 %v2688, %v2689
        %v2691 = vrot.slane %v2690, 1
        %v2692 = vmax.f32 %v2690, %v2691
        %v2693 = vrot.slane %v2561, 4
        %v2694 = vmax.f32 %v2561, %v2693
        %v2695 = vrot.slane %v2694, 2
        %v2696 = vmax.f32 %v2694, %v2695
        %v2697 = vrot.slane %v2696, 1
        %v2698 = vmax.f32 %v2696, %v2697
        %v2699 = vrot.slane %v2562, 4
        %v2700 = vmax.f32 %v2562, %v2699
        %v2701 = vrot.slane %v2700, 2
        %v2702 = vmax.f32 %v2700, %v2701
        %v2703 = vrot.slane %v2702, 1
        %v2704 = vmax.f32 %v2702, %v2703
        %v2705 = vrot.slane %v2563, 4
        %v2706 = vmax.f32 %v2563, %v2705
        %v2707 = vrot.slane %v2706, 2
        %v2708 = vmax.f32 %v2706, %v2707
        %v2709 = vrot.slane %v2708, 1
        %v2710 = vmax.f32 %v2708, %v2709
        %v2711 = vrot.slane %v2564, 4
        %v2712 = vmax.f32 %v2564, %v2711
        %v2713 = vrot.slane %v2712, 2
        %v2714 = vmax.f32 %v2712, %v2713
        %v2715 = vrot.slane %v2714, 1
        %v2716 = vmax.f32 %v2714, %v2715
        %v2717 = vrot.slane %v2565, 4
        %v2718 = vmax.f32 %v2565, %v2717
        %v2719 = vrot.slane %v2718, 2
        %v2720 = vmax.f32 %v2718, %v2719
        %v2721 = vrot.slane %v2720, 1
        %v2722 = vmax.f32 %v2720, %v2721
        %v2723 = vrot.slane %v2566, 4
        %v2724 = vmax.f32 %v2566, %v2723
        %v2725 = vrot.slane %v2724, 2
        %v2726 = vmax.f32 %v2724, %v2725
        %v2727 = vrot.slane %v2726, 1
        %v2728 = vmax.f32 %v2726, %v2727
        %v2729 = vrot.slane %v2567, 4
        %v2730 = vmax.f32 %v2567, %v2729
        %v2731 = vrot.slane %v2730, 2
        %v2732 = vmax.f32 %v2730, %v2731
        %v2733 = vrot.slane %v2732, 1
        %v2734 = vmax.f32 %v2732, %v2733
        %v2735 = vrot.slane %v2568, 4
        %v2736 = vmax.f32 %v2568, %v2735
        %v2737 = vrot.slane %v2736, 2
        %v2738 = vmax.f32 %v2736, %v2737
        %v2739 = vrot.slane %v2738, 1
        %v2740 = vmax.f32 %v2738, %v2739
        %v2741 = vrot.slane %v2569, 4
        %v2742 = vmax.f32 %v2569, %v2741
        %v2743 = vrot.slane %v2742, 2
        %v2744 = vmax.f32 %v2742, %v2743
        %v2745 = vrot.slane %v2744, 1
        %v2746 = vmax.f32 %v2744, %v2745
        %v2747 = vrot.slane %v2570, 4
        %v2748 = vmax.f32 %v2570, %v2747
        %v2749 = vrot.slane %v2748, 2
        %v2750 = vmax.f32 %v2748, %v2749
        %v2751 = vrot.slane %v2750, 1
        %v2752 = vmax.f32 %v2750, %v2751
        %v2753 = vrot.slane %v2571, 4
        %v2754 = vmax.f32 %v2571, %v2753
        %v2755 = vrot.slane %v2754, 2
        %v2756 = vmax.f32 %v2754, %v2755
        %v2757 = vrot.slane %v2756, 1
        %v2758 = vmax.f32 %v2756, %v2757
        %v2759 = vrot.slane %v2572, 4
        %v2760 = vmax.f32 %v2572, %v2759
        %v2761 = vrot.slane %v2760, 2
        %v2762 = vmax.f32 %v2760, %v2761
        %v2763 = vrot.slane %v2762, 1
        %v2764 = vmax.f32 %v2762, %v2763
        %v2765 = vmax.f32 %v2018, %v2578
        %v2766 = vmax.f32 %v2019, %v2584
        %v2767 = vmax.f32 %v2020, %v2590
        %v2768 = vmax.f32 %v2021, %v2596
        %v2769 = vmax.f32 %v2022, %v2602
        %v2770 = vmax.f32 %v2023, %v2608
        %v2771 = vmax.f32 %v2024, %v2614
        %v2772 = vmax.f32 %v2025, %v2620
        %v2773 = vmax.f32 %v2026, %v2626
        %v2774 = vmax.f32 %v2027, %v2632
        %v2775 = vmax.f32 %v2028, %v2638
        %v2776 = vmax.f32 %v2029, %v2644
        %v2777 = vmax.f32 %v2030, %v2650
        %v2778 = vmax.f32 %v2031, %v2656
        %v2779 = vmax.f32 %v2032, %v2662
        %v2780 = vmax.f32 %v2033, %v2668
        %v2781 = vmax.f32 %v2034, %v2674
        %v2782 = vmax.f32 %v2035, %v2680
        %v2783 = vmax.f32 %v2036, %v2686
        %v2784 = vmax.f32 %v2037, %v2692
        %v2785 = vmax.f32 %v2038, %v2698
        %v2786 = vmax.f32 %v2039, %v2704
        %v2787 = vmax.f32 %v2040, %v2710
        %v2788 = vmax.f32 %v2041, %v2716
        %v2789 = vmax.f32 %v2042, %v2722
        %v2790 = vmax.f32 %v2043, %v2728
        %v2791 = vmax.f32 %v2044, %v2734
        %v2792 = vmax.f32 %v2045, %v2740
        %v2793 = vmax.f32 %v2046, %v2746
        %v2794 = vmax.f32 %v2047, %v2752
        %v2795 = vmax.f32 %v2048, %v2758
        %v2796 = vmax.f32 %v2049, %v2764
        %v2797 = vld [vmem:[%s303 + $0xc] sm:$0xf]
        %v2798 = vld [vmem:[%s303 + $0x1c] sm:$0xf]
        %v2799 = vld [vmem:[%s303 + $0x2c] sm:$0xf]
        %v2800 = vld [vmem:[%s303 + $0x3c] sm:$0xf]
        %v2801 = vld [vmem:[%s303 + $0x4c] sm:$0xf]
        %v2802 = vld [vmem:[%s303 + $0x5c] sm:$0xf]
        %v2803 = vld [vmem:[%s303 + $0x6c] sm:$0xf]
        %v2804 = vld [vmem:[%s303 + $0x7c] sm:$0xf]
        %v2805 = vld [vmem:[%s303 + $0x8c] sm:$0xf]
        %v2806 = vld [vmem:[%s303 + $0x9c] sm:$0xf]
        %v2807 = vld [vmem:[%s303 + $0xac] sm:$0xf]
        %v2808 = vld [vmem:[%s303 + $0xbc] sm:$0xf]
        %v2809 = vld [vmem:[%s303 + $0xcc] sm:$0xf]
        %v2810 = vld [vmem:[%s303 + $0xdc] sm:$0xf]
        %v2811 = vld [vmem:[%s303 + $0xec] sm:$0xf]
        %v2812 = vld [vmem:[%s303 + $0xfc] sm:$0xf]
        %v2813 = vld [vmem:[%s303 + $0x10c] sm:$0xf]
        %v2814 = vld [vmem:[%s303 + $0x11c] sm:$0xf]
        %v2815 = vld [vmem:[%s303 + $0x12c] sm:$0xf]
        %v2816 = vld [vmem:[%s303 + $0x13c] sm:$0xf]
        %v2817 = vld [vmem:[%s303 + $0x14c] sm:$0xf]
        %v2818 = vld [vmem:[%s303 + $0x15c] sm:$0xf]
        %v2819 = vld [vmem:[%s303 + $0x16c] sm:$0xf]
        %v2820 = vld [vmem:[%s303 + $0x17c] sm:$0xf]
        %v2821 = vld [vmem:[%s303 + $0x18c] sm:$0xf]
        %v2822 = vld [vmem:[%s303 + $0x19c] sm:$0xf]
        %v2823 = vld [vmem:[%s303 + $0x1ac] sm:$0xf]
        %v2824 = vld [vmem:[%s303 + $0x1bc] sm:$0xf]
        %v2825 = vld [vmem:[%s303 + $0x1cc] sm:$0xf]
        %v2826 = vld [vmem:[%s303 + $0x1dc] sm:$0xf]
        %v2827 = vld [vmem:[%s303 + $0x1ec] sm:$0xf]
        %v2828 = vld [vmem:[%s303 + $0x1fc] sm:$0xf]
        %v2861 = vunpack.c.l.b16 %v2797
        %v2862 = vunpack.c.l.b16 %v2798
        %v2863 = vunpack.c.l.b16 %v2799
        %v2864 = vunpack.c.l.b16 %v2800
        %v2865 = vunpack.c.l.b16 %v2801
        %v2866 = vunpack.c.l.b16 %v2802
        %v2867 = vunpack.c.l.b16 %v2803
        %v2868 = vunpack.c.l.b16 %v2804
        %v2869 = vunpack.c.l.b16 %v2805
        %v2870 = vunpack.c.l.b16 %v2806
        %v2871 = vunpack.c.l.b16 %v2807
        %v2872 = vunpack.c.l.b16 %v2808
        %v2873 = vunpack.c.l.b16 %v2809
        %v2874 = vunpack.c.l.b16 %v2810
        %v2875 = vunpack.c.l.b16 %v2811
        %v2876 = vunpack.c.l.b16 %v2812
        %v2877 = vunpack.c.l.b16 %v2813
        %v2878 = vunpack.c.l.b16 %v2814
        %v2879 = vunpack.c.l.b16 %v2815
        %v2880 = vunpack.c.l.b16 %v2816
        %v2881 = vunpack.c.l.b16 %v2817
        %v2882 = vunpack.c.l.b16 %v2818
        %v2883 = vunpack.c.l.b16 %v2819
        %v2884 = vunpack.c.l.b16 %v2820
        %v2885 = vunpack.c.l.b16 %v2821
        %v2886 = vunpack.c.l.b16 %v2822
        %v2887 = vunpack.c.l.b16 %v2823
        %v2888 = vunpack.c.l.b16 %v2824
        %v2889 = vunpack.c.l.b16 %v2825
        %v2890 = vunpack.c.l.b16 %v2826
        %v2891 = vunpack.c.l.b16 %v2827
        %v2892 = vunpack.c.l.b16 %v2828
        %v2893 = vpack.c.b16 %v2862, %v2861
        %v2894 = vpack.c.b16 %v2864, %v2863
        %v2895 = vpack.c.b16 %v2866, %v2865
        %v2896 = vpack.c.b16 %v2868, %v2867
        %v2897 = vpack.c.b16 %v2870, %v2869
        %v2898 = vpack.c.b16 %v2872, %v2871
        %v2899 = vpack.c.b16 %v2874, %v2873
        %v2900 = vpack.c.b16 %v2876, %v2875
        %v2901 = vpack.c.b16 %v2878, %v2877
        %v2902 = vpack.c.b16 %v2880, %v2879
        %v2903 = vpack.c.b16 %v2882, %v2881
        %v2904 = vpack.c.b16 %v2884, %v2883
        %v2905 = vpack.c.b16 %v2886, %v2885
        %v2906 = vpack.c.b16 %v2888, %v2887
        %v2907 = vpack.c.b16 %v2890, %v2889
        %v2908 = vpack.c.b16 %v2892, %v2891
        %2925 = vmatpush.bf16.msra.mxu0 %v573
        %2926 = vmatpush.bf16.msra.mxu0 %v572
        %2927 = vmatpush.bf16.msra.mxu0 %v571
        %2928 = vmatpush.bf16.msra.mxu0 %v570
        %2929 = vmatpush.bf16.msra.mxu0 %v569
        %2930 = vmatpush.bf16.msra.mxu0 %v568
        %2931 = vmatpush.bf16.msra.mxu0 %v567
        %2932 = vmatpush.bf16.msra.mxu0 %v566
        %2933 = vmatmul.bf16.gmra.mxu0 %v2893
        %v2934 = vpop.f32.mrf.mxu0
        %v2935 = vadd.f32 %v436, %v2934
        %v2936 = vpop.f32.mrf.mxu0
        %v2937 = vadd.f32 %v436, %v2936
        %2938 = vmatmul.bf16.gmra.mxu0 %v2894
        %v2939 = vpop.f32.mrf.mxu0
        %v2940 = vadd.f32 %v436, %v2939
        %v2941 = vpop.f32.mrf.mxu0
        %v2942 = vadd.f32 %v436, %v2941
        %2943 = vmatmul.bf16.gmra.mxu0 %v2895
        %v2944 = vpop.f32.mrf.mxu0
        %v2945 = vadd.f32 %v436, %v2944
        %v2946 = vpop.f32.mrf.mxu0
        %v2947 = vadd.f32 %v436, %v2946
        %2948 = vmatmul.bf16.gmra.mxu0 %v2896
        %v2949 = vpop.f32.mrf.mxu0
        %v2950 = vadd.f32 %v436, %v2949
        %v2951 = vpop.f32.mrf.mxu0
        %v2952 = vadd.f32 %v436, %v2951
        %2953 = vmatmul.bf16.gmra.mxu0 %v2897
        %v2954 = vpop.f32.mrf.mxu0
        %v2955 = vadd.f32 %v436, %v2954
        %v2956 = vpop.f32.mrf.mxu0
        %v2957 = vadd.f32 %v436, %v2956
        %2958 = vmatmul.bf16.gmra.mxu0 %v2898
        %v2959 = vpop.f32.mrf.mxu0
        %v2960 = vadd.f32 %v436, %v2959
        %v2961 = vpop.f32.mrf.mxu0
        %v2962 = vadd.f32 %v436, %v2961
        %2963 = vmatmul.bf16.gmra.mxu0 %v2899
        %v2964 = vpop.f32.mrf.mxu0
        %v2965 = vadd.f32 %v436, %v2964
        %v2966 = vpop.f32.mrf.mxu0
        %v2967 = vadd.f32 %v436, %v2966
        %2968 = vmatmul.bf16.gmra.mxu0 %v2900
        %v2969 = vpop.f32.mrf.mxu0
        %v2970 = vadd.f32 %v436, %v2969
        %v2971 = vpop.f32.mrf.mxu0
        %v2972 = vadd.f32 %v436, %v2971
        %2973 = vmatmul.bf16.gmra.mxu0 %v2901
        %v2974 = vpop.f32.mrf.mxu0
        %v2975 = vadd.f32 %v436, %v2974
        %v2976 = vpop.f32.mrf.mxu0
        %v2977 = vadd.f32 %v436, %v2976
        %2978 = vmatmul.bf16.gmra.mxu0 %v2902
        %v2979 = vpop.f32.mrf.mxu0
        %v2980 = vadd.f32 %v436, %v2979
        %v2981 = vpop.f32.mrf.mxu0
        %v2982 = vadd.f32 %v436, %v2981
        %2983 = vmatmul.bf16.gmra.mxu0 %v2903
        %v2984 = vpop.f32.mrf.mxu0
        %v2985 = vadd.f32 %v436, %v2984
        %v2986 = vpop.f32.mrf.mxu0
        %v2987 = vadd.f32 %v436, %v2986
        %2988 = vmatmul.bf16.gmra.mxu0 %v2904
        %v2989 = vpop.f32.mrf.mxu0
        %v2990 = vadd.f32 %v436, %v2989
        %v2991 = vpop.f32.mrf.mxu0
        %v2992 = vadd.f32 %v436, %v2991
        %2993 = vmatmul.bf16.gmra.mxu0 %v2905
        %v2994 = vpop.f32.mrf.mxu0
        %v2995 = vadd.f32 %v436, %v2994
        %v2996 = vpop.f32.mrf.mxu0
        %v2997 = vadd.f32 %v436, %v2996
        %2998 = vmatmul.bf16.gmra.mxu0 %v2906
        %v2999 = vpop.f32.mrf.mxu0
        %v3000 = vadd.f32 %v436, %v2999
        %v3001 = vpop.f32.mrf.mxu0
        %v3002 = vadd.f32 %v436, %v3001
        %3003 = vmatmul.bf16.gmra.mxu0 %v2907
        %v3004 = vpop.f32.mrf.mxu0
        %v3005 = vadd.f32 %v436, %v3004
        %v3006 = vpop.f32.mrf.mxu0
        %v3007 = vadd.f32 %v436, %v3006
        %3008 = vmatmul.bf16.gmra.mxu0 %v2908
        %v3009 = vpop.f32.mrf.mxu0
        %v3010 = vadd.f32 %v436, %v3009
        %v3011 = vpop.f32.mrf.mxu0
        %v3012 = vadd.f32 %v436, %v3011
        %3013 = vdwg.mxu0
        %v3014 = vmax.f32 %v2935, 0.0
        %v3015 = vmax.f32 %v2937, 0.0
        %v3016 = vmax.f32 %v2940, 0.0
        %v3017 = vmax.f32 %v2942, 0.0
        %v3018 = vmax.f32 %v2945, 0.0
        %v3019 = vmax.f32 %v2947, 0.0
        %v3020 = vmax.f32 %v2950, 0.0
        %v3021 = vmax.f32 %v2952, 0.0
        %v3022 = vmax.f32 %v2955, 0.0
        %v3023 = vmax.f32 %v2957, 0.0
        %v3024 = vmax.f32 %v2960, 0.0
        %v3025 = vmax.f32 %v2962, 0.0
        %v3026 = vmax.f32 %v2965, 0.0
        %v3027 = vmax.f32 %v2967, 0.0
        %v3028 = vmax.f32 %v2970, 0.0
        %v3029 = vmax.f32 %v2972, 0.0
        %v3030 = vmax.f32 %v2975, 0.0
        %v3031 = vmax.f32 %v2977, 0.0
        %v3032 = vmax.f32 %v2980, 0.0
        %v3033 = vmax.f32 %v2982, 0.0
        %v3034 = vmax.f32 %v2985, 0.0
        %v3035 = vmax.f32 %v2987, 0.0
        %v3036 = vmax.f32 %v2990, 0.0
        %v3037 = vmax.f32 %v2992, 0.0
        %v3038 = vmax.f32 %v2995, 0.0
        %v3039 = vmax.f32 %v2997, 0.0
        %v3040 = vmax.f32 %v3000, 0.0
        %v3041 = vmax.f32 %v3002, 0.0
        %v3042 = vmax.f32 %v3005, 0.0
        %v3043 = vmax.f32 %v3007, 0.0
        %v3044 = vmax.f32 %v3010, 0.0
        %v3045 = vmax.f32 %v3012, 0.0
        %v3046 = vpack.c.bf16 %v3015, %v3014
        %v3047 = vpack.c.bf16 %v3017, %v3016
        %v3048 = vpack.c.bf16 %v3019, %v3018
        %v3049 = vpack.c.bf16 %v3021, %v3020
        %v3050 = vpack.c.bf16 %v3023, %v3022
        %v3051 = vpack.c.bf16 %v3025, %v3024
        %v3052 = vpack.c.bf16 %v3027, %v3026
        %v3053 = vpack.c.bf16 %v3029, %v3028
        %v3054 = vpack.c.bf16 %v3031, %v3030
        %v3055 = vpack.c.bf16 %v3033, %v3032
        %v3056 = vpack.c.bf16 %v3035, %v3034
        %v3057 = vpack.c.bf16 %v3037, %v3036
        %v3058 = vpack.c.bf16 %v3039, %v3038
        %v3059 = vpack.c.bf16 %v3041, %v3040
        %v3060 = vpack.c.bf16 %v3043, %v3042
        %v3061 = vpack.c.bf16 %v3045, %v3044
        %3062 = vmatpush.bf16.msra.mxu0 %v761
        %3063 = vmatpush.bf16.msra.mxu0 %v760
        %3064 = vmatpush.bf16.msra.mxu0 %v759
        %3065 = vmatpush.bf16.msra.mxu0 %v758
        %3066 = vmatpush.bf16.msra.mxu0 %v757
        %3067 = vmatpush.bf16.msra.mxu0 %v756
        %3068 = vmatpush.bf16.msra.mxu0 %v755
        %3069 = vmatpush.bf16.msra.mxu0 %v754
        %3070 = vmatmul.bf16.gmra.mxu0 %v3046
        %v3071 = vpop.f32.mrf.mxu0
        %v3072 = vadd.f32 %v720, %v3071
        %v3073 = vpop.f32.mrf.mxu0
        %v3074 = vadd.f32 %v720, %v3073
        %3075 = vmatmul.bf16.gmra.mxu0 %v3047
        %v3076 = vpop.f32.mrf.mxu0
        %v3077 = vadd.f32 %v720, %v3076
        %v3078 = vpop.f32.mrf.mxu0
        %v3079 = vadd.f32 %v720, %v3078
        %3080 = vmatmul.bf16.gmra.mxu0 %v3048
        %v3081 = vpop.f32.mrf.mxu0
        %v3082 = vadd.f32 %v720, %v3081
        %v3083 = vpop.f32.mrf.mxu0
        %v3084 = vadd.f32 %v720, %v3083
        %3085 = vmatmul.bf16.gmra.mxu0 %v3049
        %v3086 = vpop.f32.mrf.mxu0
        %v3087 = vadd.f32 %v720, %v3086
        %v3088 = vpop.f32.mrf.mxu0
        %v3089 = vadd.f32 %v720, %v3088
        %3090 = vmatmul.bf16.gmra.mxu0 %v3050
        %v3091 = vpop.f32.mrf.mxu0
        %v3092 = vadd.f32 %v720, %v3091
        %v3093 = vpop.f32.mrf.mxu0
        %v3094 = vadd.f32 %v720, %v3093
        %3095 = vmatmul.bf16.gmra.mxu0 %v3051
        %v3096 = vpop.f32.mrf.mxu0
        %v3097 = vadd.f32 %v720, %v3096
        %v3098 = vpop.f32.mrf.mxu0
        %v3099 = vadd.f32 %v720, %v3098
        %3100 = vmatmul.bf16.gmra.mxu0 %v3052
        %v3101 = vpop.f32.mrf.mxu0
        %v3102 = vadd.f32 %v720, %v3101
        %v3103 = vpop.f32.mrf.mxu0
        %v3104 = vadd.f32 %v720, %v3103
        %3105 = vmatmul.bf16.gmra.mxu0 %v3053
        %v3106 = vpop.f32.mrf.mxu0
        %v3107 = vadd.f32 %v720, %v3106
        %v3108 = vpop.f32.mrf.mxu0
        %v3109 = vadd.f32 %v720, %v3108
        %3110 = vmatmul.bf16.gmra.mxu0 %v3054
        %v3111 = vpop.f32.mrf.mxu0
        %v3112 = vadd.f32 %v720, %v3111
        %v3113 = vpop.f32.mrf.mxu0
        %v3114 = vadd.f32 %v720, %v3113
        %3115 = vmatmul.bf16.gmra.mxu0 %v3055
        %v3116 = vpop.f32.mrf.mxu0
        %v3117 = vadd.f32 %v720, %v3116
        %v3118 = vpop.f32.mrf.mxu0
        %v3119 = vadd.f32 %v720, %v3118
        %3120 = vmatmul.bf16.gmra.mxu0 %v3056
        %v3121 = vpop.f32.mrf.mxu0
        %v3122 = vadd.f32 %v720, %v3121
        %v3123 = vpop.f32.mrf.mxu0
        %v3124 = vadd.f32 %v720, %v3123
        %3125 = vmatmul.bf16.gmra.mxu0 %v3057
        %v3126 = vpop.f32.mrf.mxu0
        %v3127 = vadd.f32 %v720, %v3126
        %v3128 = vpop.f32.mrf.mxu0
        %v3129 = vadd.f32 %v720, %v3128
        %3130 = vmatmul.bf16.gmra.mxu0 %v3058
        %v3131 = vpop.f32.mrf.mxu0
        %v3132 = vadd.f32 %v720, %v3131
        %v3133 = vpop.f32.mrf.mxu0
        %v3134 = vadd.f32 %v720, %v3133
        %3135 = vmatmul.bf16.gmra.mxu0 %v3059
        %v3136 = vpop.f32.mrf.mxu0
        %v3137 = vadd.f32 %v720, %v3136
        %v3138 = vpop.f32.mrf.mxu0
        %v3139 = vadd.f32 %v720, %v3138
        %3140 = vmatmul.bf16.gmra.mxu0 %v3060
        %v3141 = vpop.f32.mrf.mxu0
        %v3142 = vadd.f32 %v720, %v3141
        %v3143 = vpop.f32.mrf.mxu0
        %v3144 = vadd.f32 %v720, %v3143
        %3145 = vmatmul.bf16.gmra.mxu0 %v3061
        %v3146 = vpop.f32.mrf.mxu0
        %v3147 = vadd.f32 %v720, %v3146
        %v3148 = vpop.f32.mrf.mxu0
        %v3149 = vadd.f32 %v720, %v3148
        %3150 = vdwg.mxu0
        %v3151 = vmax.f32 %v3072, 0.0
        %v3152 = vmax.f32 %v3074, 0.0
        %v3153 = vmax.f32 %v3077, 0.0
        %v3154 = vmax.f32 %v3079, 0.0
        %v3155 = vmax.f32 %v3082, 0.0
        %v3156 = vmax.f32 %v3084, 0.0
        %v3157 = vmax.f32 %v3087, 0.0
        %v3158 = vmax.f32 %v3089, 0.0
        %v3159 = vmax.f32 %v3092, 0.0
        %v3160 = vmax.f32 %v3094, 0.0
        %v3161 = vmax.f32 %v3097, 0.0
        %v3162 = vmax.f32 %v3099, 0.0
        %v3163 = vmax.f32 %v3102, 0.0
        %v3164 = vmax.f32 %v3104, 0.0
        %v3165 = vmax.f32 %v3107, 0.0
        %v3166 = vmax.f32 %v3109, 0.0
        %v3167 = vmax.f32 %v3112, 0.0
        %v3168 = vmax.f32 %v3114, 0.0
        %v3169 = vmax.f32 %v3117, 0.0
        %v3170 = vmax.f32 %v3119, 0.0
        %v3171 = vmax.f32 %v3122, 0.0
        %v3172 = vmax.f32 %v3124, 0.0
        %v3173 = vmax.f32 %v3127, 0.0
        %v3174 = vmax.f32 %v3129, 0.0
        %v3175 = vmax.f32 %v3132, 0.0
        %v3176 = vmax.f32 %v3134, 0.0
        %v3177 = vmax.f32 %v3137, 0.0
        %v3178 = vmax.f32 %v3139, 0.0
        %v3179 = vmax.f32 %v3142, 0.0
        %v3180 = vmax.f32 %v3144, 0.0
        %v3181 = vmax.f32 %v3147, 0.0
        %v3182 = vmax.f32 %v3149, 0.0
        %v3183 = vpack.c.bf16 %v3152, %v3151
        %v3184 = vpack.c.bf16 %v3154, %v3153
        %v3185 = vpack.c.bf16 %v3156, %v3155
        %v3186 = vpack.c.bf16 %v3158, %v3157
        %v3187 = vpack.c.bf16 %v3160, %v3159
        %v3188 = vpack.c.bf16 %v3162, %v3161
        %v3189 = vpack.c.bf16 %v3164, %v3163
        %v3190 = vpack.c.bf16 %v3166, %v3165
        %v3191 = vpack.c.bf16 %v3168, %v3167
        %v3192 = vpack.c.bf16 %v3170, %v3169
        %v3193 = vpack.c.bf16 %v3172, %v3171
        %v3194 = vpack.c.bf16 %v3174, %v3173
        %v3195 = vpack.c.bf16 %v3176, %v3175
        %v3196 = vpack.c.bf16 %v3178, %v3177
        %v3197 = vpack.c.bf16 %v3180, %v3179
        %v3198 = vpack.c.bf16 %v3182, %v3181
        %3199 = vmatpush.bf16.msra.mxu0 %v949
        %3200 = vmatpush.bf16.msra.mxu0 %v948
        %3201 = vmatpush.bf16.msra.mxu0 %v947
        %3202 = vmatpush.bf16.msra.mxu0 %v946
        %3203 = vmatpush.bf16.msra.mxu0 %v945
        %3204 = vmatpush.bf16.msra.mxu0 %v944
        %3205 = vmatpush.bf16.msra.mxu0 %v943
        %3206 = vmatpush.bf16.msra.mxu0 %v942
        %3207 = vmatmul.bf16.gmra.mxu0 %v3183
        %v3208 = vpop.f32.mrf.mxu0
        %v3209 = vadd.f32 %v908, %v3208
        %v3210 = vpop.f32.mrf.mxu0
        %v3211 = vadd.f32 %v908, %v3210
        %3212 = vmatmul.bf16.gmra.mxu0 %v3184
        %v3213 = vpop.f32.mrf.mxu0
        %v3214 = vadd.f32 %v908, %v3213
        %v3215 = vpop.f32.mrf.mxu0
        %v3216 = vadd.f32 %v908, %v3215
        %3217 = vmatmul.bf16.gmra.mxu0 %v3185
        %v3218 = vpop.f32.mrf.mxu0
        %v3219 = vadd.f32 %v908, %v3218
        %v3220 = vpop.f32.mrf.mxu0
        %v3221 = vadd.f32 %v908, %v3220
        %3222 = vmatmul.bf16.gmra.mxu0 %v3186
        %v3223 = vpop.f32.mrf.mxu0
        %v3224 = vadd.f32 %v908, %v3223
        %v3225 = vpop.f32.mrf.mxu0
        %v3226 = vadd.f32 %v908, %v3225
        %3227 = vmatmul.bf16.gmra.mxu0 %v3187
        %v3228 = vpop.f32.mrf.mxu0
        %v3229 = vadd.f32 %v908, %v3228
        %v3230 = vpop.f32.mrf.mxu0
        %v3231 = vadd.f32 %v908, %v3230
        %3232 = vmatmul.bf16.gmra.mxu0 %v3188
        %v3233 = vpop.f32.mrf.mxu0
        %v3234 = vadd.f32 %v908, %v3233
        %v3235 = vpop.f32.mrf.mxu0
        %v3236 = vadd.f32 %v908, %v3235
        %3237 = vmatmul.bf16.gmra.mxu0 %v3189
        %v3238 = vpop.f32.mrf.mxu0
        %v3239 = vadd.f32 %v908, %v3238
        %v3240 = vpop.f32.mrf.mxu0
        %v3241 = vadd.f32 %v908, %v3240
        %3242 = vmatmul.bf16.gmra.mxu0 %v3190
        %v3243 = vpop.f32.mrf.mxu0
        %v3244 = vadd.f32 %v908, %v3243
        %v3245 = vpop.f32.mrf.mxu0
        %v3246 = vadd.f32 %v908, %v3245
        %3247 = vmatmul.bf16.gmra.mxu0 %v3191
        %v3248 = vpop.f32.mrf.mxu0
        %v3249 = vadd.f32 %v908, %v3248
        %v3250 = vpop.f32.mrf.mxu0
        %v3251 = vadd.f32 %v908, %v3250
        %3252 = vmatmul.bf16.gmra.mxu0 %v3192
        %v3253 = vpop.f32.mrf.mxu0
        %v3254 = vadd.f32 %v908, %v3253
        %v3255 = vpop.f32.mrf.mxu0
        %v3256 = vadd.f32 %v908, %v3255
        %3257 = vmatmul.bf16.gmra.mxu0 %v3193
        %v3258 = vpop.f32.mrf.mxu0
        %v3259 = vadd.f32 %v908, %v3258
        %v3260 = vpop.f32.mrf.mxu0
        %v3261 = vadd.f32 %v908, %v3260
        %3262 = vmatmul.bf16.gmra.mxu0 %v3194
        %v3263 = vpop.f32.mrf.mxu0
        %v3264 = vadd.f32 %v908, %v3263
        %v3265 = vpop.f32.mrf.mxu0
        %v3266 = vadd.f32 %v908, %v3265
        %3267 = vmatmul.bf16.gmra.mxu0 %v3195
        %v3268 = vpop.f32.mrf.mxu0
        %v3269 = vadd.f32 %v908, %v3268
        %v3270 = vpop.f32.mrf.mxu0
        %v3271 = vadd.f32 %v908, %v3270
        %3272 = vmatmul.bf16.gmra.mxu0 %v3196
        %v3273 = vpop.f32.mrf.mxu0
        %v3274 = vadd.f32 %v908, %v3273
        %v3275 = vpop.f32.mrf.mxu0
        %v3276 = vadd.f32 %v908, %v3275
        %3277 = vmatmul.bf16.gmra.mxu0 %v3197
        %v3278 = vpop.f32.mrf.mxu0
        %v3279 = vadd.f32 %v908, %v3278
        %v3280 = vpop.f32.mrf.mxu0
        %v3281 = vadd.f32 %v908, %v3280
        %3282 = vmatmul.bf16.gmra.mxu0 %v3198
        %v3283 = vpop.f32.mrf.mxu0
        %v3284 = vadd.f32 %v908, %v3283
        %v3285 = vpop.f32.mrf.mxu0
        %v3286 = vadd.f32 %v908, %v3285
        %3287 = vdwg.mxu0
        %v3288 = vmax.f32 %v3209, 0.0
        %v3289 = vmax.f32 %v3211, 0.0
        %v3290 = vmax.f32 %v3214, 0.0
        %v3291 = vmax.f32 %v3216, 0.0
        %v3292 = vmax.f32 %v3219, 0.0
        %v3293 = vmax.f32 %v3221, 0.0
        %v3294 = vmax.f32 %v3224, 0.0
        %v3295 = vmax.f32 %v3226, 0.0
        %v3296 = vmax.f32 %v3229, 0.0
        %v3297 = vmax.f32 %v3231, 0.0
        %v3298 = vmax.f32 %v3234, 0.0
        %v3299 = vmax.f32 %v3236, 0.0
        %v3300 = vmax.f32 %v3239, 0.0
        %v3301 = vmax.f32 %v3241, 0.0
        %v3302 = vmax.f32 %v3244, 0.0
        %v3303 = vmax.f32 %v3246, 0.0
        %v3304 = vmax.f32 %v3249, 0.0
        %v3305 = vmax.f32 %v3251, 0.0
        %v3306 = vmax.f32 %v3254, 0.0
        %v3307 = vmax.f32 %v3256, 0.0
        %v3308 = vmax.f32 %v3259, 0.0
        %v3309 = vmax.f32 %v3261, 0.0
        %v3310 = vmax.f32 %v3264, 0.0
        %v3311 = vmax.f32 %v3266, 0.0
        %v3312 = vmax.f32 %v3269, 0.0
        %v3313 = vmax.f32 %v3271, 0.0
        %v3314 = vmax.f32 %v3274, 0.0
        %v3315 = vmax.f32 %v3276, 0.0
        %v3316 = vmax.f32 %v3279, 0.0
        %v3317 = vmax.f32 %v3281, 0.0
        %v3318 = vmax.f32 %v3284, 0.0
        %v3319 = vmax.f32 %v3286, 0.0
        %v3320 = vrot.slane %v3288, 4
        %v3321 = vmax.f32 %v3288, %v3320
        %v3322 = vrot.slane %v3321, 2
        %v3323 = vmax.f32 %v3321, %v3322
        %v3324 = vrot.slane %v3323, 1
        %v3325 = vmax.f32 %v3323, %v3324
        %v3326 = vrot.slane %v3289, 4
        %v3327 = vmax.f32 %v3289, %v3326
        %v3328 = vrot.slane %v3327, 2
        %v3329 = vmax.f32 %v3327, %v3328
        %v3330 = vrot.slane %v3329, 1
        %v3331 = vmax.f32 %v3329, %v3330
        %v3332 = vrot.slane %v3290, 4
        %v3333 = vmax.f32 %v3290, %v3332
        %v3334 = vrot.slane %v3333, 2
        %v3335 = vmax.f32 %v3333, %v3334
        %v3336 = vrot.slane %v3335, 1
        %v3337 = vmax.f32 %v3335, %v3336
        %v3338 = vrot.slane %v3291, 4
        %v3339 = vmax.f32 %v3291, %v3338
        %v3340 = vrot.slane %v3339, 2
        %v3341 = vmax.f32 %v3339, %v3340
        %v3342 = vrot.slane %v3341, 1
        %v3343 = vmax.f32 %v3341, %v3342
        %v3344 = vrot.slane %v3292, 4
        %v3345 = vmax.f32 %v3292, %v3344
        %v3346 = vrot.slane %v3345, 2
        %v3347 = vmax.f32 %v3345, %v3346
        %v3348 = vrot.slane %v3347, 1
        %v3349 = vmax.f32 %v3347, %v3348
        %v3350 = vrot.slane %v3293, 4
        %v3351 = vmax.f32 %v3293, %v3350
        %v3352 = vrot.slane %v3351, 2
        %v3353 = vmax.f32 %v3351, %v3352
        %v3354 = vrot.slane %v3353, 1
        %v3355 = vmax.f32 %v3353, %v3354
        %v3356 = vrot.slane %v3294, 4
        %v3357 = vmax.f32 %v3294, %v3356
        %v3358 = vrot.slane %v3357, 2
        %v3359 = vmax.f32 %v3357, %v3358
        %v3360 = vrot.slane %v3359, 1
        %v3361 = vmax.f32 %v3359, %v3360
        %v3362 = vrot.slane %v3295, 4
        %v3363 = vmax.f32 %v3295, %v3362
        %v3364 = vrot.slane %v3363, 2
        %v3365 = vmax.f32 %v3363, %v3364
        %v3366 = vrot.slane %v3365, 1
        %v3367 = vmax.f32 %v3365, %v3366
        %v3368 = vrot.slane %v3296, 4
        %v3369 = vmax.f32 %v3296, %v3368
        %v3370 = vrot.slane %v3369, 2
        %v3371 = vmax.f32 %v3369, %v3370
        %v3372 = vrot.slane %v3371, 1
        %v3373 = vmax.f32 %v3371, %v3372
        %v3374 = vrot.slane %v3297, 4
        %v3375 = vmax.f32 %v3297, %v3374
        %v3376 = vrot.slane %v3375, 2
        %v3377 = vmax.f32 %v3375, %v3376
        %v3378 = vrot.slane %v3377, 1
        %v3379 = vmax.f32 %v3377, %v3378
        %v3380 = vrot.slane %v3298, 4
        %v3381 = vmax.f32 %v3298, %v3380
        %v3382 = vrot.slane %v3381, 2
        %v3383 = vmax.f32 %v3381, %v3382
        %v3384 = vrot.slane %v3383, 1
        %v3385 = vmax.f32 %v3383, %v3384
        %v3386 = vrot.slane %v3299, 4
        %v3387 = vmax.f32 %v3299, %v3386
        %v3388 = vrot.slane %v3387, 2
        %v3389 = vmax.f32 %v3387, %v3388
        %v3390 = vrot.slane %v3389, 1
        %v3391 = vmax.f32 %v3389, %v3390
        %v3392 = vrot.slane %v3300, 4
        %v3393 = vmax.f32 %v3300, %v3392
        %v3394 = vrot.slane %v3393, 2
        %v3395 = vmax.f32 %v3393, %v3394
        %v3396 = vrot.slane %v3395, 1
        %v3397 = vmax.f32 %v3395, %v3396
        %v3398 = vrot.slane %v3301, 4
        %v3399 = vmax.f32 %v3301, %v3398
        %v3400 = vrot.slane %v3399, 2
        %v3401 = vmax.f32 %v3399, %v3400
        %v3402 = vrot.slane %v3401, 1
        %v3403 = vmax.f32 %v3401, %v3402
        %v3404 = vrot.slane %v3302, 4
        %v3405 = vmax.f32 %v3302, %v3404
        %v3406 = vrot.slane %v3405, 2
        %v3407 = vmax.f32 %v3405, %v3406
        %v3408 = vrot.slane %v3407, 1
        %v3409 = vmax.f32 %v3407, %v3408
        %v3410 = vrot.slane %v3303, 4
        %v3411 = vmax.f32 %v3303, %v3410
        %v3412 = vrot.slane %v3411, 2
        %v3413 = vmax.f32 %v3411, %v3412
        %v3414 = vrot.slane %v3413, 1
        %v3415 = vmax.f32 %v3413, %v3414
        %v3416 = vrot.slane %v3304, 4
        %v3417 = vmax.f32 %v3304, %v3416
        %v3418 = vrot.slane %v3417, 2
        %v3419 = vmax.f32 %v3417, %v3418
        %v3420 = vrot.slane %v3419, 1
        %v3421 = vmax.f32 %v3419, %v3420
        %v3422 = vrot.slane %v3305, 4
        %v3423 = vmax.f32 %v3305, %v3422
        %v3424 = vrot.slane %v3423, 2
        %v3425 = vmax.f32 %v3423, %v3424
        %v3426 = vrot.slane %v3425, 1
        %v3427 = vmax.f32 %v3425, %v3426
        %v3428 = vrot.slane %v3306, 4
        %v3429 = vmax.f32 %v3306, %v3428
        %v3430 = vrot.slane %v3429, 2
        %v3431 = vmax.f32 %v3429, %v3430
        %v3432 = vrot.slane %v3431, 1
        %v3433 = vmax.f32 %v3431, %v3432
        %v3434 = vrot.slane %v3307, 4
        %v3435 = vmax.f32 %v3307, %v3434
        %v3436 = vrot.slane %v3435, 2
        %v3437 = vmax.f32 %v3435, %v3436
        %v3438 = vrot.slane %v3437, 1
        %v3439 = vmax.f32 %v3437, %v3438
        %v3440 = vrot.slane %v3308, 4
        %v3441 = vmax.f32 %v3308, %v3440
        %v3442 = vrot.slane %v3441, 2
        %v3443 = vmax.f32 %v3441, %v3442
        %v3444 = vrot.slane %v3443, 1
        %v3445 = vmax.f32 %v3443, %v3444
        %v3446 = vrot.slane %v3309, 4
        %v3447 = vmax.f32 %v3309, %v3446
        %v3448 = vrot.slane %v3447, 2
        %v3449 = vmax.f32 %v3447, %v3448
        %v3450 = vrot.slane %v3449, 1
        %v3451 = vmax.f32 %v3449, %v3450
        %v3452 = vrot.slane %v3310, 4
        %v3453 = vmax.f32 %v3310, %v3452
        %v3454 = vrot.slane %v3453, 2
        %v3455 = vmax.f32 %v3453, %v3454
        %v3456 = vrot.slane %v3455, 1
        %v3457 = vmax.f32 %v3455, %v3456
        %v3458 = vrot.slane %v3311, 4
        %v3459 = vmax.f32 %v3311, %v3458
        %v3460 = vrot.slane %v3459, 2
        %v3461 = vmax.f32 %v3459, %v3460
        %v3462 = vrot.slane %v3461, 1
        %v3463 = vmax.f32 %v3461, %v3462
        %v3464 = vrot.slane %v3312, 4
        %v3465 = vmax.f32 %v3312, %v3464
        %v3466 = vrot.slane %v3465, 2
        %v3467 = vmax.f32 %v3465, %v3466
        %v3468 = vrot.slane %v3467, 1
        %v3469 = vmax.f32 %v3467, %v3468
        %v3470 = vrot.slane %v3313, 4
        %v3471 = vmax.f32 %v3313, %v3470
        %v3472 = vrot.slane %v3471, 2
        %v3473 = vmax.f32 %v3471, %v3472
        %v3474 = vrot.slane %v3473, 1
        %v3475 = vmax.f32 %v3473, %v3474
        %v3476 = vrot.slane %v3314, 4
        %v3477 = vmax.f32 %v3314, %v3476
        %v3478 = vrot.slane %v3477, 2
        %v3479 = vmax.f32 %v3477, %v3478
        %v3480 = vrot.slane %v3479, 1
        %v3481 = vmax.f32 %v3479, %v3480
        %v3482 = vrot.slane %v3315, 4
        %v3483 = vmax.f32 %v3315, %v3482
        %v3484 = vrot.slane %v3483, 2
        %v3485 = vmax.f32 %v3483, %v3484
        %v3486 = vrot.slane %v3485, 1
        %v3487 = vmax.f32 %v3485, %v3486
        %v3488 = vrot.slane %v3316, 4
        %v3489 = vmax.f32 %v3316, %v3488
        %v3490 = vrot.slane %v3489, 2
        %v3491 = vmax.f32 %v3489, %v3490
        %v3492 = vrot.slane %v3491, 1
        %v3493 = vmax.f32 %v3491, %v3492
        %v3494 = vrot.slane %v3317, 4
        %v3495 = vmax.f32 %v3317, %v3494
        %v3496 = vrot.slane %v3495, 2
        %v3497 = vmax.f32 %v3495, %v3496
        %v3498 = vrot.slane %v3497, 1
        %v3499 = vmax.f32 %v3497, %v3498
        %v3500 = vrot.slane %v3318, 4
        %v3501 = vmax.f32 %v3318, %v3500
        %v3502 = vrot.slane %v3501, 2
        %v3503 = vmax.f32 %v3501, %v3502
        %v3504 = vrot.slane %v3503, 1
        %v3505 = vmax.f32 %v3503, %v3504
        %v3506 = vrot.slane %v3319, 4
        %v3507 = vmax.f32 %v3319, %v3506
        %v3508 = vrot.slane %v3507, 2
        %v3509 = vmax.f32 %v3507, %v3508
        %v3510 = vrot.slane %v3509, 1
        %v3511 = vmax.f32 %v3509, %v3510
        %v3512 = vmax.f32 %v2765, %v3325
        %v3513 = vmax.f32 %v2766, %v3331
        %v3514 = vmax.f32 %v2767, %v3337
        %v3515 = vmax.f32 %v2768, %v3343
        %v3516 = vmax.f32 %v2769, %v3349
        %v3517 = vmax.f32 %v2770, %v3355
        %v3518 = vmax.f32 %v2771, %v3361
        %v3519 = vmax.f32 %v2772, %v3367
        %v3520 = vmax.f32 %v2773, %v3373
        %v3521 = vmax.f32 %v2774, %v3379
        %v3522 = vmax.f32 %v2775, %v3385
        %v3523 = vmax.f32 %v2776, %v3391
        %v3524 = vmax.f32 %v2777, %v3397
        %v3525 = vmax.f32 %v2778, %v3403
        %v3526 = vmax.f32 %v2779, %v3409
        %v3527 = vmax.f32 %v2780, %v3415
        %v3528 = vmax.f32 %v2781, %v3421
        %v3529 = vmax.f32 %v2782, %v3427
        %v3530 = vmax.f32 %v2783, %v3433
        %v3531 = vmax.f32 %v2784, %v3439
        %v3532 = vmax.f32 %v2785, %v3445
        %v3533 = vmax.f32 %v2786, %v3451
        %v3534 = vmax.f32 %v2787, %v3457
        %v3535 = vmax.f32 %v2788, %v3463
        %v3536 = vmax.f32 %v2789, %v3469
        %v3537 = vmax.f32 %v2790, %v3475
        %v3538 = vmax.f32 %v2791, %v3481
        %v3539 = vmax.f32 %v2792, %v3487
        %v3540 = vmax.f32 %v2793, %v3493
        %v3541 = vmax.f32 %v2794, %v3499
        %v3542 = vmax.f32 %v2795, %v3505
        %v3543 = vmax.f32 %v2796, %v3511
        %vm3576 = vcmask 1041409
        %v3577 = vsel %vm3576, %v3513, %v3512
        %vm3578 = vcmask 1042434
        %v3579 = vsel %vm3578, %v3514, %v3577
        %vm3580 = vcmask 1043459
        %v3581 = vsel %vm3580, %v3515, %v3579
        %vm3582 = vcmask 1044484
        %v3583 = vsel %vm3582, %v3516, %v3581
        %vm3584 = vcmask 1045509
        %v3585 = vsel %vm3584, %v3517, %v3583
        %vm3586 = vcmask 1046534
        %v3587 = vsel %vm3586, %v3518, %v3585
        %vm3588 = vcmask 1047559
        %v3589 = vsel %vm3588, %v3519, %v3587
        %v3590 = vsel %vm3576, %v3521, %v3520
        %v3591 = vsel %vm3578, %v3522, %v3590
        %v3592 = vsel %vm3580, %v3523, %v3591
        %v3593 = vsel %vm3582, %v3524, %v3592
        %v3594 = vsel %vm3584, %v3525, %v3593
        %v3595 = vsel %vm3586, %v3526, %v3594
        %v3596 = vsel %vm3588, %v3527, %v3595
        %v3597 = vsel %vm3576, %v3529, %v3528
        %v3598 = vsel %vm3578, %v3530, %v3597
        %v3599 = vsel %vm3580, %v3531, %v3598
        %v3600 = vsel %vm3582, %v3532, %v3599
        %v3601 = vsel %vm3584, %v3533, %v3600
        %v3602 = vsel %vm3586, %v3534, %v3601
        %v3603 = vsel %vm3588, %v3535, %v3602
        %v3604 = vsel %vm3576, %v3537, %v3536
        %v3605 = vsel %vm3578, %v3538, %v3604
        %v3606 = vsel %vm3580, %v3539, %v3605
        %v3607 = vsel %vm3582, %v3540, %v3606
        %v3608 = vsel %vm3584, %v3541, %v3607
        %v3609 = vsel %vm3586, %v3542, %v3608
        %v3610 = vsel %vm3588, %v3543, %v3609
        %3615 = vst [vmem:[%s349] sm:$0xff] %v3589
        %3616 = vst [vmem:[%s349 + $0x8] sm:$0xff] %v3596
        %3617 = vst [vmem:[%s349 + $0x10] sm:$0xff] %v3603
        %3618 = vst [vmem:[%s349 + $0x18] sm:$0xff] %v3610
        %s3619 = sand.u32 %s186, 1
        %s3620 = scalar_lea.sflag [#allocation4], %s3619
        %s3621 = sand.u32 %s186, 1
        %s3622 = smul.addr %s3621, 32
        %s3623 = scalar_lea.vmem [#allocation10], %s3622
        // Predicated region
        $region65: #{tpu_custom_call.1} parent=47 // pred_check
          %p3624 = pneg %p196
        $region66: #{tpu_custom_call.1} parent=47 // pred_check_branch
          %3626 = sbr.rel (%p3624) target = $region68
        $region67: #{tpu_custom_call.1} parent=47 // pred_region
          %s3627 = smul.u32 4, %s26
          %3629 = vsyncadd %s3620, 0
          %s3630 = smul.addr %s3627, 8
          %s3631 = scalar_lea.hbm %s7, %s3630
          %s3632 = sshll.u32 %s3623, 4
          %s3633 = int_to_ptr.vmem [resolvable:$true] %s3632
          %s3634 = sshll.u32 %s3631, 4
          %s3635 = int_to_ptr.hbm [resolvable:$true] %s3634
          %3640 = dma.vmem_to_hbm [thread:$0]  %s3633, 512, %s3635, %s3620, 128, 128, 8
        $region68: #{tpu_custom_call.1} parent=47 // pred_fallthru
          _
      $region48: #{tpu_custom_call.1} parent=5 // pred_fallthru
        _
      %p3641 = scmp.le.s32.totalorder 2, %s21
      // Predicated region
      $region69: #{tpu_custom_call.1} parent=5 // pred_check
        %p3642 = pneg %p3641
      $region70: #{tpu_custom_call.1} parent=5 // pred_check_branch
        %3644 = sbr.rel (%p3642) target = $region72
      $region71: #{tpu_custom_call.1} parent=5 // pred_region
        %s3645 = ssub.s32 %s21, 2
        // Predicated region
        $region73: #{tpu_custom_call.1} parent=71 // pred_check
          %p3646 = pneg %p202
        $region74: #{tpu_custom_call.1} parent=71 // pred_check_branch
          %3648 = sbr.rel (%p3646) target = $region76
        $region75: #{tpu_custom_call.1} parent=71 // pred_region
          %s3649 = sand.u32 %s187, 1
          %s3650 = scalar_lea.sflag [#allocation4], %s3649
          %s3651 = sand.u32 %s187, 1
          %s3652 = smul.addr %s3651, 32
          %s3653 = scalar_lea.vmem [#allocation10], %s3652
          %3655 = dma.done %s3650, 512
        $region76: #{tpu_custom_call.1} parent=71 // pred_fallthru
          _
      $region72: #{tpu_custom_call.1} parent=5 // pred_fallthru
        _
    $region6: #{tpu_custom_call.1} parent=1 // loop_footer
      %s25 = sadd.s32 1, %s21
    $region7: #{tpu_custom_call.1} parent=1 // loop_footer_branch
      %20 = sbr.rel target = $region3
    $region8: #{tpu_custom_call.1} parent=1 // loop_exit
      _
    %3656 = vsyncpa [#allocation3], 1
    %s3657 = scalar_lea.sflag [#allocation3], 1
    %3658 = vsyncpa %s3657, 1
    %3659 = vsyncpa [#allocation6], 1
    %3660 = vsyncpa [#allocation9], 1
    %3661 = vsyncpa [#allocation4], 1
    %s3662 = scalar_lea.sflag [#allocation4], 1
    %3663 = vsyncpa %s3662, 1

</llo_original>
